<compile_context>
chip_gen: v6e
topology: v6e:2x2x1
jax: 0.10.0
libtpu: 0.0.40
codegen_flags: <defaults>
</compile_context>

<pallas_src>
import functools

import jax
import jax.numpy as jnp
from jax import lax
from jax.experimental import pallas as pl
from jax.experimental.pallas import tpu as pltpu


def _round_up(x, m):
    return ((x + m - 1) // m) * m


_VMEM_BUDGET = 24 * 1024 * 1024     # tile-selection budget (headroom under limit)
_VMEM_LIMIT = 32 * 1024 * 1024      # explicit scoped-VMEM limit for the kernels


# ---------------------------------------------------------------------------
# Fused GEMM + bias + activation kernels
# ---------------------------------------------------------------------------
def _epilogue(y_f32, b_f32, act):
    y = y_f32 + b_f32
    if act == "relu":
        y = jnp.maximum(y, 0.0)
    elif act == "softmax":
        # Full (padded) output row is resident in this tile.  Padded lanes
        # carry a -1e30 bias, so exp(.) underflows to exactly 0.
        y = y - jnp.max(y, axis=-1, keepdims=True)
        e = jnp.exp(y)
        y = e * pl.reciprocal(jnp.sum(e, axis=-1, keepdims=True), approx=True)
    return y


def _gemm_resident_kernel(x_ref, w_ref, b_ref, o_ref, *, act):
    # Whole weight / bias resident in VMEM; full K and N per grid step.
    y = jnp.dot(x_ref[...], w_ref[...], preferred_element_type=jnp.float32)
    o_ref[...] = _epilogue(y, b_ref[...].astype(jnp.float32), act).astype(o_ref.dtype)


def _gemm_stream_kernel(x_ref, w_ref, b_ref, o_ref, acc_ref, *, act):
    k = pl.program_id(2)

    @pl.when(k == 0)
    def _():
        acc_ref[...] = jnp.zeros_like(acc_ref)

    acc_ref[...] += jnp.dot(x_ref[...], w_ref[...],
                            preferred_element_type=jnp.float32)

    @pl.when(k == pl.num_programs(2) - 1)
    def _():
        y = _epilogue(acc_ref[...], b_ref[...].astype(jnp.float32), act)
        o_ref[...] = y.astype(o_ref.dtype)


# ---------------------------------------------------------------------------
# Tiling helpers
# ---------------------------------------------------------------------------
def _pick_divisor_tile(total, target):
    """Largest multiple of 128 <= min(target, total) that divides `total`."""
    for cand in range(min(target, total), 127, -128):
        if total % cand == 0:
            return cand
    return 128


def _resident_tm(M, Kp, Np, x_bytes, w_bytes, o_bytes):
    """Largest M-tile such that the resident-weight GEMM fits the VMEM budget."""
    for cand in (512, 256, 128, 64, 32, 16, 8):
        tm = M if M <= cand else cand
        est = (2 * tm * Kp * x_bytes        # double-buffered activation tiles
               + 2 * Kp * Np * w_bytes      # resident weight (budget 2 bufs)
               + 2 * tm * Np * o_bytes      # double-buffered output tiles
               + tm * Np * 4)               # f32 epilogue temporaries
        if est <= _VMEM_BUDGET:
            return tm
    return None


def gemm_bias_act(x, w, b, *, act="none", out_dtype=None, force_stream=False,
                  tm_stream=256, tk_stream=512, tn_stream=512):
    """y = act(x @ w + b).

    x: (M, Kx) with Kx >= K (x may carry a zero K-padding tail from im2col).
    w: (K, N) stored (in, out) so no runtime transpose.  b: (N,).
    """
    M, Kx = x.shape
    K, N = w.shape
    assert Kx >= K and Kx - K < 128, (Kx, K)
    out_dtype = x.dtype if out_dtype is None else out_dtype

    Kp = _round_up(Kx, 128)                 # pad K only to 128, never to tk
    Np = _round_up(N, 128)
    if Kp > Kx:                             # no-op for im2col inputs (pre-padded)
        x = jnp.pad(x, ((0, 0), (0, Kp - Kx)))
    if Kp > K or Np > N:
        w = jnp.pad(w, ((0, Kp - K), (0, Np - N)))
    pad_b = -1e30 if act == "softmax" else 0.0
    bp = jnp.pad(b.reshape(1, N).astype(jnp.float32), ((0, 0), (0, Np - N)),
                 constant_values=pad_b)

    xb = x.dtype.itemsize
    wb = w.dtype.itemsize
    ob = jnp.dtype(out_dtype).itemsize
    tm_res = None if force_stream else _resident_tm(M, Kp, Np, xb, wb, ob)

    if tm_res is not None:
        # Resident-weight path: weight DMA'd once, x streamed exactly once.
        out = pl.pallas_call(
            functools.partial(_gemm_resident_kernel, act=act),
            out_shape=jax.ShapeDtypeStruct((M, Np), out_dtype),
            grid_spec=pltpu.PrefetchScalarGridSpec(
                num_scalar_prefetch=0,
                grid=(pl.cdiv(M, tm_res),),
                in_specs=[
                    pl.BlockSpec((tm_res, Kp), lambda i: (i, 0)),
                    pl.BlockSpec((Kp, Np), lambda i: (0, 0)),   # VMEM-resident
                    pl.BlockSpec((1, Np), lambda i: (0, 0)),
                ],
                out_specs=pl.BlockSpec((tm_res, Np), lambda i: (i, 0)),
            ),
            compiler_params=pltpu.CompilerParams(
                dimension_semantics=("parallel",),
                vmem_limit_bytes=_VMEM_LIMIT,
            ),
        )(x, w, bp)
    else:
        # Streaming path (fc1 / anything whose weight cannot be VMEM-resident).
        tn = Np if act == "softmax" else _pick_divisor_tile(Np, tn_stream)
        tk = _pick_divisor_tile(Kp, tk_stream)
        tm = M if M <= tm_stream else tm_stream
        grid = (pl.cdiv(M, tm), Np // tn, Kp // tk)
        out = pl.pallas_call(
            functools.partial(_gemm_stream_kernel, act=act),
            out_shape=jax.ShapeDtypeStruct((M, Np), out_dtype),
            grid_spec=pltpu.PrefetchScalarGridSpec(
                num_scalar_prefetch=0,
                grid=grid,
                in_specs=[
                    pl.BlockSpec((tm, tk), lambda i, j, k: (i, k)),
                    pl.BlockSpec((tk, tn), lambda i, j, k: (k, j)),
                    pl.BlockSpec((1, tn), lambda i, j, k: (0, j)),
                ],
                out_specs=pl.BlockSpec((tm, tn), lambda i, j, k: (i, j)),
                scratch_shapes=[pltpu.VMEM((tm, tn), jnp.float32)],
            ),
            compiler_params=pltpu.CompilerParams(
                dimension_semantics=("parallel", "parallel", "arbitrary"),
                vmem_limit_bytes=_VMEM_LIMIT,
            ),
        )(x, w, bp)

    return out if Np == N else out[:, :N]


# ---------------------------------------------------------------------------
# Conv 5x5 / stride 2 / pad 2 lowered to im2col + Pallas GEMM
# ---------------------------------------------------------------------------
def _im2col_5x5_s2(x_nhwc):
    """Zero-pad by 2 and extract 5x5 stride-2 patches -> (N*Ho*Wo, Kp).

    The K dim is in (kh, kw, cin) order and is zero-padded up to a multiple of
    128 directly inside the concatenate (no second full-HBM pad pass)."""
    N, H, W, C = x_nhwc.shape
    Ho = (H + 4 - 5) // 2 + 1
    Wo = (W + 4 - 5) // 2 + 1
    xp = jnp.pad(x_nhwc, ((0, 0), (2, 2), (2, 2), (0, 0)))
    taps = [xp[:, kh:kh + 2 * Ho - 1:2, kw:kw + 2 * Wo - 1:2, :]
            for kh in range(5) for kw in range(5)]
    K = 25 * C
    Kp = _round_up(K, 128)
    if Kp > K:
        taps.append(jnp.zeros((N, Ho, Wo, Kp - K), x_nhwc.dtype))
    cols = jnp.concatenate(taps, axis=-1)              # (N, Ho, Wo, Kp)
    return cols.reshape(N * Ho * Wo, Kp), (N, Ho, Wo)


def conv2d_to_latent_forward(params, x_nchw):
    """Pallas forward of Conv2DToLatentNet (input in PyTorch NCHW layout)."""
    x = jnp.transpose(x_nchw, (0, 2, 3, 1)).astype(jnp.bfloat16)   # NHWC, C on lanes
    for w_mat, bvec in params["convs"]:
        cols, (n, ho, wo) = _im2col_5x5_s2(x)
        y = gemm_bias_act(cols, w_mat, bvec, act="relu")           # resident weight
        x = y.reshape(n, ho, wo, -1)
    # mimic PyTorch `x.view(N, -1)` on an NCHW tensor: flatten in (C, H, W) order
    feats = jnp.transpose(x, (0, 3, 1, 2)).reshape(x.shape[0], -1)
    h = gemm_bias_act(feats, params["fc1_w"], params["fc1_b"], act="relu",
                      force_stream=True)                           # fc1 weight streams
    probs = gemm_bias_act(h, params["fc2_w"], params["fc2_b"], act="softmax",
                          out_dtype=jnp.float32)
    return probs


# ---------------------------------------------------------------------------
# Parameters (PyTorch-like init; weights stored (in, out) in bf16)
# ---------------------------------------------------------------------------
def compute_latent_dim(output_size):
    return 128 * int(round(4 * output_size / 128))


def init_params(key, input_channels, conv_channels, spatial_hw, output_size,
                dtype=jnp.bfloat16):
    H, W = spatial_hw
    keys = iter(jax.random.split(key, 2 * len(conv_channels) + 4))
    convs = []
    cin, ho, wo = input_channels, H, W
    for cout in conv_channels:
        bound = 1.0 / (25 * cin) ** 0.5
        w = jax.random.uniform(next(keys), (5, 5, cin, cout), jnp.float32, -bound, bound)
        bvec = jax.random.uniform(next(keys), (cout,), jnp.float32, -bound, bound)
        convs.append((w.reshape(25 * cin, cout).astype(dtype), bvec))
        cin = cout
        ho = (ho + 4 - 5) // 2 + 1
        wo = (wo + 4 - 5) // 2 + 1
    flattened = cin * ho * wo
    latent_dim = compute_latent_dim(output_size)
    b1 = 1.0 / flattened ** 0.5
    b2 = 1.0 / latent_dim ** 0.5
    fc1_w = jax.random.uniform(next(keys), (flattened, latent_dim), jnp.float32, -b1, b1)
    fc1_b = jax.random.uniform(next(keys), (latent_dim,), jnp.float32, -b1, b1)
    fc2_w = jax.random.uniform(next(keys), (latent_dim, output_size), jnp.float32, -b2, b2)
    fc2_b = jax.random.uniform(next(keys), (output_size,), jnp.float32, -b2, b2)
    return dict(convs=convs,
                fc1_w=fc1_w.astype(dtype), fc1_b=fc1_b,
                fc2_w=fc2_w.astype(dtype), fc2_b=fc2_b)


# ---------------------------------------------------------------------------
# Pure-JAX reference of the PyTorch forward (f32 math, same bf16 weights)
# ---------------------------------------------------------------------------
def reference_forward(params, x_nchw):
    x = jnp.transpose(x_nchw, (0, 2, 3, 1))
    x = x.astype(jnp.bfloat16).astype(jnp.float32)     # same input quantization
    for w_mat, bvec in params["convs"]:
        cin = w_mat.shape[0] // 25
        w_hwio = w_mat.astype(jnp.float32).reshape(5, 5, cin, -1)
        x = lax.conv_general_dilated(
            x, w_hwio, window_strides=(2, 2), padding=((2, 2), (2, 2)),
            dimension_numbers=("NHWC", "HWIO", "NHWC"),
            precision=lax.Precision.HIGHEST)
        x = jnp.maximum(x + bvec, 0.0)
    feats = jnp.transpose(x, (0, 3, 1, 2)).reshape(x.shape[0], -1)
    h = jnp.maximum(
        jnp.dot(feats, params["fc1_w"].astype(jnp.float32),
                precision=lax.Precision.HIGHEST) + params["fc1_b"], 0.0)
    logits = (jnp.dot(h, params["fc2_w"].astype(jnp.float32),
                      precision=lax.Precision.HIGHEST) + params["fc2_b"])
    return jax.nn.softmax(logits, axis=-1)


if __name__ == "__main__":
    key = jax.random.PRNGKey(0)
    kx, kp = jax.random.split(key)

    # Small stand-in config for the module (real one: 20 in-ch, 64/128/256/512
    # conv channels, 720x1440 spatial, output_size=1000).
    batch, in_ch, H, W = 2, 4, 32, 32
    conv_channels = (16, 32, 64, 128)
    output_size = 32                      # latent_dim = 128 * round(128/128) = 128

    x = jax.random.normal(kx, (batch, in_ch, H, W), jnp.float32)
    params = init_params(kp, in_ch, conv_channels, (H, W), output_size)

    fwd = jax.jit(conv2d_to_latent_forward)
    out = jax.block_until_ready(fwd(params, x))

    assert out.shape == (batch, output_size), out.shape
    assert bool(jnp.all(jnp.isfinite(out))), "non-finite output"
    assert jnp.allclose(jnp.sum(out, axis=1), 1.0, atol=3e-3), "rows must sum to 1"

    ref = reference_forward(params, x)
    max_err = float(jnp.max(jnp.abs(out - ref)))
    assert jnp.allclose(out, ref, atol=2e-2), f"mismatch vs ref, max|err|={max_err}"

    print("KERNEL_OK")
</pallas_src>

<mosaic_0001>
module attributes {stable_mosaic.version = 11 : i64} {
  func.func @_gemm_resident_kernel(%arg0: i32, %arg1: memref<512x128xbf16, #tpu.memory_space<vmem>>, %arg2: memref<128x128xbf16, #tpu.memory_space<vmem>>, %arg3: memref<1x128xf32, #tpu.memory_space<vmem>>, %arg4: memref<512x128xbf16, #tpu.memory_space<vmem>>) attributes {dimension_semantics = [#tpu.dimension_semantics<parallel>], iteration_bounds = array<i64: 1>, scalar_prefetch = 0 : i64, scratch_operands = 0 : i64, tpu.core_type = #tpu.core_type<tc>, window_params = [{transform_indices = @transform_0, window_bounds = array<i64: 512, 128>}, {pipeline_mode = #tpu.pipeline_mode<synchronous>, transform_indices = @transform_1, window_bounds = array<i64: 128, 128>}, {pipeline_mode = #tpu.pipeline_mode<synchronous>, transform_indices = @transform_2, window_bounds = array<i64: 1, 128>}, {transform_indices = @transform_3, window_bounds = array<i64: 512, 128>}]} {
    %c0 = arith.constant 0 : index
    %c0_0 = arith.constant 0 : index
    %0 = vector.load %arg1[%c0, %c0_0] : memref<512x128xbf16, #tpu.memory_space<vmem>>, vector<512x128xbf16>
    %c0_1 = arith.constant 0 : index
    %c0_2 = arith.constant 0 : index
    %1 = vector.load %arg2[%c0_1, %c0_2] : memref<128x128xbf16, #tpu.memory_space<vmem>>, vector<128x128xbf16>
    %cst = arith.constant dense<0.000000e+00> : vector<512x128xf32>
    %2 = tpu.matmul %0, %1, %cst {dimension_numbers = #tpu.dot_dimension_numbers<[1], [0], [0], [1], [0, 0, 1, 1], [], []>} : vector<512x128xbf16>, vector<128x128xbf16>, vector<512x128xf32> -> vector<512x128xf32>
    %c0_3 = arith.constant 0 : index
    %c0_4 = arith.constant 0 : index
    %3 = vector.load %arg3[%c0_3, %c0_4] : memref<1x128xf32, #tpu.memory_space<vmem>>, vector<1x128xf32>
    %4 = vector.broadcast %3 : vector<1x128xf32> to vector<512x128xf32>
    %5 = arith.addf %2, %4 : vector<512x128xf32>
    %cst_5 = arith.constant 0.000000e+00 : f32
    %6 = vector.broadcast %cst_5 : f32 to vector<512x128xf32>
    %7 = arith.maximumf %5, %6 : vector<512x128xf32>
    %8 = arith.truncf %7 : vector<512x128xf32> to vector<512x128xbf16>
    %c0_6 = arith.constant 0 : index
    %c0_7 = arith.constant 0 : index
    %9 = vector.load %arg4[%c0_6, %c0_7] : memref<512x128xbf16, #tpu.memory_space<vmem>>, vector<512x128xbf16>
    tpu.vector_store %arg4[%c0_6, %c0_7], %8 {strides = array<i32>} : memref<512x128xbf16, #tpu.memory_space<vmem>>, vector<512x128xbf16>,
    return
  }
  func.func @transform_0(%arg0: i32) -> (i32, i32) {
    %c0_i32 = arith.constant 0 : i32
    %c0_i32_0 = arith.constant 0 : i32
    return %arg0, %c0_i32 : i32, i32
  }
  func.func @transform_1(%arg0: i32) -> (i32, i32) {
    %c0_i32 = arith.constant 0 : i32
    %c0_i32_0 = arith.constant 0 : i32
    %c0_i32_1 = arith.constant 0 : i32
    return %c0_i32, %c0_i32_0 : i32, i32
  }
  func.func @transform_2(%arg0: i32) -> (i32, i32) {
    %c0_i32 = arith.constant 0 : i32
    %c0_i32_0 = arith.constant 0 : i32
    %c0_i32_1 = arith.constant 0 : i32
    return %c0_i32, %c0_i32_0 : i32, i32
  }
  func.func @transform_3(%arg0: i32) -> (i32, i32) {
    %c0_i32 = arith.constant 0 : i32
    %c0_i32_0 = arith.constant 0 : i32
    return %arg0, %c0_i32 : i32, i32
  }
}

module attributes {stable_mosaic.version = 11 : i64} {
  func.func @_gemm_resident_kernel(%arg0: i32, %arg1: memref<128x512xbf16, #tpu.memory_space<vmem>>, %arg2: memref<512x128xbf16, #tpu.memory_space<vmem>>, %arg3: memref<1x128xf32, #tpu.memory_space<vmem>>, %arg4: memref<128x128xbf16, #tpu.memory_space<vmem>>) attributes {dimension_semantics = [#tpu.dimension_semantics<parallel>], iteration_bounds = array<i64: 1>, scalar_prefetch = 0 : i64, scratch_operands = 0 : i64, tpu.core_type = #tpu.core_type<tc>, window_params = [{transform_indices = @transform_0, window_bounds = array<i64: 128, 512>}, {pipeline_mode = #tpu.pipeline_mode<synchronous>, transform_indices = @transform_1, window_bounds = array<i64: 512, 128>}, {pipeline_mode = #tpu.pipeline_mode<synchronous>, transform_indices = @transform_2, window_bounds = array<i64: 1, 128>}, {transform_indices = @transform_3, window_bounds = array<i64: 128, 128>}]} {
    %c0 = arith.constant 0 : index
    %c0_0 = arith.constant 0 : index
    %0 = vector.load %arg1[%c0, %c0_0] : memref<128x512xbf16, #tpu.memory_space<vmem>>, vector<128x512xbf16>
    %c0_1 = arith.constant 0 : index
    %c0_2 = arith.constant 0 : index
    %1 = vector.load %arg2[%c0_1, %c0_2] : memref<512x128xbf16, #tpu.memory_space<vmem>>, vector<512x128xbf16>
    %cst = arith.constant dense<0.000000e+00> : vector<128x128xf32>
    %2 = tpu.matmul %0, %1, %cst {dimension_numbers = #tpu.dot_dimension_numbers<[1], [0], [0], [1], [0, 0, 1, 1], [], []>} : vector<128x512xbf16>, vector<512x128xbf16>, vector<128x128xf32> -> vector<128x128xf32>
    %c0_3 = arith.constant 0 : index
    %c0_4 = arith.constant 0 : index
    %3 = vector.load %arg3[%c0_3, %c0_4] : memref<1x128xf32, #tpu.memory_space<vmem>>, vector<1x128xf32>
    %4 = vector.broadcast %3 : vector<1x128xf32> to vector<128x128xf32>
    %5 = arith.addf %2, %4 : vector<128x128xf32>
    %cst_5 = arith.constant 0.000000e+00 : f32
    %6 = vector.broadcast %cst_5 : f32 to vector<128x128xf32>
    %7 = arith.maximumf %5, %6 : vector<128x128xf32>
    %8 = arith.truncf %7 : vector<128x128xf32> to vector<128x128xbf16>
    %c0_6 = arith.constant 0 : index
    %c0_7 = arith.constant 0 : index
    %9 = vector.load %arg4[%c0_6, %c0_7] : memref<128x128xbf16, #tpu.memory_space<vmem>>, vector<128x128xbf16>
    tpu.vector_store %arg4[%c0_6, %c0_7], %8 {strides = array<i32>} : memref<128x128xbf16, #tpu.memory_space<vmem>>, vector<128x128xbf16>,
    return
  }
  func.func @transform_0(%arg0: i32) -> (i32, i32) {
    %c0_i32 = arith.constant 0 : i32
    %c0_i32_0 = arith.constant 0 : i32
    return %arg0, %c0_i32 : i32, i32
  }
  func.func @transform_1(%arg0: i32) -> (i32, i32) {
    %c0_i32 = arith.constant 0 : i32
    %c0_i32_0 = arith.constant 0 : i32
    %c0_i32_1 = arith.constant 0 : i32
    return %c0_i32, %c0_i32_0 : i32, i32
  }
  func.func @transform_2(%arg0: i32) -> (i32, i32) {
    %c0_i32 = arith.constant 0 : i32
    %c0_i32_0 = arith.constant 0 : i32
    %c0_i32_1 = arith.constant 0 : i32
    return %c0_i32, %c0_i32_0 : i32, i32
  }
  func.func @transform_3(%arg0: i32) -> (i32, i32) {
    %c0_i32 = arith.constant 0 : i32
    %c0_i32_0 = arith.constant 0 : i32
    return %arg0, %c0_i32 : i32, i32
  }
}

module attributes {stable_mosaic.version = 11 : i64} {
  func.func @_gemm_resident_kernel(%arg0: i32, %arg1: memref<32x896xbf16, #tpu.memory_space<vmem>>, %arg2: memref<896x128xbf16, #tpu.memory_space<vmem>>, %arg3: memref<1x128xf32, #tpu.memory_space<vmem>>, %arg4: memref<32x128xbf16, #tpu.memory_space<vmem>>) attributes {dimension_semantics = [#tpu.dimension_semantics<parallel>], iteration_bounds = array<i64: 1>, scalar_prefetch = 0 : i64, scratch_operands = 0 : i64, tpu.core_type = #tpu.core_type<tc>, window_params = [{transform_indices = @transform_0, window_bounds = array<i64: 32, 896>}, {pipeline_mode = #tpu.pipeline_mode<synchronous>, transform_indices = @transform_1, window_bounds = array<i64: 896, 128>}, {pipeline_mode = #tpu.pipeline_mode<synchronous>, transform_indices = @transform_2, window_bounds = array<i64: 1, 128>}, {transform_indices = @transform_3, window_bounds = array<i64: 32, 128>}]} {
    %c0 = arith.constant 0 : index
    %c0_0 = arith.constant 0 : index
    %0 = vector.load %arg1[%c0, %c0_0] : memref<32x896xbf16, #tpu.memory_space<vmem>>, vector<32x896xbf16>
    %c0_1 = arith.constant 0 : index
    %c0_2 = arith.constant 0 : index
    %1 = vector.load %arg2[%c0_1, %c0_2] : memref<896x128xbf16, #tpu.memory_space<vmem>>, vector<896x128xbf16>
    %cst = arith.constant dense<0.000000e+00> : vector<32x128xf32>
    %2 = tpu.matmul %0, %1, %cst {dimension_numbers = #tpu.dot_dimension_numbers<[1], [0], [0], [1], [0, 0, 1, 1], [], []>} : vector<32x896xbf16>, vector<896x128xbf16>, vector<32x128xf32> -> vector<32x128xf32>
    %c0_3 = arith.constant 0 : index
    %c0_4 = arith.constant 0 : index
    %3 = vector.load %arg3[%c0_3, %c0_4] : memref<1x128xf32, #tpu.memory_space<vmem>>, vector<1x128xf32>
    %4 = vector.broadcast %3 : vector<1x128xf32> to vector<32x128xf32>
    %5 = arith.addf %2, %4 : vector<32x128xf32>
    %cst_5 = arith.constant 0.000000e+00 : f32
    %6 = vector.broadcast %cst_5 : f32 to vector<32x128xf32>
    %7 = arith.maximumf %5, %6 : vector<32x128xf32>
    %8 = arith.truncf %7 : vector<32x128xf32> to vector<32x128xbf16>
    %c0_6 = arith.constant 0 : index
    %c0_7 = arith.constant 0 : index
    %9 = vector.load %arg4[%c0_6, %c0_7] : memref<32x128xbf16, #tpu.memory_space<vmem>>, vector<32x128xbf16>
    tpu.vector_store %arg4[%c0_6, %c0_7], %8 {strides = array<i32>} : memref<32x128xbf16, #tpu.memory_space<vmem>>, vector<32x128xbf16>,
    return
  }
  func.func @transform_0(%arg0: i32) -> (i32, i32) {
    %c0_i32 = arith.constant 0 : i32
    %c0_i32_0 = arith.constant 0 : i32
    return %arg0, %c0_i32 : i32, i32
  }
  func.func @transform_1(%arg0: i32) -> (i32, i32) {
    %c0_i32 = arith.constant 0 : i32
    %c0_i32_0 = arith.constant 0 : i32
    %c0_i32_1 = arith.constant 0 : i32
    return %c0_i32, %c0_i32_0 : i32, i32
  }
  func.func @transform_2(%arg0: i32) -> (i32, i32) {
    %c0_i32 = arith.constant 0 : i32
    %c0_i32_0 = arith.constant 0 : i32
    %c0_i32_1 = arith.constant 0 : i32
    return %c0_i32, %c0_i32_0 : i32, i32
  }
  func.func @transform_3(%arg0: i32) -> (i32, i32) {
    %c0_i32 = arith.constant 0 : i32
    %c0_i32_0 = arith.constant 0 : i32
    return %arg0, %c0_i32 : i32, i32
  }
}

module attributes {stable_mosaic.version = 11 : i64} {
  func.func @_gemm_resident_kernel(%arg0: i32, %arg1: memref<8x1664xbf16, #tpu.memory_space<vmem>>, %arg2: memref<1664x128xbf16, #tpu.memory_space<vmem>>, %arg3: memref<1x128xf32, #tpu.memory_space<vmem>>, %arg4: memref<8x128xbf16, #tpu.memory_space<vmem>>) attributes {dimension_semantics = [#tpu.dimension_semantics<parallel>], iteration_bounds = array<i64: 1>, scalar_prefetch = 0 : i64, scratch_operands = 0 : i64, tpu.core_type = #tpu.core_type<tc>, window_params = [{transform_indices = @transform_0, window_bounds = array<i64: 8, 1664>}, {pipeline_mode = #tpu.pipeline_mode<synchronous>, transform_indices = @transform_1, window_bounds = array<i64: 1664, 128>}, {pipeline_mode = #tpu.pipeline_mode<synchronous>, transform_indices = @transform_2, window_bounds = array<i64: 1, 128>}, {transform_indices = @transform_3, window_bounds = array<i64: 8, 128>}]} {
    %c0 = arith.constant 0 : index
    %c0_0 = arith.constant 0 : index
    %0 = vector.load %arg1[%c0, %c0_0] : memref<8x1664xbf16, #tpu.memory_space<vmem>>, vector<8x1664xbf16>
    %c0_1 = arith.constant 0 : index
    %c0_2 = arith.constant 0 : index
    %1 = vector.load %arg2[%c0_1, %c0_2] : memref<1664x128xbf16, #tpu.memory_space<vmem>>, vector<1664x128xbf16>
    %cst = arith.constant dense<0.000000e+00> : vector<8x128xf32>
    %2 = tpu.matmul %0, %1, %cst {dimension_numbers = #tpu.dot_dimension_numbers<[1], [0], [0], [1], [0, 0, 1, 1], [], []>} : vector<8x1664xbf16>, vector<1664x128xbf16>, vector<8x128xf32> -> vector<8x128xf32>
    %c0_3 = arith.constant 0 : index
    %c0_4 = arith.constant 0 : index
    %3 = vector.load %arg3[%c0_3, %c0_4] : memref<1x128xf32, #tpu.memory_space<vmem>>, vector<1x128xf32>
    %4 = vector.broadcast %3 : vector<1x128xf32> to vector<8x128xf32>
    %5 = arith.addf %2, %4 : vector<8x128xf32>
    %cst_5 = arith.constant 0.000000e+00 : f32
    %6 = vector.broadcast %cst_5 : f32 to vector<8x128xf32>
    %7 = arith.maximumf %5, %6 : vector<8x128xf32>
    %8 = arith.truncf %7 : vector<8x128xf32> to vector<8x128xbf16>
    %c0_6 = arith.constant 0 : index
    %c0_7 = arith.constant 0 : index
    %9 = vector.load %arg4[%c0_6, %c0_7] : memref<8x128xbf16, #tpu.memory_space<vmem>>, vector<8x128xbf16>
    tpu.vector_store %arg4[%c0_6, %c0_7], %8 {strides = array<i32>} : memref<8x128xbf16, #tpu.memory_space<vmem>>, vector<8x128xbf16>,
    return
  }
  func.func @transform_0(%arg0: i32) -> (i32, i32) {
    %c0_i32 = arith.constant 0 : i32
    %c0_i32_0 = arith.constant 0 : i32
    return %arg0, %c0_i32 : i32, i32
  }
  func.func @transform_1(%arg0: i32) -> (i32, i32) {
    %c0_i32 = arith.constant 0 : i32
    %c0_i32_0 = arith.constant 0 : i32
    %c0_i32_1 = arith.constant 0 : i32
    return %c0_i32, %c0_i32_0 : i32, i32
  }
  func.func @transform_2(%arg0: i32) -> (i32, i32) {
    %c0_i32 = arith.constant 0 : i32
    %c0_i32_0 = arith.constant 0 : i32
    %c0_i32_1 = arith.constant 0 : i32
    return %c0_i32, %c0_i32_0 : i32, i32
  }
  func.func @transform_3(%arg0: i32) -> (i32, i32) {
    %c0_i32 = arith.constant 0 : i32
    %c0_i32_0 = arith.constant 0 : i32
    return %arg0, %c0_i32 : i32, i32
  }
}

module attributes {stable_mosaic.version = 11 : i64} {
  func.func @_gemm_stream_kernel(%arg0: i32, %arg1: i32, %arg2: i32, %arg3: memref<2x512xbf16, #tpu.memory_space<vmem>>, %arg4: memref<512x128xbf16, #tpu.memory_space<vmem>>, %arg5: memref<1x128xf32, #tpu.memory_space<vmem>>, %arg6: memref<2x128xbf16, #tpu.memory_space<vmem>>, %arg7: memref<2x128xf32, #tpu.memory_space<vmem>>) attributes {dimension_semantics = [#tpu.dimension_semantics<parallel>, #tpu.dimension_semantics<parallel>, #tpu.dimension_semantics<arbitrary>], iteration_bounds = array<i64: 1, 1, 1>, scalar_prefetch = 0 : i64, scratch_operands = 1 : i64, tpu.core_type = #tpu.core_type<tc>, window_params = [{transform_indices = @transform_0, window_bounds = array<i64: 2, 512>}, {transform_indices = @transform_1, window_bounds = array<i64: 512, 128>}, {transform_indices = @transform_2, window_bounds = array<i64: 1, 128>}, {transform_indices = @transform_3, window_bounds = array<i64: 2, 128>}]} {
    %c0_i32 = arith.constant 0 : i32
    %0 = arith.cmpi eq, %arg2, %c0_i32 : i32
    %1 = arith.extui %0 : i1 to i32
    %c0_i32_0 = arith.constant 0 : i32
    %2 = arith.cmpi ne, %1, %c0_i32_0 : i32
    scf.if %2 {
      %cst_10 = arith.constant 0.000000e+00 : f32
      %12 = vector.broadcast %cst_10 : f32 to vector<2x128xf32>
      %c0_11 = arith.constant 0 : index
      %c0_12 = arith.constant 0 : index
      %13 = vector.load %arg7[%c0_11, %c0_12] : memref<2x128xf32, #tpu.memory_space<vmem>>, vector<2x128xf32>
      tpu.vector_store %arg7[%c0_11, %c0_12], %12 {strides = array<i32>} : memref<2x128xf32, #tpu.memory_space<vmem>>, vector<2x128xf32>,
    } else {
    }
    %c0 = arith.constant 0 : index
    %c0_1 = arith.constant 0 : index
    %3 = vector.load %arg7[%c0, %c0_1] : memref<2x128xf32, #tpu.memory_space<vmem>>, vector<2x128xf32>
    %c0_2 = arith.constant 0 : index
    %c0_3 = arith.constant 0 : index
    %4 = vector.load %arg3[%c0_2, %c0_3] : memref<2x512xbf16, #tpu.memory_space<vmem>>, vector<2x512xbf16>
    %c0_4 = arith.constant 0 : index
    %c0_5 = arith.constant 0 : index
    %5 = vector.load %arg4[%c0_4, %c0_5] : memref<512x128xbf16, #tpu.memory_space<vmem>>, vector<512x128xbf16>
    %cst = arith.constant dense<0.000000e+00> : vector<2x128xf32>
    %6 = tpu.matmul %4, %5, %cst {dimension_numbers = #tpu.dot_dimension_numbers<[1], [0], [0], [1], [0, 0, 1, 1], [], []>} : vector<2x512xbf16>, vector<512x128xbf16>, vector<2x128xf32> -> vector<2x128xf32>
    %7 = arith.addf %3, %6 : vector<2x128xf32>
    %c0_6 = arith.constant 0 : index
    %c0_7 = arith.constant 0 : index
    %8 = vector.load %arg7[%c0_6, %c0_7] : memref<2x128xf32, #tpu.memory_space<vmem>>, vector<2x128xf32>
    tpu.vector_store %arg7[%c0_6, %c0_7], %7 {strides = array<i32>} : memref<2x128xf32, #tpu.memory_space<vmem>>, vector<2x128xf32>,
    %c0_i32_8 = arith.constant 0 : i32
    %9 = arith.cmpi eq, %arg2, %c0_i32_8 : i32
    %10 = arith.extui %9 : i1 to i32
    %c0_i32_9 = arith.constant 0 : i32
    %11 = arith.cmpi ne, %10, %c0_i32_9 : i32
    scf.if %11 {
      %c0_10 = arith.constant 0 : index
      %c0_11 = arith.constant 0 : index
      %12 = vector.load %arg7[%c0_10, %c0_11] : memref<2x128xf32, #tpu.memory_space<vmem>>, vector<2x128xf32>
      %c0_12 = arith.constant 0 : index
      %c0_13 = arith.constant 0 : index
      %13 = vector.load %arg5[%c0_12, %c0_13] : memref<1x128xf32, #tpu.memory_space<vmem>>, vector<1x128xf32>
      %14 = vector.broadcast %13 : vector<1x128xf32> to vector<2x128xf32>
      %15 = arith.addf %12, %14 : vector<2x128xf32>
      %cst_14 = arith.constant 0.000000e+00 : f32
      %16 = vector.broadcast %cst_14 : f32 to vector<2x128xf32>
      %17 = arith.maximumf %15, %16 : vector<2x128xf32>
      %18 = arith.truncf %17 : vector<2x128xf32> to vector<2x128xbf16>
      %c0_15 = arith.constant 0 : index
      %c0_16 = arith.constant 0 : index
      %19 = vector.load %arg6[%c0_15, %c0_16] : memref<2x128xbf16, #tpu.memory_space<vmem>>, vector<2x128xbf16>
      tpu.vector_store %arg6[%c0_15, %c0_16], %18 {strides = array<i32>} : memref<2x128xbf16, #tpu.memory_space<vmem>>, vector<2x128xbf16>,
    } else {
    }
    return
  }
  func.func @transform_0(%arg0: i32, %arg1: i32, %arg2: i32) -> (i32, i32) {
    %c0_i32 = arith.constant 0 : i32
    return %arg0, %arg2 : i32, i32
  }
  func.func @transform_1(%arg0: i32, %arg1: i32, %arg2: i32) -> (i32, i32) {
    %c0_i32 = arith.constant 0 : i32
    return %arg2, %arg1 : i32, i32
  }
  func.func @transform_2(%arg0: i32, %arg1: i32, %arg2: i32) -> (i32, i32) {
    %c0_i32 = arith.constant 0 : i32
    %c0_i32_0 = arith.constant 0 : i32
    return %c0_i32, %arg1 : i32, i32
  }
  func.func @transform_3(%arg0: i32, %arg1: i32, %arg2: i32) -> (i32, i32) {
    %c0_i32 = arith.constant 0 : i32
    return %arg0, %arg1 : i32, i32
  }
}

module attributes {stable_mosaic.version = 11 : i64} {
  func.func @_gemm_resident_kernel(%arg0: i32, %arg1: memref<2x128xbf16, #tpu.memory_space<vmem>>, %arg2: memref<128x128xbf16, #tpu.memory_space<vmem>>, %arg3: memref<1x128xf32, #tpu.memory_space<vmem>>, %arg4: memref<2x128xf32, #tpu.memory_space<vmem>>) attributes {dimension_semantics = [#tpu.dimension_semantics<parallel>], iteration_bounds = array<i64: 1>, scalar_prefetch = 0 : i64, scratch_operands = 0 : i64, tpu.core_type = #tpu.core_type<tc>, window_params = [{transform_indices = @transform_0, window_bounds = array<i64: 2, 128>}, {pipeline_mode = #tpu.pipeline_mode<synchronous>, transform_indices = @transform_1, window_bounds = array<i64: 128, 128>}, {pipeline_mode = #tpu.pipeline_mode<synchronous>, transform_indices = @transform_2, window_bounds = array<i64: 1, 128>}, {transform_indices = @transform_3, window_bounds = array<i64: 2, 128>}]} {
    %c0 = arith.constant 0 : index
    %c0_0 = arith.constant 0 : index
    %0 = vector.load %arg1[%c0, %c0_0] : memref<2x128xbf16, #tpu.memory_space<vmem>>, vector<2x128xbf16>
    %c0_1 = arith.constant 0 : index
    %c0_2 = arith.constant 0 : index
    %1 = vector.load %arg2[%c0_1, %c0_2] : memref<128x128xbf16, #tpu.memory_space<vmem>>, vector<128x128xbf16>
    %cst = arith.constant dense<0.000000e+00> : vector<2x128xf32>
    %2 = tpu.matmul %0, %1, %cst {dimension_numbers = #tpu.dot_dimension_numbers<[1], [0], [0], [1], [0, 0, 1, 1], [], []>} : vector<2x128xbf16>, vector<128x128xbf16>, vector<2x128xf32> -> vector<2x128xf32>
    %c0_3 = arith.constant 0 : index
    %c0_4 = arith.constant 0 : index
    %3 = vector.load %arg3[%c0_3, %c0_4] : memref<1x128xf32, #tpu.memory_space<vmem>>, vector<1x128xf32>
    %4 = vector.broadcast %3 : vector<1x128xf32> to vector<2x128xf32>
    %5 = arith.addf %2, %4 : vector<2x128xf32>
    %cst_5 = arith.constant dense<0xFF800000> : vector<2xf32>
    %6 = vector.multi_reduction <maximumf>, %5, %cst_5 [1] : vector<2x128xf32> to vector<2xf32>
    %7 = vector.shape_cast %6 : vector<2xf32> to vector<2x1xf32>
    %8 = vector.broadcast %7 : vector<2x1xf32> to vector<2x128xf32>
    %9 = arith.subf %5, %8 : vector<2x128xf32>
    %10 = math.exp %9 : vector<2x128xf32>
    %cst_6 = arith.constant dense<0.000000e+00> : vector<2xf32>
    %11 = vector.multi_reduction <add>, %10, %cst_6 [1] : vector<2x128xf32> to vector<2xf32>
    %12 = vector.shape_cast %11 : vector<2xf32> to vector<2x1xf32>
    %13 = tpu.reciprocal %12 {approx = true} : vector<2x1xf32> -> vector<2x1xf32>
    %14 = vector.broadcast %13 : vector<2x1xf32> to vector<2x128xf32>
    %15 = arith.mulf %10, %14 : vector<2x128xf32>
    %c0_7 = arith.constant 0 : index
    %c0_8 = arith.constant 0 : index
    %16 = vector.load %arg4[%c0_7, %c0_8] : memref<2x128xf32, #tpu.memory_space<vmem>>, vector<2x128xf32>
    tpu.vector_store %arg4[%c0_7, %c0_8], %15 {strides = array<i32>} : memref<2x128xf32, #tpu.memory_space<vmem>>, vector<2x128xf32>,
    return
  }
  func.func @transform_0(%arg0: i32) -> (i32, i32) {
    %c0_i32 = arith.constant 0 : i32
    %c0_i32_0 = arith.constant 0 : i32
    return %arg0, %c0_i32 : i32, i32
  }
  func.func @transform_1(%arg0: i32) -> (i32, i32) {
    %c0_i32 = arith.constant 0 : i32
    %c0_i32_0 = arith.constant 0 : i32
    %c0_i32_1 = arith.constant 0 : i32
    return %c0_i32, %c0_i32_0 : i32, i32
  }
  func.func @transform_2(%arg0: i32) -> (i32, i32) {
    %c0_i32 = arith.constant 0 : i32
    %c0_i32_0 = arith.constant 0 : i32
    %c0_i32_1 = arith.constant 0 : i32
    return %c0_i32, %c0_i32_0 : i32, i32
  }
  func.func @transform_3(%arg0: i32) -> (i32, i32) {
    %c0_i32 = arith.constant 0 : i32
    %c0_i32_0 = arith.constant 0 : i32
    return %arg0, %c0_i32 : i32, i32
  }
}

</mosaic_0001>

<llo_original>
// kernel: conv2d_to_latent_forward.6
$region0: #{conv2d_to_latent_forward.6}
  #allocation0 [shape = 'u32[]', space=smem, size = 0x4, offset = 0x4, fixed_abs, tag = 'smem constant byte address 0x4 - core index']
  #allocation1 [shape = 'u32[144,128]{1,0:T(1,128)}', space=vmem, size = 0x12000, scoped, tag = 'internal scratch']
  %s0 = inlined_call_operand.vmem [shape: bf16[512,128], index: 0, kind: input, shape index: {}]
  %s1 = inlined_call_operand.vmem [shape: bf16[128,128], index: 1, kind: input, shape index: {}]
  %s2 = inlined_call_operand.vmem [shape: f32[1,128], index: 2, kind: input, shape index: {}]
  %s3 = inlined_call_operand.vmem [shape: bf16[512,128], index: 3, kind: output, shape index: {}]
  %s4 = sld [smem:[#allocation0]]
  $region22: #{conv2d_to_latent_forward.6} parent=0
    _
  %s6 = ssub.s32 1, %s4
  %s7 = scalar_select 0, %s6, %s4
  // Predicated region
  $region2: #{conv2d_to_latent_forward.6} parent=0 // pred_check
    _
  $region3: #{conv2d_to_latent_forward.6} parent=0 // pred_check_branch
    %9 = sbr.rel (0) target = $region5
  $region4: #{conv2d_to_latent_forward.6} parent=0 // pred_region
    _
  $region5: #{conv2d_to_latent_forward.6} parent=0 // pred_fallthru
    _
  // Predicated region
  $region6: #{conv2d_to_latent_forward.6} parent=0 // pred_check
    _
  $region7: #{conv2d_to_latent_forward.6} parent=0 // pred_check_branch
    %11 = sbr.rel (0) target = $region9
  $region8: #{conv2d_to_latent_forward.6} parent=0 // pred_region
    _
  $region9: #{conv2d_to_latent_forward.6} parent=0 // pred_fallthru
    _
  // Predicated region
  $region10: #{conv2d_to_latent_forward.6} parent=0 // pred_check
    _
  $region11: #{conv2d_to_latent_forward.6} parent=0 // pred_check_branch
    %13 = sbr.rel (0) target = $region13
  $region12: #{conv2d_to_latent_forward.6} parent=0 // pred_region
    _
  $region13: #{conv2d_to_latent_forward.6} parent=0 // pred_fallthru
    _
  %v15 = vld [vmem:[%s0] sm:$0xf]
  %v16 = vld [vmem:[%s0 + $0x4] sm:$0xf]
  %v17 = vld [vmem:[%s0 + $0x8] sm:$0xf]
  %v18 = vld [vmem:[%s0 + $0xc] sm:$0xf]
  %v19 = vld [vmem:[%s0 + $0x10] sm:$0xf]
  %v20 = vld [vmem:[%s0 + $0x14] sm:$0xf]
  %v21 = vld [vmem:[%s0 + $0x18] sm:$0xf]
  %v22 = vld [vmem:[%s0 + $0x1c] sm:$0xf]
  %v23 = vld [vmem:[%s0 + $0x20] sm:$0xf]
  %v24 = vld [vmem:[%s0 + $0x24] sm:$0xf]
  %v25 = vld [vmem:[%s0 + $0x28] sm:$0xf]
  %v26 = vld [vmem:[%s0 + $0x2c] sm:$0xf]
  %v27 = vld [vmem:[%s0 + $0x30] sm:$0xf]
  %v28 = vld [vmem:[%s0 + $0x34] sm:$0xf]
  %v29 = vld [vmem:[%s0 + $0x38] sm:$0xf]
  %v30 = vld [vmem:[%s0 + $0x3c] sm:$0xf]
  %v31 = vld [vmem:[%s0 + $0x40] sm:$0xf]
  %v32 = vld [vmem:[%s0 + $0x44] sm:$0xf]
  %v33 = vld [vmem:[%s0 + $0x48] sm:$0xf]
  %v34 = vld [vmem:[%s0 + $0x4c] sm:$0xf]
  %v35 = vld [vmem:[%s0 + $0x50] sm:$0xf]
  %v36 = vld [vmem:[%s0 + $0x54] sm:$0xf]
  %v37 = vld [vmem:[%s0 + $0x58] sm:$0xf]
  %v38 = vld [vmem:[%s0 + $0x5c] sm:$0xf]
  %v39 = vld [vmem:[%s0 + $0x60] sm:$0xf]
  %v40 = vld [vmem:[%s0 + $0x64] sm:$0xf]
  %v41 = vld [vmem:[%s0 + $0x68] sm:$0xf]
  %v42 = vld [vmem:[%s0 + $0x6c] sm:$0xf]
  %v43 = vld [vmem:[%s0 + $0x70] sm:$0xf]
  %v44 = vld [vmem:[%s0 + $0x74] sm:$0xf]
  %v45 = vld [vmem:[%s0 + $0x78] sm:$0xf]
  %v46 = vld [vmem:[%s0 + $0x7c] sm:$0xf]
  %v47 = vld [vmem:[%s0 + $0x80] sm:$0xf]
  %v48 = vld [vmem:[%s0 + $0x84] sm:$0xf]
  %v49 = vld [vmem:[%s0 + $0x88] sm:$0xf]
  %v50 = vld [vmem:[%s0 + $0x8c] sm:$0xf]
  %v51 = vld [vmem:[%s0 + $0x90] sm:$0xf]
  %v52 = vld [vmem:[%s0 + $0x94] sm:$0xf]
  %v53 = vld [vmem:[%s0 + $0x98] sm:$0xf]
  %v54 = vld [vmem:[%s0 + $0x9c] sm:$0xf]
  %v55 = vld [vmem:[%s0 + $0xa0] sm:$0xf]
  %v56 = vld [vmem:[%s0 + $0xa4] sm:$0xf]
  %v57 = vld [vmem:[%s0 + $0xa8] sm:$0xf]
  %v58 = vld [vmem:[%s0 + $0xac] sm:$0xf]
  %v59 = vld [vmem:[%s0 + $0xb0] sm:$0xf]
  %v60 = vld [vmem:[%s0 + $0xb4] sm:$0xf]
  %v61 = vld [vmem:[%s0 + $0xb8] sm:$0xf]
  %v62 = vld [vmem:[%s0 + $0xbc] sm:$0xf]
  %v63 = vld [vmem:[%s0 + $0xc0] sm:$0xf]
  %v64 = vld [vmem:[%s0 + $0xc4] sm:$0xf]
  %v65 = vld [vmem:[%s0 + $0xc8] sm:$0xf]
  %v66 = vld [vmem:[%s0 + $0xcc] sm:$0xf]
  %v67 = vld [vmem:[%s0 + $0xd0] sm:$0xf]
  %v68 = vld [vmem:[%s0 + $0xd4] sm:$0xf]
  %v69 = vld [vmem:[%s0 + $0xd8] sm:$0xf]
  %v70 = vld [vmem:[%s0 + $0xdc] sm:$0xf]
  %v71 = vld [vmem:[%s0 + $0xe0] sm:$0xf]
  %v72 = vld [vmem:[%s0 + $0xe4] sm:$0xf]
  %v73 = vld [vmem:[%s0 + $0xe8] sm:$0xf]
  %v74 = vld [vmem:[%s0 + $0xec] sm:$0xf]
  %v75 = vld [vmem:[%s0 + $0xf0] sm:$0xf]
  %v76 = vld [vmem:[%s0 + $0xf4] sm:$0xf]
  %v77 = vld [vmem:[%s0 + $0xf8] sm:$0xf]
  %v78 = vld [vmem:[%s0 + $0xfc] sm:$0xf]
  %v79 = vld [vmem:[%s1] sm:$0xf]
  %v80 = vld [vmem:[%s1 + $0x4] sm:$0xf]
  %v81 = vld [vmem:[%s1 + $0x8] sm:$0xf]
  %v82 = vld [vmem:[%s1 + $0xc] sm:$0xf]
  %v83 = vld [vmem:[%s1 + $0x10] sm:$0xf]
  %v84 = vld [vmem:[%s1 + $0x14] sm:$0xf]
  %v85 = vld [vmem:[%s1 + $0x18] sm:$0xf]
  %v86 = vld [vmem:[%s1 + $0x1c] sm:$0xf]
  %v87 = vld [vmem:[%s1 + $0x20] sm:$0xf]
  %v88 = vld [vmem:[%s1 + $0x24] sm:$0xf]
  %v89 = vld [vmem:[%s1 + $0x28] sm:$0xf]
  %v90 = vld [vmem:[%s1 + $0x2c] sm:$0xf]
  %v91 = vld [vmem:[%s1 + $0x30] sm:$0xf]
  %v92 = vld [vmem:[%s1 + $0x34] sm:$0xf]
  %v93 = vld [vmem:[%s1 + $0x38] sm:$0xf]
  %v94 = vld [vmem:[%s1 + $0x3c] sm:$0xf]
  %v95 = vld [vmem:[%s2] sm:$0x1]
  %v97 = vlaneseq
  %v98 = vshrl.u32 %v97, 7
  %v99 = vsub.s32 0, %v98
  %v100 = vrot.slane %v95, %v99
  %v166 = vunpack.c.l.b16 %v15
  %v167 = vunpack.c.l.b16 %v16
  %v168 = vunpack.c.l.b16 %v17
  %v169 = vunpack.c.l.b16 %v18
  %v170 = vunpack.c.l.b16 %v19
  %v171 = vunpack.c.l.b16 %v20
  %v172 = vunpack.c.l.b16 %v21
  %v173 = vunpack.c.l.b16 %v22
  %v174 = vunpack.c.l.b16 %v23
  %v175 = vunpack.c.l.b16 %v24
  %v176 = vunpack.c.l.b16 %v25
  %v177 = vunpack.c.l.b16 %v26
  %v178 = vunpack.c.l.b16 %v27
  %v179 = vunpack.c.l.b16 %v28
  %v180 = vunpack.c.l.b16 %v29
  %v181 = vunpack.c.l.b16 %v30
  %v182 = vunpack.c.l.b16 %v31
  %v183 = vunpack.c.l.b16 %v32
  %v184 = vunpack.c.l.b16 %v33
  %v185 = vunpack.c.l.b16 %v34
  %v186 = vunpack.c.l.b16 %v35
  %v187 = vunpack.c.l.b16 %v36
  %v188 = vunpack.c.l.b16 %v37
  %v189 = vunpack.c.l.b16 %v38
  %v190 = vunpack.c.l.b16 %v39
  %v191 = vunpack.c.l.b16 %v40
  %v192 = vunpack.c.l.b16 %v41
  %v193 = vunpack.c.l.b16 %v42
  %v194 = vunpack.c.l.b16 %v43
  %v195 = vunpack.c.l.b16 %v44
  %v196 = vunpack.c.l.b16 %v45
  %v197 = vunpack.c.l.b16 %v46
  %v198 = vunpack.c.l.b16 %v47
  %v199 = vunpack.c.l.b16 %v48
  %v200 = vunpack.c.l.b16 %v49
  %v201 = vunpack.c.l.b16 %v50
  %v202 = vunpack.c.l.b16 %v51
  %v203 = vunpack.c.l.b16 %v52
  %v204 = vunpack.c.l.b16 %v53
  %v205 = vunpack.c.l.b16 %v54
  %v206 = vunpack.c.l.b16 %v55
  %v207 = vunpack.c.l.b16 %v56
  %v208 = vunpack.c.l.b16 %v57
  %v209 = vunpack.c.l.b16 %v58
  %v210 = vunpack.c.l.b16 %v59
  %v211 = vunpack.c.l.b16 %v60
  %v212 = vunpack.c.l.b16 %v61
  %v213 = vunpack.c.l.b16 %v62
  %v214 = vunpack.c.l.b16 %v63
  %v215 = vunpack.c.l.b16 %v64
  %v216 = vunpack.c.l.b16 %v65
  %v217 = vunpack.c.l.b16 %v66
  %v218 = vunpack.c.l.b16 %v67
  %v219 = vunpack.c.l.b16 %v68
  %v220 = vunpack.c.l.b16 %v69
  %v221 = vunpack.c.l.b16 %v70
  %v222 = vunpack.c.l.b16 %v71
  %v223 = vunpack.c.l.b16 %v72
  %v224 = vunpack.c.l.b16 %v73
  %v225 = vunpack.c.l.b16 %v74
  %v226 = vunpack.c.l.b16 %v75
  %v227 = vunpack.c.l.b16 %v76
  %v228 = vunpack.c.l.b16 %v77
  %v229 = vunpack.c.l.b16 %v78
  %v230 = vpack.c.b16 %v167, %v166
  %v231 = vpack.c.b16 %v169, %v168
  %v232 = vpack.c.b16 %v171, %v170
  %v233 = vpack.c.b16 %v173, %v172
  %v234 = vpack.c.b16 %v175, %v174
  %v235 = vpack.c.b16 %v177, %v176
  %v236 = vpack.c.b16 %v179, %v178
  %v237 = vpack.c.b16 %v181, %v180
  %v238 = vpack.c.b16 %v183, %v182
  %v239 = vpack.c.b16 %v185, %v184
  %v240 = vpack.c.b16 %v187, %v186
  %v241 = vpack.c.b16 %v189, %v188
  %v242 = vpack.c.b16 %v191, %v190
  %v243 = vpack.c.b16 %v193, %v192
  %v244 = vpack.c.b16 %v195, %v194
  %v245 = vpack.c.b16 %v197, %v196
  %v246 = vpack.c.b16 %v199, %v198
  %v247 = vpack.c.b16 %v201, %v200
  %v248 = vpack.c.b16 %v203, %v202
  %v249 = vpack.c.b16 %v205, %v204
  %v250 = vpack.c.b16 %v207, %v206
  %v251 = vpack.c.b16 %v209, %v208
  %v252 = vpack.c.b16 %v211, %v210
  %v253 = vpack.c.b16 %v213, %v212
  %v254 = vpack.c.b16 %v215, %v214
  %v255 = vpack.c.b16 %v217, %v216
  %v256 = vpack.c.b16 %v219, %v218
  %v257 = vpack.c.b16 %v221, %v220
  %v258 = vpack.c.b16 %v223, %v222
  %v259 = vpack.c.b16 %v225, %v224
  %v260 = vpack.c.b16 %v227, %v226
  %v261 = vpack.c.b16 %v229, %v228
  %v310 = vunpack.c.l.b16 %v79
  %v311 = vunpack.c.l.b16 %v80
  %v312 = vunpack.c.l.b16 %v81
  %v313 = vunpack.c.l.b16 %v82
  %v314 = vunpack.c.l.b16 %v83
  %v315 = vunpack.c.l.b16 %v84
  %v316 = vunpack.c.l.b16 %v85
  %v317 = vunpack.c.l.b16 %v86
  %v318 = vunpack.c.l.b16 %v87
  %v319 = vunpack.c.l.b16 %v88
  %v320 = vunpack.c.l.b16 %v89
  %v321 = vunpack.c.l.b16 %v90
  %v322 = vunpack.c.l.b16 %v91
  %v323 = vunpack.c.l.b16 %v92
  %v324 = vunpack.c.l.b16 %v93
  %v325 = vunpack.c.l.b16 %v94
  %v326 = vpack.c.b16 %v311, %v310
  %v327 = vpack.c.b16 %v313, %v312
  %v328 = vpack.c.b16 %v315, %v314
  %v329 = vpack.c.b16 %v317, %v316
  %v330 = vpack.c.b16 %v319, %v318
  %v331 = vpack.c.b16 %v321, %v320
  %v332 = vpack.c.b16 %v323, %v322
  %v333 = vpack.c.b16 %v325, %v324
  %342 = vmatprep.subr.bf16.mxu0 0
  %343 = vmatpush1.bf16.msra.mxu0 %v333
  %344 = vmatprep.subr.bf16.mxu0 0
  %345 = vmatpush1.bf16.msra.mxu0 %v332
  %346 = vmatprep.subr.bf16.mxu0 0
  %347 = vmatpush1.bf16.msra.mxu0 %v331
  %348 = vmatprep.subr.bf16.mxu0 0
  %349 = vmatpush1.bf16.msra.mxu0 %v330
  %350 = vmatprep.subr.bf16.mxu0 0
  %351 = vmatpush1.bf16.msra.mxu0 %v329
  %352 = vmatprep.subr.bf16.mxu0 0
  %353 = vmatpush1.bf16.msra.mxu0 %v328
  %354 = vmatprep.subr.bf16.mxu0 0
  %355 = vmatpush1.bf16.msra.mxu0 %v327
  %356 = vmatprep.subr.bf16.mxu0 0
  %357 = vmatpush1.bf16.msra.mxu0 %v326
  %358 = vmatprep.subr.bf16.mxu0 0
  %359 = vmatpush2.bf16.msra.mxu0 0
  %360 = vmatprep.subr.bf16.mxu0 0
  %361 = vmatpush2.bf16.msra.mxu0 0
  %362 = vmatprep.subr.bf16.mxu0 0
  %363 = vmatpush2.bf16.msra.mxu0 0
  %364 = vmatprep.subr.bf16.mxu0 0
  %365 = vmatpush2.bf16.msra.mxu0 0
  %366 = vmatprep.subr.bf16.mxu0 0
  %367 = vmatpush2.bf16.msra.mxu0 0
  %368 = vmatprep.subr.bf16.mxu0 0
  %369 = vmatpush2.bf16.msra.mxu0 0
  %370 = vmatprep.subr.bf16.mxu0 0
  %371 = vmatpush2.bf16.msra.mxu0 0
  %372 = vmatprep.subr.bf16.mxu0 0
  %373 = vmatpush2.bf16.msra.mxu0 0
  %374 = vmatprep.mubr.bf16.mxu0 0
  %375 = vmatmul.mubr.bf16.gmra.mxu0 %v230
  %v376 = vpop.f32.mrf.mxu0
  %v377 = vadd.f32 %v100, %v376
  %v378 = vpop.f32.mrf.mxu0
  %v379 = vpop.f32.mrf.mxu0
  %v380 = vadd.f32 %v100, %v379
  %v381 = vpop.f32.mrf.mxu0
  %382 = vmatprep.mubr.bf16.mxu0 0
  %383 = vmatmul.mubr.bf16.gmra.mxu0 %v231
  %v384 = vpop.f32.mrf.mxu0
  %v385 = vadd.f32 %v100, %v384
  %v386 = vpop.f32.mrf.mxu0
  %v387 = vpop.f32.mrf.mxu0
  %v388 = vadd.f32 %v100, %v387
  %v389 = vpop.f32.mrf.mxu0
  %390 = vmatprep.mubr.bf16.mxu0 0
  %391 = vmatmul.mubr.bf16.gmra.mxu0 %v232
  %v392 = vpop.f32.mrf.mxu0
  %v393 = vadd.f32 %v100, %v392
  %v394 = vpop.f32.mrf.mxu0
  %v395 = vpop.f32.mrf.mxu0
  %v396 = vadd.f32 %v100, %v395
  %v397 = vpop.f32.mrf.mxu0
  %398 = vmatprep.mubr.bf16.mxu0 0
  %399 = vmatmul.mubr.bf16.gmra.mxu0 %v233
  %v400 = vpop.f32.mrf.mxu0
  %v401 = vadd.f32 %v100, %v400
  %v402 = vpop.f32.mrf.mxu0
  %v403 = vpop.f32.mrf.mxu0
  %v404 = vadd.f32 %v100, %v403
  %v405 = vpop.f32.mrf.mxu0
  %406 = vmatprep.mubr.bf16.mxu0 0
  %407 = vmatmul.mubr.bf16.gmra.mxu0 %v234
  %v408 = vpop.f32.mrf.mxu0
  %v409 = vadd.f32 %v100, %v408
  %v410 = vpop.f32.mrf.mxu0
  %v411 = vpop.f32.mrf.mxu0
  %v412 = vadd.f32 %v100, %v411
  %v413 = vpop.f32.mrf.mxu0
  %414 = vmatprep.mubr.bf16.mxu0 0
  %415 = vmatmul.mubr.bf16.gmra.mxu0 %v235
  %v416 = vpop.f32.mrf.mxu0
  %v417 = vadd.f32 %v100, %v416
  %v418 = vpop.f32.mrf.mxu0
  %v419 = vpop.f32.mrf.mxu0
  %v420 = vadd.f32 %v100, %v419
  %v421 = vpop.f32.mrf.mxu0
  %422 = vmatprep.mubr.bf16.mxu0 0
  %423 = vmatmul.mubr.bf16.gmra.mxu0 %v236
  %v424 = vpop.f32.mrf.mxu0
  %v425 = vadd.f32 %v100, %v424
  %v426 = vpop.f32.mrf.mxu0
  %v427 = vpop.f32.mrf.mxu0
  %v428 = vadd.f32 %v100, %v427
  %v429 = vpop.f32.mrf.mxu0
  %430 = vmatprep.mubr.bf16.mxu0 0
  %431 = vmatmul.mubr.bf16.gmra.mxu0 %v237
  %v432 = vpop.f32.mrf.mxu0
  %v433 = vadd.f32 %v100, %v432
  %v434 = vpop.f32.mrf.mxu0
  %v435 = vpop.f32.mrf.mxu0
  %v436 = vadd.f32 %v100, %v435
  %v437 = vpop.f32.mrf.mxu0
  %438 = vmatprep.mubr.bf16.mxu0 0
  %439 = vmatmul.mubr.bf16.gmra.mxu0 %v238
  %v440 = vpop.f32.mrf.mxu0
  %v441 = vadd.f32 %v100, %v440
  %v442 = vpop.f32.mrf.mxu0
  %v443 = vpop.f32.mrf.mxu0
  %v444 = vadd.f32 %v100, %v443
  %v445 = vpop.f32.mrf.mxu0
  %446 = vmatprep.mubr.bf16.mxu0 0
  %447 = vmatmul.mubr.bf16.gmra.mxu0 %v239
  %v448 = vpop.f32.mrf.mxu0
  %v449 = vadd.f32 %v100, %v448
  %v450 = vpop.f32.mrf.mxu0
  %v451 = vpop.f32.mrf.mxu0
  %v452 = vadd.f32 %v100, %v451
  %v453 = vpop.f32.mrf.mxu0
  %454 = vmatprep.mubr.bf16.mxu0 0
  %455 = vmatmul.mubr.bf16.gmra.mxu0 %v240
  %v456 = vpop.f32.mrf.mxu0
  %v457 = vadd.f32 %v100, %v456
  %v458 = vpop.f32.mrf.mxu0
  %v459 = vpop.f32.mrf.mxu0
  %v460 = vadd.f32 %v100, %v459
  %v461 = vpop.f32.mrf.mxu0
  %462 = vmatprep.mubr.bf16.mxu0 0
  %463 = vmatmul.mubr.bf16.gmra.mxu0 %v241
  %v464 = vpop.f32.mrf.mxu0
  %v465 = vadd.f32 %v100, %v464
  %v466 = vpop.f32.mrf.mxu0
  %v467 = vpop.f32.mrf.mxu0
  %v468 = vadd.f32 %v100, %v467
  %v469 = vpop.f32.mrf.mxu0
  %470 = vmatprep.mubr.bf16.mxu0 0
  %471 = vmatmul.mubr.bf16.gmra.mxu0 %v242
  %v472 = vpop.f32.mrf.mxu0
  %v473 = vadd.f32 %v100, %v472
  %v474 = vpop.f32.mrf.mxu0
  %v475 = vpop.f32.mrf.mxu0
  %v476 = vadd.f32 %v100, %v475
  %v477 = vpop.f32.mrf.mxu0
  %478 = vmatprep.mubr.bf16.mxu0 0
  %479 = vmatmul.mubr.bf16.gmra.mxu0 %v243
  %v480 = vpop.f32.mrf.mxu0
  %v481 = vadd.f32 %v100, %v480
  %v482 = vpop.f32.mrf.mxu0
  %v483 = vpop.f32.mrf.mxu0
  %v484 = vadd.f32 %v100, %v483
  %v485 = vpop.f32.mrf.mxu0
  %486 = vmatprep.mubr.bf16.mxu0 0
  %487 = vmatmul.mubr.bf16.gmra.mxu0 %v244
  %v488 = vpop.f32.mrf.mxu0
  %v489 = vadd.f32 %v100, %v488
  %v490 = vpop.f32.mrf.mxu0
  %v491 = vpop.f32.mrf.mxu0
  %v492 = vadd.f32 %v100, %v491
  %v493 = vpop.f32.mrf.mxu0
  %494 = vmatprep.mubr.bf16.mxu0 0
  %495 = vmatmul.mubr.bf16.gmra.mxu0 %v245
  %v496 = vpop.f32.mrf.mxu0
  %v497 = vadd.f32 %v100, %v496
  %v498 = vpop.f32.mrf.mxu0
  %v499 = vpop.f32.mrf.mxu0
  %v500 = vadd.f32 %v100, %v499
  %v501 = vpop.f32.mrf.mxu0
  %502 = vmatprep.mubr.bf16.mxu0 0
  %503 = vmatmul.mubr.bf16.gmra.mxu0 %v246
  %v504 = vpop.f32.mrf.mxu0
  %v505 = vadd.f32 %v100, %v504
  %v506 = vpop.f32.mrf.mxu0
  %v507 = vpop.f32.mrf.mxu0
  %v508 = vadd.f32 %v100, %v507
  %v509 = vpop.f32.mrf.mxu0
  %510 = vmatprep.mubr.bf16.mxu0 0
  %511 = vmatmul.mubr.bf16.gmra.mxu0 %v247
  %v512 = vpop.f32.mrf.mxu0
  %v513 = vadd.f32 %v100, %v512
  %v514 = vpop.f32.mrf.mxu0
  %v515 = vpop.f32.mrf.mxu0
  %v516 = vadd.f32 %v100, %v515
  %v517 = vpop.f32.mrf.mxu0
  %518 = vmatprep.mubr.bf16.mxu0 0
  %519 = vmatmul.mubr.bf16.gmra.mxu0 %v248
  %v520 = vpop.f32.mrf.mxu0
  %v521 = vadd.f32 %v100, %v520
  %v522 = vpop.f32.mrf.mxu0
  %v523 = vpop.f32.mrf.mxu0
  %v524 = vadd.f32 %v100, %v523
  %v525 = vpop.f32.mrf.mxu0
  %526 = vmatprep.mubr.bf16.mxu0 0
  %527 = vmatmul.mubr.bf16.gmra.mxu0 %v249
  %v528 = vpop.f32.mrf.mxu0
  %v529 = vadd.f32 %v100, %v528
  %v530 = vpop.f32.mrf.mxu0
  %v531 = vpop.f32.mrf.mxu0
  %v532 = vadd.f32 %v100, %v531
  %v533 = vpop.f32.mrf.mxu0
  %534 = vmatprep.mubr.bf16.mxu0 0
  %535 = vmatmul.mubr.bf16.gmra.mxu0 %v250
  %v536 = vpop.f32.mrf.mxu0
  %v537 = vadd.f32 %v100, %v536
  %v538 = vpop.f32.mrf.mxu0
  %v539 = vpop.f32.mrf.mxu0
  %v540 = vadd.f32 %v100, %v539
  %v541 = vpop.f32.mrf.mxu0
  %542 = vmatprep.mubr.bf16.mxu0 0
  %543 = vmatmul.mubr.bf16.gmra.mxu0 %v251
  %v544 = vpop.f32.mrf.mxu0
  %v545 = vadd.f32 %v100, %v544
  %v546 = vpop.f32.mrf.mxu0
  %v547 = vpop.f32.mrf.mxu0
  %v548 = vadd.f32 %v100, %v547
  %v549 = vpop.f32.mrf.mxu0
  %550 = vmatprep.mubr.bf16.mxu0 0
  %551 = vmatmul.mubr.bf16.gmra.mxu0 %v252
  %v552 = vpop.f32.mrf.mxu0
  %v553 = vadd.f32 %v100, %v552
  %v554 = vpop.f32.mrf.mxu0
  %v555 = vpop.f32.mrf.mxu0
  %v556 = vadd.f32 %v100, %v555
  %v557 = vpop.f32.mrf.mxu0
  %558 = vmatprep.mubr.bf16.mxu0 0
  %559 = vmatmul.mubr.bf16.gmra.mxu0 %v253
  %v560 = vpop.f32.mrf.mxu0
  %v561 = vadd.f32 %v100, %v560
  %v562 = vpop.f32.mrf.mxu0
  %v563 = vpop.f32.mrf.mxu0
  %v564 = vadd.f32 %v100, %v563
  %v565 = vpop.f32.mrf.mxu0
  %566 = vmatprep.mubr.bf16.mxu0 0
  %567 = vmatmul.mubr.bf16.gmra.mxu0 %v254
  %v568 = vpop.f32.mrf.mxu0
  %v569 = vadd.f32 %v100, %v568
  %v570 = vpop.f32.mrf.mxu0
  %v571 = vpop.f32.mrf.mxu0
  %v572 = vadd.f32 %v100, %v571
  %v573 = vpop.f32.mrf.mxu0
  %574 = vmatprep.mubr.bf16.mxu0 0
  %575 = vmatmul.mubr.bf16.gmra.mxu0 %v255
  %v576 = vpop.f32.mrf.mxu0
  %v577 = vadd.f32 %v100, %v576
  %v578 = vpop.f32.mrf.mxu0
  %v579 = vpop.f32.mrf.mxu0
  %v580 = vadd.f32 %v100, %v579
  %v581 = vpop.f32.mrf.mxu0
  %582 = vmatprep.mubr.bf16.mxu0 0
  %583 = vmatmul.mubr.bf16.gmra.mxu0 %v256
  %v584 = vpop.f32.mrf.mxu0
  %v585 = vadd.f32 %v100, %v584
  %v586 = vpop.f32.mrf.mxu0
  %v587 = vpop.f32.mrf.mxu0
  %v588 = vadd.f32 %v100, %v587
  %v589 = vpop.f32.mrf.mxu0
  %590 = vmatprep.mubr.bf16.mxu0 0
  %591 = vmatmul.mubr.bf16.gmra.mxu0 %v257
  %v592 = vpop.f32.mrf.mxu0
  %v593 = vadd.f32 %v100, %v592
  %v594 = vpop.f32.mrf.mxu0
  %v595 = vpop.f32.mrf.mxu0
  %v596 = vadd.f32 %v100, %v595
  %v597 = vpop.f32.mrf.mxu0
  %598 = vmatprep.mubr.bf16.mxu0 0
  %599 = vmatmul.mubr.bf16.gmra.mxu0 %v258
  %v600 = vpop.f32.mrf.mxu0
  %v601 = vadd.f32 %v100, %v600
  %v602 = vpop.f32.mrf.mxu0
  %v603 = vpop.f32.mrf.mxu0
  %v604 = vadd.f32 %v100, %v603
  %v605 = vpop.f32.mrf.mxu0
  %606 = vmatprep.mubr.bf16.mxu0 0
  %607 = vmatmul.mubr.bf16.gmra.mxu0 %v259
  %v608 = vpop.f32.mrf.mxu0
  %v609 = vadd.f32 %v100, %v608
  %v610 = vpop.f32.mrf.mxu0
  %v611 = vpop.f32.mrf.mxu0
  %v612 = vadd.f32 %v100, %v611
  %v613 = vpop.f32.mrf.mxu0
  %614 = vmatprep.mubr.bf16.mxu0 0
  %615 = vmatmul.mubr.bf16.gmra.mxu0 %v260
  %v616 = vpop.f32.mrf.mxu0
  %v617 = vadd.f32 %v100, %v616
  %v618 = vpop.f32.mrf.mxu0
  %v619 = vpop.f32.mrf.mxu0
  %v620 = vadd.f32 %v100, %v619
  %v621 = vpop.f32.mrf.mxu0
  %622 = vmatprep.mubr.bf16.mxu0 0
  %623 = vmatmul.mubr.bf16.gmra.mxu0 %v261
  %v624 = vpop.f32.mrf.mxu0
  %v625 = vadd.f32 %v100, %v624
  %v626 = vpop.f32.mrf.mxu0
  %v627 = vpop.f32.mrf.mxu0
  %v628 = vadd.f32 %v100, %v627
  %v629 = vpop.f32.mrf.mxu0
  %630 = vdwg.mxu0
  %v631 = vmax.f32 %v377, 0.0
  %v632 = vmax.f32 %v380, 0.0
  %v633 = vmax.f32 %v385, 0.0
  %v634 = vmax.f32 %v388, 0.0
  %v635 = vmax.f32 %v393, 0.0
  %v636 = vmax.f32 %v396, 0.0
  %v637 = vmax.f32 %v401, 0.0
  %v638 = vmax.f32 %v404, 0.0
  %v639 = vmax.f32 %v409, 0.0
  %v640 = vmax.f32 %v412, 0.0
  %v641 = vmax.f32 %v417, 0.0
  %v642 = vmax.f32 %v420, 0.0
  %v643 = vmax.f32 %v425, 0.0
  %v644 = vmax.f32 %v428, 0.0
  %v645 = vmax.f32 %v433, 0.0
  %v646 = vmax.f32 %v436, 0.0
  %v647 = vmax.f32 %v441, 0.0
  %v648 = vmax.f32 %v444, 0.0
  %v649 = vmax.f32 %v449, 0.0
  %v650 = vmax.f32 %v452, 0.0
  %v651 = vmax.f32 %v457, 0.0
  %v652 = vmax.f32 %v460, 0.0
  %v653 = vmax.f32 %v465, 0.0
  %v654 = vmax.f32 %v468, 0.0
  %v655 = vmax.f32 %v473, 0.0
  %v656 = vmax.f32 %v476, 0.0
  %v657 = vmax.f32 %v481, 0.0
  %v658 = vmax.f32 %v484, 0.0
  %v659 = vmax.f32 %v489, 0.0
  %v660 = vmax.f32 %v492, 0.0
  %v661 = vmax.f32 %v497, 0.0
  %v662 = vmax.f32 %v500, 0.0
  %v663 = vmax.f32 %v505, 0.0
  %v664 = vmax.f32 %v508, 0.0
  %v665 = vmax.f32 %v513, 0.0
  %v666 = vmax.f32 %v516, 0.0
  %v667 = vmax.f32 %v521, 0.0
  %v668 = vmax.f32 %v524, 0.0
  %v669 = vmax.f32 %v529, 0.0
  %v670 = vmax.f32 %v532, 0.0
  %v671 = vmax.f32 %v537, 0.0
  %v672 = vmax.f32 %v540, 0.0
  %v673 = vmax.f32 %v545, 0.0
  %v674 = vmax.f32 %v548, 0.0
  %v675 = vmax.f32 %v553, 0.0
  %v676 = vmax.f32 %v556, 0.0
  %v677 = vmax.f32 %v561, 0.0
  %v678 = vmax.f32 %v564, 0.0
  %v679 = vmax.f32 %v569, 0.0
  %v680 = vmax.f32 %v572, 0.0
  %v681 = vmax.f32 %v577, 0.0
  %v682 = vmax.f32 %v580, 0.0
  %v683 = vmax.f32 %v585, 0.0
  %v684 = vmax.f32 %v588, 0.0
  %v685 = vmax.f32 %v593, 0.0
  %v686 = vmax.f32 %v596, 0.0
  %v687 = vmax.f32 %v601, 0.0
  %v688 = vmax.f32 %v604, 0.0
  %v689 = vmax.f32 %v609, 0.0
  %v690 = vmax.f32 %v612, 0.0
  %v691 = vmax.f32 %v617, 0.0
  %v692 = vmax.f32 %v620, 0.0
  %v693 = vmax.f32 %v625, 0.0
  %v694 = vmax.f32 %v628, 0.0
  %v695 = vpack.c.bf16 %v632, %v631
  %v696 = vpack.c.bf16 %v634, %v633
  %v697 = vpack.c.bf16 %v636, %v635
  %v698 = vpack.c.bf16 %v638, %v637
  %v699 = vpack.c.bf16 %v640, %v639
  %v700 = vpack.c.bf16 %v642, %v641
  %v701 = vpack.c.bf16 %v644, %v643
  %v702 = vpack.c.bf16 %v646, %v645
  %v703 = vpack.c.bf16 %v648, %v647
  %v704 = vpack.c.bf16 %v650, %v649
  %v705 = vpack.c.bf16 %v652, %v651
  %v706 = vpack.c.bf16 %v654, %v653
  %v707 = vpack.c.bf16 %v656, %v655
  %v708 = vpack.c.bf16 %v658, %v657
  %v709 = vpack.c.bf16 %v660, %v659
  %v710 = vpack.c.bf16 %v662, %v661
  %v711 = vpack.c.bf16 %v664, %v663
  %v712 = vpack.c.bf16 %v666, %v665
  %v713 = vpack.c.bf16 %v668, %v667
  %v714 = vpack.c.bf16 %v670, %v669
  %v715 = vpack.c.bf16 %v672, %v671
  %v716 = vpack.c.bf16 %v674, %v673
  %v717 = vpack.c.bf16 %v676, %v675
  %v718 = vpack.c.bf16 %v678, %v677
  %v719 = vpack.c.bf16 %v680, %v679
  %v720 = vpack.c.bf16 %v682, %v681
  %v721 = vpack.c.bf16 %v684, %v683
  %v722 = vpack.c.bf16 %v686, %v685
  %v723 = vpack.c.bf16 %v688, %v687
  %v724 = vpack.c.bf16 %v690, %v689
  %v725 = vpack.c.bf16 %v692, %v691
  %v726 = vpack.c.bf16 %v694, %v693
  %v759 = vunpack.c.l.b16 %v695
  %v760 = vunpack.c.h.b16 %v695
  %v761 = vunpack.c.l.b16 %v696
  %v762 = vunpack.c.h.b16 %v696
  %v763 = vunpack.c.l.b16 %v697
  %v764 = vunpack.c.h.b16 %v697
  %v765 = vunpack.c.l.b16 %v698
  %v766 = vunpack.c.h.b16 %v698
  %v767 = vunpack.c.l.b16 %v699
  %v768 = vunpack.c.h.b16 %v699
  %v769 = vunpack.c.l.b16 %v700
  %v770 = vunpack.c.h.b16 %v700
  %v771 = vunpack.c.l.b16 %v701
  %v772 = vunpack.c.h.b16 %v701
  %v773 = vunpack.c.l.b16 %v702
  %v774 = vunpack.c.h.b16 %v702
  %v775 = vunpack.c.l.b16 %v703
  %v776 = vunpack.c.h.b16 %v703
  %v777 = vunpack.c.l.b16 %v704
  %v778 = vunpack.c.h.b16 %v704
  %v779 = vunpack.c.l.b16 %v705
  %v780 = vunpack.c.h.b16 %v705
  %v781 = vunpack.c.l.b16 %v706
  %v782 = vunpack.c.h.b16 %v706
  %v783 = vunpack.c.l.b16 %v707
  %v784 = vunpack.c.h.b16 %v707
  %v785 = vunpack.c.l.b16 %v708
  %v786 = vunpack.c.h.b16 %v708
  %v787 = vunpack.c.l.b16 %v709
  %v788 = vunpack.c.h.b16 %v709
  %v789 = vunpack.c.l.b16 %v710
  %v790 = vunpack.c.h.b16 %v710
  %v791 = vunpack.c.l.b16 %v711
  %v792 = vunpack.c.h.b16 %v711
  %v793 = vunpack.c.l.b16 %v712
  %v794 = vunpack.c.h.b16 %v712
  %v795 = vunpack.c.l.b16 %v713
  %v796 = vunpack.c.h.b16 %v713
  %v797 = vunpack.c.l.b16 %v714
  %v798 = vunpack.c.h.b16 %v714
  %v799 = vunpack.c.l.b16 %v715
  %v800 = vunpack.c.h.b16 %v715
  %v801 = vunpack.c.l.b16 %v716
  %v802 = vunpack.c.h.b16 %v716
  %v803 = vunpack.c.l.b16 %v717
  %v804 = vunpack.c.h.b16 %v717
  %v805 = vunpack.c.l.b16 %v718
  %v806 = vunpack.c.h.b16 %v718
  %v807 = vunpack.c.l.b16 %v719
  %v808 = vunpack.c.h.b16 %v719
  %v809 = vunpack.c.l.b16 %v720
  %v810 = vunpack.c.h.b16 %v720
  %v811 = vunpack.c.l.b16 %v721
  %v812 = vunpack.c.h.b16 %v721
  %v813 = vunpack.c.l.b16 %v722
  %v814 = vunpack.c.h.b16 %v722
  %v815 = vunpack.c.l.b16 %v723
  %v816 = vunpack.c.h.b16 %v723
  %v817 = vunpack.c.l.b16 %v724
  %v818 = vunpack.c.h.b16 %v724
  %v819 = vunpack.c.l.b16 %v725
  %v820 = vunpack.c.h.b16 %v725
  %v821 = vunpack.c.l.b16 %v726
  %v822 = vunpack.c.h.b16 %v726
  %v823 = vpack.c.b16 %v759, %v759
  %v824 = vpack.c.b16 %v760, %v760
  %v825 = vpack.c.b16 %v761, %v761
  %v826 = vpack.c.b16 %v762, %v762
  %v827 = vpack.c.b16 %v763, %v763
  %v828 = vpack.c.b16 %v764, %v764
  %v829 = vpack.c.b16 %v765, %v765
  %v830 = vpack.c.b16 %v766, %v766
  %v831 = vpack.c.b16 %v767, %v767
  %v832 = vpack.c.b16 %v768, %v768
  %v833 = vpack.c.b16 %v769, %v769
  %v834 = vpack.c.b16 %v770, %v770
  %v835 = vpack.c.b16 %v771, %v771
  %v836 = vpack.c.b16 %v772, %v772
  %v837 = vpack.c.b16 %v773, %v773
  %v838 = vpack.c.b16 %v774, %v774
  %v839 = vpack.c.b16 %v775, %v775
  %v840 = vpack.c.b16 %v776, %v776
  %v841 = vpack.c.b16 %v777, %v777
  %v842 = vpack.c.b16 %v778, %v778
  %v843 = vpack.c.b16 %v779, %v779
  %v844 = vpack.c.b16 %v780, %v780
  %v845 = vpack.c.b16 %v781, %v781
  %v846 = vpack.c.b16 %v782, %v782
  %v847 = vpack.c.b16 %v783, %v783
  %v848 = vpack.c.b16 %v784, %v784
  %v849 = vpack.c.b16 %v785, %v785
  %v850 = vpack.c.b16 %v786, %v786
  %v851 = vpack.c.b16 %v787, %v787
  %v852 = vpack.c.b16 %v788, %v788
  %v853 = vpack.c.b16 %v789, %v789
  %v854 = vpack.c.b16 %v790, %v790
  %v855 = vpack.c.b16 %v791, %v791
  %v856 = vpack.c.b16 %v792, %v792
  %v857 = vpack.c.b16 %v793, %v793
  %v858 = vpack.c.b16 %v794, %v794
  %v859 = vpack.c.b16 %v795, %v795
  %v860 = vpack.c.b16 %v796, %v796
  %v861 = vpack.c.b16 %v797, %v797
  %v862 = vpack.c.b16 %v798, %v798
  %v863 = vpack.c.b16 %v799, %v799
  %v864 = vpack.c.b16 %v800, %v800
  %v865 = vpack.c.b16 %v801, %v801
  %v866 = vpack.c.b16 %v802, %v802
  %v867 = vpack.c.b16 %v803, %v803
  %v868 = vpack.c.b16 %v804, %v804
  %v869 = vpack.c.b16 %v805, %v805
  %v870 = vpack.c.b16 %v806, %v806
  %v871 = vpack.c.b16 %v807, %v807
  %v872 = vpack.c.b16 %v808, %v808
  %v873 = vpack.c.b16 %v809, %v809
  %v874 = vpack.c.b16 %v810, %v810
  %v875 = vpack.c.b16 %v811, %v811
  %v876 = vpack.c.b16 %v812, %v812
  %v877 = vpack.c.b16 %v813, %v813
  %v878 = vpack.c.b16 %v814, %v814
  %v879 = vpack.c.b16 %v815, %v815
  %v880 = vpack.c.b16 %v816, %v816
  %v881 = vpack.c.b16 %v817, %v817
  %v882 = vpack.c.b16 %v818, %v818
  %v883 = vpack.c.b16 %v819, %v819
  %v884 = vpack.c.b16 %v820, %v820
  %v885 = vpack.c.b16 %v821, %v821
  %v886 = vpack.c.b16 %v822, %v822
  %951 = vst [vmem:[%s3] sm:$0xf] %v823
  %952 = vst [vmem:[%s3 + $0x4] sm:$0xf] %v824
  %953 = vst [vmem:[%s3 + $0x8] sm:$0xf] %v825
  %954 = vst [vmem:[%s3 + $0xc] sm:$0xf] %v826
  %955 = vst [vmem:[%s3 + $0x10] sm:$0xf] %v827
  %956 = vst [vmem:[%s3 + $0x14] sm:$0xf] %v828
  %957 = vst [vmem:[%s3 + $0x18] sm:$0xf] %v829
  %958 = vst [vmem:[%s3 + $0x1c] sm:$0xf] %v830
  %959 = vst [vmem:[%s3 + $0x20] sm:$0xf] %v831
  %960 = vst [vmem:[%s3 + $0x24] sm:$0xf] %v832
  %961 = vst [vmem:[%s3 + $0x28] sm:$0xf] %v833
  %962 = vst [vmem:[%s3 + $0x2c] sm:$0xf] %v834
  %963 = vst [vmem:[%s3 + $0x30] sm:$0xf] %v835
  %964 = vst [vmem:[%s3 + $0x34] sm:$0xf] %v836
  %965 = vst [vmem:[%s3 + $0x38] sm:$0xf] %v837
  %966 = vst [vmem:[%s3 + $0x3c] sm:$0xf] %v838
  %967 = vst [vmem:[%s3 + $0x40] sm:$0xf] %v839
  %968 = vst [vmem:[%s3 + $0x44] sm:$0xf] %v840
  %969 = vst [vmem:[%s3 + $0x48] sm:$0xf] %v841
  %970 = vst [vmem:[%s3 + $0x4c] sm:$0xf] %v842
  %971 = vst [vmem:[%s3 + $0x50] sm:$0xf] %v843
  %972 = vst [vmem:[%s3 + $0x54] sm:$0xf] %v844
  %973 = vst [vmem:[%s3 + $0x58] sm:$0xf] %v845
  %974 = vst [vmem:[%s3 + $0x5c] sm:$0xf] %v846
  %975 = vst [vmem:[%s3 + $0x60] sm:$0xf] %v847
  %976 = vst [vmem:[%s3 + $0x64] sm:$0xf] %v848
  %977 = vst [vmem:[%s3 + $0x68] sm:$0xf] %v849
  %978 = vst [vmem:[%s3 + $0x6c] sm:$0xf] %v850
  %979 = vst [vmem:[%s3 + $0x70] sm:$0xf] %v851
  %980 = vst [vmem:[%s3 + $0x74] sm:$0xf] %v852
  %981 = vst [vmem:[%s3 + $0x78] sm:$0xf] %v853
  %982 = vst [vmem:[%s3 + $0x7c] sm:$0xf] %v854
  %983 = vst [vmem:[%s3 + $0x80] sm:$0xf] %v855
  %984 = vst [vmem:[%s3 + $0x84] sm:$0xf] %v856
  %985 = vst [vmem:[%s3 + $0x88] sm:$0xf] %v857
  %986 = vst [vmem:[%s3 + $0x8c] sm:$0xf] %v858
  %987 = vst [vmem:[%s3 + $0x90] sm:$0xf] %v859
  %988 = vst [vmem:[%s3 + $0x94] sm:$0xf] %v860
  %989 = vst [vmem:[%s3 + $0x98] sm:$0xf] %v861
  %990 = vst [vmem:[%s3 + $0x9c] sm:$0xf] %v862
  %991 = vst [vmem:[%s3 + $0xa0] sm:$0xf] %v863
  %992 = vst [vmem:[%s3 + $0xa4] sm:$0xf] %v864
  %993 = vst [vmem:[%s3 + $0xa8] sm:$0xf] %v865
  %994 = vst [vmem:[%s3 + $0xac] sm:$0xf] %v866
  %995 = vst [vmem:[%s3 + $0xb0] sm:$0xf] %v867
  %996 = vst [vmem:[%s3 + $0xb4] sm:$0xf] %v868
  %997 = vst [vmem:[%s3 + $0xb8] sm:$0xf] %v869
  %998 = vst [vmem:[%s3 + $0xbc] sm:$0xf] %v870
  %999 = vst [vmem:[%s3 + $0xc0] sm:$0xf] %v871
  %1000 = vst [vmem:[%s3 + $0xc4] sm:$0xf] %v872
  %1001 = vst [vmem:[%s3 + $0xc8] sm:$0xf] %v873
  %1002 = vst [vmem:[%s3 + $0xcc] sm:$0xf] %v874
  %1003 = vst [vmem:[%s3 + $0xd0] sm:$0xf] %v875
  %1004 = vst [vmem:[%s3 + $0xd4] sm:$0xf] %v876
  %1005 = vst [vmem:[%s3 + $0xd8] sm:$0xf] %v877
  %1006 = vst [vmem:[%s3 + $0xdc] sm:$0xf] %v878
  %1007 = vst [vmem:[%s3 + $0xe0] sm:$0xf] %v879
  %1008 = vst [vmem:[%s3 + $0xe4] sm:$0xf] %v880
  %1009 = vst [vmem:[%s3 + $0xe8] sm:$0xf] %v881
  %1010 = vst [vmem:[%s3 + $0xec] sm:$0xf] %v882
  %1011 = vst [vmem:[%s3 + $0xf0] sm:$0xf] %v883
  %1012 = vst [vmem:[%s3 + $0xf4] sm:$0xf] %v884
  %1013 = vst [vmem:[%s3 + $0xf8] sm:$0xf] %v885
  %1014 = vst [vmem:[%s3 + $0xfc] sm:$0xf] %v886
  // Predicated region
  $region14: #{conv2d_to_latent_forward.6} parent=0 // pred_check
    _
  $region15: #{conv2d_to_latent_forward.6} parent=0 // pred_check_branch
    %1016 = sbr.rel (0) target = $region17
  $region16: #{conv2d_to_latent_forward.6} parent=0 // pred_region
    _
  $region17: #{conv2d_to_latent_forward.6} parent=0 // pred_fallthru
    _
  // Predicated region
  $region18: #{conv2d_to_latent_forward.6} parent=0 // pred_check
    _
  $region19: #{conv2d_to_latent_forward.6} parent=0 // pred_check_branch
    %1018 = sbr.rel (0) target = $region21
  $region20: #{conv2d_to_latent_forward.6} parent=0 // pred_region
    _
  $region21: #{conv2d_to_latent_forward.6} parent=0 // pred_fallthru
    _

// kernel: conv2d_to_latent_forward.7
$region0: #{conv2d_to_latent_forward.7}
  #allocation0 [shape = 'u32[]', space=smem, size = 0x4, offset = 0x4, fixed_abs, tag = 'smem constant byte address 0x4 - core index']
  #allocation1 [shape = 'u32[144,128]{1,0:T(1,128)}', space=vmem, size = 0x12000, scoped, tag = 'internal scratch']
  %s0 = inlined_call_operand.vmem [shape: bf16[128,512], index: 0, kind: input, shape index: {}]
  %s1 = inlined_call_operand.vmem [shape: bf16[512,128], index: 1, kind: input, shape index: {}]
  %s2 = inlined_call_operand.vmem [shape: f32[1,128], index: 2, kind: input, shape index: {}]
  %s3 = inlined_call_operand.vmem [shape: bf16[128,128], index: 3, kind: output, shape index: {}]
  %s4 = sld [smem:[#allocation0]]
  $region22: #{conv2d_to_latent_forward.7} parent=0
    _
  %s6 = ssub.s32 1, %s4
  %s7 = scalar_select 0, %s6, %s4
  // Predicated region
  $region2: #{conv2d_to_latent_forward.7} parent=0 // pred_check
    _
  $region3: #{conv2d_to_latent_forward.7} parent=0 // pred_check_branch
    %9 = sbr.rel (0) target = $region5
  $region4: #{conv2d_to_latent_forward.7} parent=0 // pred_region
    _
  $region5: #{conv2d_to_latent_forward.7} parent=0 // pred_fallthru
    _
  // Predicated region
  $region6: #{conv2d_to_latent_forward.7} parent=0 // pred_check
    _
  $region7: #{conv2d_to_latent_forward.7} parent=0 // pred_check_branch
    %11 = sbr.rel (0) target = $region9
  $region8: #{conv2d_to_latent_forward.7} parent=0 // pred_region
    _
  $region9: #{conv2d_to_latent_forward.7} parent=0 // pred_fallthru
    _
  // Predicated region
  $region10: #{conv2d_to_latent_forward.7} parent=0 // pred_check
    _
  $region11: #{conv2d_to_latent_forward.7} parent=0 // pred_check_branch
    %13 = sbr.rel (0) target = $region13
  $region12: #{conv2d_to_latent_forward.7} parent=0 // pred_region
    _
  $region13: #{conv2d_to_latent_forward.7} parent=0 // pred_fallthru
    _
  %v15 = vld [vmem:[%s0] sm:$0xff]
  %v16 = vld [vmem:[%s0 + $0x8] sm:$0xff]
  %v17 = vld [vmem:[%s0 + $0x10] sm:$0xff]
  %v18 = vld [vmem:[%s0 + $0x18] sm:$0xff]
  %v19 = vld [vmem:[%s0 + $0x20] sm:$0xff]
  %v20 = vld [vmem:[%s0 + $0x28] sm:$0xff]
  %v21 = vld [vmem:[%s0 + $0x30] sm:$0xff]
  %v22 = vld [vmem:[%s0 + $0x38] sm:$0xff]
  %v23 = vld [vmem:[%s0 + $0x40] sm:$0xff]
  %v24 = vld [vmem:[%s0 + $0x48] sm:$0xff]
  %v25 = vld [vmem:[%s0 + $0x50] sm:$0xff]
  %v26 = vld [vmem:[%s0 + $0x58] sm:$0xff]
  %v27 = vld [vmem:[%s0 + $0x60] sm:$0xff]
  %v28 = vld [vmem:[%s0 + $0x68] sm:$0xff]
  %v29 = vld [vmem:[%s0 + $0x70] sm:$0xff]
  %v30 = vld [vmem:[%s0 + $0x78] sm:$0xff]
  %v31 = vld [vmem:[%s0 + $0x80] sm:$0xff]
  %v32 = vld [vmem:[%s0 + $0x88] sm:$0xff]
  %v33 = vld [vmem:[%s0 + $0x90] sm:$0xff]
  %v34 = vld [vmem:[%s0 + $0x98] sm:$0xff]
  %v35 = vld [vmem:[%s0 + $0xa0] sm:$0xff]
  %v36 = vld [vmem:[%s0 + $0xa8] sm:$0xff]
  %v37 = vld [vmem:[%s0 + $0xb0] sm:$0xff]
  %v38 = vld [vmem:[%s0 + $0xb8] sm:$0xff]
  %v39 = vld [vmem:[%s0 + $0xc0] sm:$0xff]
  %v40 = vld [vmem:[%s0 + $0xc8] sm:$0xff]
  %v41 = vld [vmem:[%s0 + $0xd0] sm:$0xff]
  %v42 = vld [vmem:[%s0 + $0xd8] sm:$0xff]
  %v43 = vld [vmem:[%s0 + $0xe0] sm:$0xff]
  %v44 = vld [vmem:[%s0 + $0xe8] sm:$0xff]
  %v45 = vld [vmem:[%s0 + $0xf0] sm:$0xff]
  %v46 = vld [vmem:[%s0 + $0xf8] sm:$0xff]
  %v47 = vld [vmem:[%s1] sm:$0xf]
  %v48 = vld [vmem:[%s1 + $0x4] sm:$0xf]
  %v49 = vld [vmem:[%s1 + $0x8] sm:$0xf]
  %v50 = vld [vmem:[%s1 + $0xc] sm:$0xf]
  %v51 = vld [vmem:[%s1 + $0x10] sm:$0xf]
  %v52 = vld [vmem:[%s1 + $0x14] sm:$0xf]
  %v53 = vld [vmem:[%s1 + $0x18] sm:$0xf]
  %v54 = vld [vmem:[%s1 + $0x1c] sm:$0xf]
  %v55 = vld [vmem:[%s1 + $0x20] sm:$0xf]
  %v56 = vld [vmem:[%s1 + $0x24] sm:$0xf]
  %v57 = vld [vmem:[%s1 + $0x28] sm:$0xf]
  %v58 = vld [vmem:[%s1 + $0x2c] sm:$0xf]
  %v59 = vld [vmem:[%s1 + $0x30] sm:$0xf]
  %v60 = vld [vmem:[%s1 + $0x34] sm:$0xf]
  %v61 = vld [vmem:[%s1 + $0x38] sm:$0xf]
  %v62 = vld [vmem:[%s1 + $0x3c] sm:$0xf]
  %v63 = vld [vmem:[%s1 + $0x40] sm:$0xf]
  %v64 = vld [vmem:[%s1 + $0x44] sm:$0xf]
  %v65 = vld [vmem:[%s1 + $0x48] sm:$0xf]
  %v66 = vld [vmem:[%s1 + $0x4c] sm:$0xf]
  %v67 = vld [vmem:[%s1 + $0x50] sm:$0xf]
  %v68 = vld [vmem:[%s1 + $0x54] sm:$0xf]
  %v69 = vld [vmem:[%s1 + $0x58] sm:$0xf]
  %v70 = vld [vmem:[%s1 + $0x5c] sm:$0xf]
  %v71 = vld [vmem:[%s1 + $0x60] sm:$0xf]
  %v72 = vld [vmem:[%s1 + $0x64] sm:$0xf]
  %v73 = vld [vmem:[%s1 + $0x68] sm:$0xf]
  %v74 = vld [vmem:[%s1 + $0x6c] sm:$0xf]
  %v75 = vld [vmem:[%s1 + $0x70] sm:$0xf]
  %v76 = vld [vmem:[%s1 + $0x74] sm:$0xf]
  %v77 = vld [vmem:[%s1 + $0x78] sm:$0xf]
  %v78 = vld [vmem:[%s1 + $0x7c] sm:$0xf]
  %v79 = vld [vmem:[%s1 + $0x80] sm:$0xf]
  %v80 = vld [vmem:[%s1 + $0x84] sm:$0xf]
  %v81 = vld [vmem:[%s1 + $0x88] sm:$0xf]
  %v82 = vld [vmem:[%s1 + $0x8c] sm:$0xf]
  %v83 = vld [vmem:[%s1 + $0x90] sm:$0xf]
  %v84 = vld [vmem:[%s1 + $0x94] sm:$0xf]
  %v85 = vld [vmem:[%s1 + $0x98] sm:$0xf]
  %v86 = vld [vmem:[%s1 + $0x9c] sm:$0xf]
  %v87 = vld [vmem:[%s1 + $0xa0] sm:$0xf]
  %v88 = vld [vmem:[%s1 + $0xa4] sm:$0xf]
  %v89 = vld [vmem:[%s1 + $0xa8] sm:$0xf]
  %v90 = vld [vmem:[%s1 + $0xac] sm:$0xf]
  %v91 = vld [vmem:[%s1 + $0xb0] sm:$0xf]
  %v92 = vld [vmem:[%s1 + $0xb4] sm:$0xf]
  %v93 = vld [vmem:[%s1 + $0xb8] sm:$0xf]
  %v94 = vld [vmem:[%s1 + $0xbc] sm:$0xf]
  %v95 = vld [vmem:[%s1 + $0xc0] sm:$0xf]
  %v96 = vld [vmem:[%s1 + $0xc4] sm:$0xf]
  %v97 = vld [vmem:[%s1 + $0xc8] sm:$0xf]
  %v98 = vld [vmem:[%s1 + $0xcc] sm:$0xf]
  %v99 = vld [vmem:[%s1 + $0xd0] sm:$0xf]
  %v100 = vld [vmem:[%s1 + $0xd4] sm:$0xf]
  %v101 = vld [vmem:[%s1 + $0xd8] sm:$0xf]
  %v102 = vld [vmem:[%s1 + $0xdc] sm:$0xf]
  %v103 = vld [vmem:[%s1 + $0xe0] sm:$0xf]
  %v104 = vld [vmem:[%s1 + $0xe4] sm:$0xf]
  %v105 = vld [vmem:[%s1 + $0xe8] sm:$0xf]
  %v106 = vld [vmem:[%s1 + $0xec] sm:$0xf]
  %v107 = vld [vmem:[%s1 + $0xf0] sm:$0xf]
  %v108 = vld [vmem:[%s1 + $0xf4] sm:$0xf]
  %v109 = vld [vmem:[%s1 + $0xf8] sm:$0xf]
  %v110 = vld [vmem:[%s1 + $0xfc] sm:$0xf]
  %v111 = vld [vmem:[%s2] sm:$0x1]
  %v113 = vlaneseq
  %v114 = vshrl.u32 %v113, 7
  %v115 = vsub.s32 0, %v114
  %v116 = vrot.slane %v111, %v115
  %v150 = vunpack.c.l.b16 %v15
  %v151 = vunpack.c.h.b16 %v15
  %v152 = vunpack.c.l.b16 %v16
  %v153 = vunpack.c.h.b16 %v16
  %v154 = vunpack.c.l.b16 %v17
  %v155 = vunpack.c.h.b16 %v17
  %v156 = vunpack.c.l.b16 %v18
  %v157 = vunpack.c.h.b16 %v18
  %v158 = vunpack.c.l.b16 %v19
  %v159 = vunpack.c.h.b16 %v19
  %v160 = vunpack.c.l.b16 %v20
  %v161 = vunpack.c.h.b16 %v20
  %v162 = vunpack.c.l.b16 %v21
  %v163 = vunpack.c.h.b16 %v21
  %v164 = vunpack.c.l.b16 %v22
  %v165 = vunpack.c.h.b16 %v22
  %v166 = vunpack.c.l.b16 %v23
  %v167 = vunpack.c.h.b16 %v23
  %v168 = vunpack.c.l.b16 %v24
  %v169 = vunpack.c.h.b16 %v24
  %v170 = vunpack.c.l.b16 %v25
  %v171 = vunpack.c.h.b16 %v25
  %v172 = vunpack.c.l.b16 %v26
  %v173 = vunpack.c.h.b16 %v26
  %v174 = vunpack.c.l.b16 %v27
  %v175 = vunpack.c.h.b16 %v27
  %v176 = vunpack.c.l.b16 %v28
  %v177 = vunpack.c.h.b16 %v28
  %v178 = vunpack.c.l.b16 %v29
  %v179 = vunpack.c.h.b16 %v29
  %v180 = vunpack.c.l.b16 %v30
  %v181 = vunpack.c.h.b16 %v30
  %v182 = vunpack.c.l.b16 %v31
  %v183 = vunpack.c.h.b16 %v31
  %v184 = vunpack.c.l.b16 %v32
  %v185 = vunpack.c.h.b16 %v32
  %v186 = vunpack.c.l.b16 %v33
  %v187 = vunpack.c.h.b16 %v33
  %v188 = vunpack.c.l.b16 %v34
  %v189 = vunpack.c.h.b16 %v34
  %v190 = vunpack.c.l.b16 %v35
  %v191 = vunpack.c.h.b16 %v35
  %v192 = vunpack.c.l.b16 %v36
  %v193 = vunpack.c.h.b16 %v36
  %v194 = vunpack.c.l.b16 %v37
  %v195 = vunpack.c.h.b16 %v37
  %v196 = vunpack.c.l.b16 %v38
  %v197 = vunpack.c.h.b16 %v38
  %v198 = vunpack.c.l.b16 %v39
  %v199 = vunpack.c.h.b16 %v39
  %v200 = vunpack.c.l.b16 %v40
  %v201 = vunpack.c.h.b16 %v40
  %v202 = vunpack.c.l.b16 %v41
  %v203 = vunpack.c.h.b16 %v41
  %v204 = vunpack.c.l.b16 %v42
  %v205 = vunpack.c.h.b16 %v42
  %v206 = vunpack.c.l.b16 %v43
  %v207 = vunpack.c.h.b16 %v43
  %v208 = vunpack.c.l.b16 %v44
  %v209 = vunpack.c.h.b16 %v44
  %v210 = vunpack.c.l.b16 %v45
  %v211 = vunpack.c.h.b16 %v45
  %v212 = vunpack.c.l.b16 %v46
  %v213 = vunpack.c.h.b16 %v46
  %v214 = vpack.c.b16 %v154, %v150
  %v215 = vpack.c.b16 %v155, %v151
  %v216 = vpack.c.b16 %v156, %v152
  %v217 = vpack.c.b16 %v157, %v153
  %v218 = vpack.c.b16 %v162, %v158
  %v219 = vpack.c.b16 %v163, %v159
  %v220 = vpack.c.b16 %v164, %v160
  %v221 = vpack.c.b16 %v165, %v161
  %v222 = vpack.c.b16 %v170, %v166
  %v223 = vpack.c.b16 %v171, %v167
  %v224 = vpack.c.b16 %v172, %v168
  %v225 = vpack.c.b16 %v173, %v169
  %v226 = vpack.c.b16 %v178, %v174
  %v227 = vpack.c.b16 %v179, %v175
  %v228 = vpack.c.b16 %v180, %v176
  %v229 = vpack.c.b16 %v181, %v177
  %v230 = vpack.c.b16 %v186, %v182
  %v231 = vpack.c.b16 %v187, %v183
  %v232 = vpack.c.b16 %v188, %v184
  %v233 = vpack.c.b16 %v189, %v185
  %v234 = vpack.c.b16 %v194, %v190
  %v235 = vpack.c.b16 %v195, %v191
  %v236 = vpack.c.b16 %v196, %v192
  %v237 = vpack.c.b16 %v197, %v193
  %v238 = vpack.c.b16 %v202, %v198
  %v239 = vpack.c.b16 %v203, %v199
  %v240 = vpack.c.b16 %v204, %v200
  %v241 = vpack.c.b16 %v205, %v201
  %v242 = vpack.c.b16 %v210, %v206
  %v243 = vpack.c.b16 %v211, %v207
  %v244 = vpack.c.b16 %v212, %v208
  %v245 = vpack.c.b16 %v213, %v209
  %v342 = vunpack.c.l.b16 %v47
  %v343 = vunpack.c.l.b16 %v48
  %v344 = vunpack.c.l.b16 %v49
  %v345 = vunpack.c.l.b16 %v50
  %v346 = vunpack.c.l.b16 %v51
  %v347 = vunpack.c.l.b16 %v52
  %v348 = vunpack.c.l.b16 %v53
  %v349 = vunpack.c.l.b16 %v54
  %v350 = vunpack.c.l.b16 %v55
  %v351 = vunpack.c.l.b16 %v56
  %v352 = vunpack.c.l.b16 %v57
  %v353 = vunpack.c.l.b16 %v58
  %v354 = vunpack.c.l.b16 %v59
  %v355 = vunpack.c.l.b16 %v60
  %v356 = vunpack.c.l.b16 %v61
  %v357 = vunpack.c.l.b16 %v62
  %v358 = vunpack.c.l.b16 %v63
  %v359 = vunpack.c.l.b16 %v64
  %v360 = vunpack.c.l.b16 %v65
  %v361 = vunpack.c.l.b16 %v66
  %v362 = vunpack.c.l.b16 %v67
  %v363 = vunpack.c.l.b16 %v68
  %v364 = vunpack.c.l.b16 %v69
  %v365 = vunpack.c.l.b16 %v70
  %v366 = vunpack.c.l.b16 %v71
  %v367 = vunpack.c.l.b16 %v72
  %v368 = vunpack.c.l.b16 %v73
  %v369 = vunpack.c.l.b16 %v74
  %v370 = vunpack.c.l.b16 %v75
  %v371 = vunpack.c.l.b16 %v76
  %v372 = vunpack.c.l.b16 %v77
  %v373 = vunpack.c.l.b16 %v78
  %v374 = vunpack.c.l.b16 %v79
  %v375 = vunpack.c.l.b16 %v80
  %v376 = vunpack.c.l.b16 %v81
  %v377 = vunpack.c.l.b16 %v82
  %v378 = vunpack.c.l.b16 %v83
  %v379 = vunpack.c.l.b16 %v84
  %v380 = vunpack.c.l.b16 %v85
  %v381 = vunpack.c.l.b16 %v86
  %v382 = vunpack.c.l.b16 %v87
  %v383 = vunpack.c.l.b16 %v88
  %v384 = vunpack.c.l.b16 %v89
  %v385 = vunpack.c.l.b16 %v90
  %v386 = vunpack.c.l.b16 %v91
  %v387 = vunpack.c.l.b16 %v92
  %v388 = vunpack.c.l.b16 %v93
  %v389 = vunpack.c.l.b16 %v94
  %v390 = vunpack.c.l.b16 %v95
  %v391 = vunpack.c.l.b16 %v96
  %v392 = vunpack.c.l.b16 %v97
  %v393 = vunpack.c.l.b16 %v98
  %v394 = vunpack.c.l.b16 %v99
  %v395 = vunpack.c.l.b16 %v100
  %v396 = vunpack.c.l.b16 %v101
  %v397 = vunpack.c.l.b16 %v102
  %v398 = vunpack.c.l.b16 %v103
  %v399 = vunpack.c.l.b16 %v104
  %v400 = vunpack.c.l.b16 %v105
  %v401 = vunpack.c.l.b16 %v106
  %v402 = vunpack.c.l.b16 %v107
  %v403 = vunpack.c.l.b16 %v108
  %v404 = vunpack.c.l.b16 %v109
  %v405 = vunpack.c.l.b16 %v110
  %v406 = vpack.c.b16 %v343, %v342
  %v407 = vpack.c.b16 %v345, %v344
  %v408 = vpack.c.b16 %v347, %v346
  %v409 = vpack.c.b16 %v349, %v348
  %v410 = vpack.c.b16 %v351, %v350
  %v411 = vpack.c.b16 %v353, %v352
  %v412 = vpack.c.b16 %v355, %v354
  %v413 = vpack.c.b16 %v357, %v356
  %v414 = vpack.c.b16 %v359, %v358
  %v415 = vpack.c.b16 %v361, %v360
  %v416 = vpack.c.b16 %v363, %v362
  %v417 = vpack.c.b16 %v365, %v364
  %v418 = vpack.c.b16 %v367, %v366
  %v419 = vpack.c.b16 %v369, %v368
  %v420 = vpack.c.b16 %v371, %v370
  %v421 = vpack.c.b16 %v373, %v372
  %v422 = vpack.c.b16 %v375, %v374
  %v423 = vpack.c.b16 %v377, %v376
  %v424 = vpack.c.b16 %v379, %v378
  %v425 = vpack.c.b16 %v381, %v380
  %v426 = vpack.c.b16 %v383, %v382
  %v427 = vpack.c.b16 %v385, %v384
  %v428 = vpack.c.b16 %v387, %v386
  %v429 = vpack.c.b16 %v389, %v388
  %v430 = vpack.c.b16 %v391, %v390
  %v431 = vpack.c.b16 %v393, %v392
  %v432 = vpack.c.b16 %v395, %v394
  %v433 = vpack.c.b16 %v397, %v396
  %v434 = vpack.c.b16 %v399, %v398
  %v435 = vpack.c.b16 %v401, %v400
  %v436 = vpack.c.b16 %v403, %v402
  %v437 = vpack.c.b16 %v405, %v404
  %470 = vmatprep.subr.bf16.mxu0 0
  %471 = vmatpush1.bf16.msra.mxu0 %v413
  %472 = vmatprep.subr.bf16.mxu0 0
  %473 = vmatpush1.bf16.msra.mxu0 %v412
  %474 = vmatprep.subr.bf16.mxu0 0
  %475 = vmatpush1.bf16.msra.mxu0 %v411
  %476 = vmatprep.subr.bf16.mxu0 0
  %477 = vmatpush1.bf16.msra.mxu0 %v410
  %478 = vmatprep.subr.bf16.mxu0 0
  %479 = vmatpush1.bf16.msra.mxu0 %v409
  %480 = vmatprep.subr.bf16.mxu0 0
  %481 = vmatpush1.bf16.msra.mxu0 %v408
  %482 = vmatprep.subr.bf16.mxu0 0
  %483 = vmatpush1.bf16.msra.mxu0 %v407
  %484 = vmatprep.subr.bf16.mxu0 0
  %485 = vmatpush1.bf16.msra.mxu0 %v406
  %486 = vmatprep.subr.bf16.mxu0 0
  %487 = vmatpush2.bf16.msra.mxu0 %v421
  %488 = vmatprep.subr.bf16.mxu0 0
  %489 = vmatpush2.bf16.msra.mxu0 %v420
  %490 = vmatprep.subr.bf16.mxu0 0
  %491 = vmatpush2.bf16.msra.mxu0 %v419
  %492 = vmatprep.subr.bf16.mxu0 0
  %493 = vmatpush2.bf16.msra.mxu0 %v418
  %494 = vmatprep.subr.bf16.mxu0 0
  %495 = vmatpush2.bf16.msra.mxu0 %v417
  %496 = vmatprep.subr.bf16.mxu0 0
  %497 = vmatpush2.bf16.msra.mxu0 %v416
  %498 = vmatprep.subr.bf16.mxu0 0
  %499 = vmatpush2.bf16.msra.mxu0 %v415
  %500 = vmatprep.subr.bf16.mxu0 0
  %501 = vmatpush2.bf16.msra.mxu0 %v414
  %502 = vmatprep.mubr.bf16.mxu0 %v215
  %503 = vmatmul.mubr.bf16.gmra.mxu0 %v214
  %v504 = vpop.f32.mrf.mxu0
  %v505 = vadd.f32 %v116, %v504
  %v506 = vpop.f32.mrf.mxu0
  %v507 = vpop.f32.mrf.mxu0
  %v508 = vadd.f32 %v116, %v507
  %v509 = vpop.f32.mrf.mxu0
  %510 = vmatprep.mubr.bf16.mxu0 %v219
  %511 = vmatmul.mubr.bf16.gmra.mxu0 %v218
  %v512 = vpop.f32.mrf.mxu0
  %v513 = vadd.f32 %v116, %v512
  %v514 = vpop.f32.mrf.mxu0
  %v515 = vpop.f32.mrf.mxu0
  %v516 = vadd.f32 %v116, %v515
  %v517 = vpop.f32.mrf.mxu0
  %518 = vmatprep.mubr.bf16.mxu0 %v223
  %519 = vmatmul.mubr.bf16.gmra.mxu0 %v222
  %v520 = vpop.f32.mrf.mxu0
  %v521 = vadd.f32 %v116, %v520
  %v522 = vpop.f32.mrf.mxu0
  %v523 = vpop.f32.mrf.mxu0
  %v524 = vadd.f32 %v116, %v523
  %v525 = vpop.f32.mrf.mxu0
  %526 = vmatprep.mubr.bf16.mxu0 %v227
  %527 = vmatmul.mubr.bf16.gmra.mxu0 %v226
  %v528 = vpop.f32.mrf.mxu0
  %v529 = vadd.f32 %v116, %v528
  %v530 = vpop.f32.mrf.mxu0
  %v531 = vpop.f32.mrf.mxu0
  %v532 = vadd.f32 %v116, %v531
  %v533 = vpop.f32.mrf.mxu0
  %534 = vmatprep.mubr.bf16.mxu0 %v231
  %535 = vmatmul.mubr.bf16.gmra.mxu0 %v230
  %v536 = vpop.f32.mrf.mxu0
  %v537 = vadd.f32 %v116, %v536
  %v538 = vpop.f32.mrf.mxu0
  %v539 = vpop.f32.mrf.mxu0
  %v540 = vadd.f32 %v116, %v539
  %v541 = vpop.f32.mrf.mxu0
  %542 = vmatprep.mubr.bf16.mxu0 %v235
  %543 = vmatmul.mubr.bf16.gmra.mxu0 %v234
  %v544 = vpop.f32.mrf.mxu0
  %v545 = vadd.f32 %v116, %v544
  %v546 = vpop.f32.mrf.mxu0
  %v547 = vpop.f32.mrf.mxu0
  %v548 = vadd.f32 %v116, %v547
  %v549 = vpop.f32.mrf.mxu0
  %550 = vmatprep.mubr.bf16.mxu0 %v239
  %551 = vmatmul.mubr.bf16.gmra.mxu0 %v238
  %v552 = vpop.f32.mrf.mxu0
  %v553 = vadd.f32 %v116, %v552
  %v554 = vpop.f32.mrf.mxu0
  %v555 = vpop.f32.mrf.mxu0
  %v556 = vadd.f32 %v116, %v555
  %v557 = vpop.f32.mrf.mxu0
  %558 = vmatprep.mubr.bf16.mxu0 %v243
  %559 = vmatmul.mubr.bf16.gmra.mxu0 %v242
  %v560 = vpop.f32.mrf.mxu0
  %v561 = vadd.f32 %v116, %v560
  %v562 = vpop.f32.mrf.mxu0
  %v563 = vpop.f32.mrf.mxu0
  %v564 = vadd.f32 %v116, %v563
  %v565 = vpop.f32.mrf.mxu0
  %566 = vdwg.mxu0
  %567 = vmatprep.subr.bf16.mxu0 0
  %568 = vmatpush1.bf16.msra.mxu0 %v429
  %569 = vmatprep.subr.bf16.mxu0 0
  %570 = vmatpush1.bf16.msra.mxu0 %v428
  %571 = vmatprep.subr.bf16.mxu0 0
  %572 = vmatpush1.bf16.msra.mxu0 %v427
  %573 = vmatprep.subr.bf16.mxu0 0
  %574 = vmatpush1.bf16.msra.mxu0 %v426
  %575 = vmatprep.subr.bf16.mxu0 0
  %576 = vmatpush1.bf16.msra.mxu0 %v425
  %577 = vmatprep.subr.bf16.mxu0 0
  %578 = vmatpush1.bf16.msra.mxu0 %v424
  %579 = vmatprep.subr.bf16.mxu0 0
  %580 = vmatpush1.bf16.msra.mxu0 %v423
  %581 = vmatprep.subr.bf16.mxu0 0
  %582 = vmatpush1.bf16.msra.mxu0 %v422
  %583 = vmatprep.subr.bf16.mxu0 0
  %584 = vmatpush2.bf16.msra.mxu0 %v437
  %585 = vmatprep.subr.bf16.mxu0 0
  %586 = vmatpush2.bf16.msra.mxu0 %v436
  %587 = vmatprep.subr.bf16.mxu0 0
  %588 = vmatpush2.bf16.msra.mxu0 %v435
  %589 = vmatprep.subr.bf16.mxu0 0
  %590 = vmatpush2.bf16.msra.mxu0 %v434
  %591 = vmatprep.subr.bf16.mxu0 0
  %592 = vmatpush2.bf16.msra.mxu0 %v433
  %593 = vmatprep.subr.bf16.mxu0 0
  %594 = vmatpush2.bf16.msra.mxu0 %v432
  %595 = vmatprep.subr.bf16.mxu0 0
  %596 = vmatpush2.bf16.msra.mxu0 %v431
  %597 = vmatprep.subr.bf16.mxu0 0
  %598 = vmatpush2.bf16.msra.mxu0 %v430
  %599 = vmatprep.mubr.bf16.mxu0 %v217
  %600 = vmatmul.mubr.bf16.gmra.mxu0 %v216
  %v601 = vpop.f32.mrf.mxu0
  %v602 = vadd.f32 %v505, %v601
  %v603 = vpop.f32.mrf.mxu0
  %v604 = vpop.f32.mrf.mxu0
  %v605 = vadd.f32 %v508, %v604
  %v606 = vpop.f32.mrf.mxu0
  %607 = vmatprep.mubr.bf16.mxu0 %v221
  %608 = vmatmul.mubr.bf16.gmra.mxu0 %v220
  %v609 = vpop.f32.mrf.mxu0
  %v610 = vadd.f32 %v513, %v609
  %v611 = vpop.f32.mrf.mxu0
  %v612 = vpop.f32.mrf.mxu0
  %v613 = vadd.f32 %v516, %v612
  %v614 = vpop.f32.mrf.mxu0
  %615 = vmatprep.mubr.bf16.mxu0 %v225
  %616 = vmatmul.mubr.bf16.gmra.mxu0 %v224
  %v617 = vpop.f32.mrf.mxu0
  %v618 = vadd.f32 %v521, %v617
  %v619 = vpop.f32.mrf.mxu0
  %v620 = vpop.f32.mrf.mxu0
  %v621 = vadd.f32 %v524, %v620
  %v622 = vpop.f32.mrf.mxu0
  %623 = vmatprep.mubr.bf16.mxu0 %v229
  %624 = vmatmul.mubr.bf16.gmra.mxu0 %v228
  %v625 = vpop.f32.mrf.mxu0
  %v626 = vadd.f32 %v529, %v625
  %v627 = vpop.f32.mrf.mxu0
  %v628 = vpop.f32.mrf.mxu0
  %v629 = vadd.f32 %v532, %v628
  %v630 = vpop.f32.mrf.mxu0
  %631 = vmatprep.mubr.bf16.mxu0 %v233
  %632 = vmatmul.mubr.bf16.gmra.mxu0 %v232
  %v633 = vpop.f32.mrf.mxu0
  %v634 = vadd.f32 %v537, %v633
  %v635 = vpop.f32.mrf.mxu0
  %v636 = vpop.f32.mrf.mxu0
  %v637 = vadd.f32 %v540, %v636
  %v638 = vpop.f32.mrf.mxu0
  %639 = vmatprep.mubr.bf16.mxu0 %v237
  %640 = vmatmul.mubr.bf16.gmra.mxu0 %v236
  %v641 = vpop.f32.mrf.mxu0
  %v642 = vadd.f32 %v545, %v641
  %v643 = vpop.f32.mrf.mxu0
  %v644 = vpop.f32.mrf.mxu0
  %v645 = vadd.f32 %v548, %v644
  %v646 = vpop.f32.mrf.mxu0
  %647 = vmatprep.mubr.bf16.mxu0 %v241
  %648 = vmatmul.mubr.bf16.gmra.mxu0 %v240
  %v649 = vpop.f32.mrf.mxu0
  %v650 = vadd.f32 %v553, %v649
  %v651 = vpop.f32.mrf.mxu0
  %v652 = vpop.f32.mrf.mxu0
  %v653 = vadd.f32 %v556, %v652
  %v654 = vpop.f32.mrf.mxu0
  %655 = vmatprep.mubr.bf16.mxu0 %v245
  %656 = vmatmul.mubr.bf16.gmra.mxu0 %v244
  %v657 = vpop.f32.mrf.mxu0
  %v658 = vadd.f32 %v561, %v657
  %v659 = vpop.f32.mrf.mxu0
  %v660 = vpop.f32.mrf.mxu0
  %v661 = vadd.f32 %v564, %v660
  %v662 = vpop.f32.mrf.mxu0
  %663 = vdwg.mxu0
  %v664 = vmax.f32 %v602, 0.0
  %v665 = vmax.f32 %v605, 0.0
  %v666 = vmax.f32 %v610, 0.0
  %v667 = vmax.f32 %v613, 0.0
  %v668 = vmax.f32 %v618, 0.0
  %v669 = vmax.f32 %v621, 0.0
  %v670 = vmax.f32 %v626, 0.0
  %v671 = vmax.f32 %v629, 0.0
  %v672 = vmax.f32 %v634, 0.0
  %v673 = vmax.f32 %v637, 0.0
  %v674 = vmax.f32 %v642, 0.0
  %v675 = vmax.f32 %v645, 0.0
  %v676 = vmax.f32 %v650, 0.0
  %v677 = vmax.f32 %v653, 0.0
  %v678 = vmax.f32 %v658, 0.0
  %v679 = vmax.f32 %v661, 0.0
  %v680 = vpack.c.bf16 %v665, %v664
  %v681 = vpack.c.bf16 %v667, %v666
  %v682 = vpack.c.bf16 %v669, %v668
  %v683 = vpack.c.bf16 %v671, %v670
  %v684 = vpack.c.bf16 %v673, %v672
  %v685 = vpack.c.bf16 %v675, %v674
  %v686 = vpack.c.bf16 %v677, %v676
  %v687 = vpack.c.bf16 %v679, %v678
  %v696 = vunpack.c.l.b16 %v680
  %v697 = vunpack.c.h.b16 %v680
  %v698 = vunpack.c.l.b16 %v681
  %v699 = vunpack.c.h.b16 %v681
  %v700 = vunpack.c.l.b16 %v682
  %v701 = vunpack.c.h.b16 %v682
  %v702 = vunpack.c.l.b16 %v683
  %v703 = vunpack.c.h.b16 %v683
  %v704 = vunpack.c.l.b16 %v684
  %v705 = vunpack.c.h.b16 %v684
  %v706 = vunpack.c.l.b16 %v685
  %v707 = vunpack.c.h.b16 %v685
  %v708 = vunpack.c.l.b16 %v686
  %v709 = vunpack.c.h.b16 %v686
  %v710 = vunpack.c.l.b16 %v687
  %v711 = vunpack.c.h.b16 %v687
  %v712 = vpack.c.b16 %v696, %v696
  %v713 = vpack.c.b16 %v697, %v697
  %v714 = vpack.c.b16 %v698, %v698
  %v715 = vpack.c.b16 %v699, %v699
  %v716 = vpack.c.b16 %v700, %v700
  %v717 = vpack.c.b16 %v701, %v701
  %v718 = vpack.c.b16 %v702, %v702
  %v719 = vpack.c.b16 %v703, %v703
  %v720 = vpack.c.b16 %v704, %v704
  %v721 = vpack.c.b16 %v705, %v705
  %v722 = vpack.c.b16 %v706, %v706
  %v723 = vpack.c.b16 %v707, %v707
  %v724 = vpack.c.b16 %v708, %v708
  %v725 = vpack.c.b16 %v709, %v709
  %v726 = vpack.c.b16 %v710, %v710
  %v727 = vpack.c.b16 %v711, %v711
  %744 = vst [vmem:[%s3] sm:$0xf] %v712
  %745 = vst [vmem:[%s3 + $0x4] sm:$0xf] %v713
  %746 = vst [vmem:[%s3 + $0x8] sm:$0xf] %v714
  %747 = vst [vmem:[%s3 + $0xc] sm:$0xf] %v715
  %748 = vst [vmem:[%s3 + $0x10] sm:$0xf] %v716
  %749 = vst [vmem:[%s3 + $0x14] sm:$0xf] %v717
  %750 = vst [vmem:[%s3 + $0x18] sm:$0xf] %v718
  %751 = vst [vmem:[%s3 + $0x1c] sm:$0xf] %v719
  %752 = vst [vmem:[%s3 + $0x20] sm:$0xf] %v720
  %753 = vst [vmem:[%s3 + $0x24] sm:$0xf] %v721
  %754 = vst [vmem:[%s3 + $0x28] sm:$0xf] %v722
  %755 = vst [vmem:[%s3 + $0x2c] sm:$0xf] %v723
  %756 = vst [vmem:[%s3 + $0x30] sm:$0xf] %v724
  %757 = vst [vmem:[%s3 + $0x34] sm:$0xf] %v725
  %758 = vst [vmem:[%s3 + $0x38] sm:$0xf] %v726
  %759 = vst [vmem:[%s3 + $0x3c] sm:$0xf] %v727
  // Predicated region
  $region14: #{conv2d_to_latent_forward.7} parent=0 // pred_check
    _
  $region15: #{conv2d_to_latent_forward.7} parent=0 // pred_check_branch
    %761 = sbr.rel (0) target = $region17
  $region16: #{conv2d_to_latent_forward.7} parent=0 // pred_region
    _
  $region17: #{conv2d_to_latent_forward.7} parent=0 // pred_fallthru
    _
  // Predicated region
  $region18: #{conv2d_to_latent_forward.7} parent=0 // pred_check
    _
  $region19: #{conv2d_to_latent_forward.7} parent=0 // pred_check_branch
    %763 = sbr.rel (0) target = $region21
  $region20: #{conv2d_to_latent_forward.7} parent=0 // pred_region
    _
  $region21: #{conv2d_to_latent_forward.7} parent=0 // pred_fallthru
    _

// kernel: conv2d_to_latent_forward.8
$region0: #{conv2d_to_latent_forward.8}
  #allocation0 [shape = 'u32[]', space=smem, size = 0x4, offset = 0x4, fixed_abs, tag = 'smem constant byte address 0x4 - core index']
  #allocation1 [shape = 'u32[144,128]{1,0:T(1,128)}', space=vmem, size = 0x12000, scoped, tag = 'internal scratch']
  %s0 = inlined_call_operand.vmem [shape: bf16[32,896], index: 0, kind: input, shape index: {}]
  %s1 = inlined_call_operand.vmem [shape: bf16[896,128], index: 1, kind: input, shape index: {}]
  %s2 = inlined_call_operand.vmem [shape: f32[1,128], index: 2, kind: input, shape index: {}]
  %s3 = inlined_call_operand.vmem [shape: bf16[32,128], index: 3, kind: output, shape index: {}]
  %s4 = sld [smem:[#allocation0]]
  $region22: #{conv2d_to_latent_forward.8} parent=0
    _
  %s6 = ssub.s32 1, %s4
  %s7 = scalar_select 0, %s6, %s4
  // Predicated region
  $region2: #{conv2d_to_latent_forward.8} parent=0 // pred_check
    _
  $region3: #{conv2d_to_latent_forward.8} parent=0 // pred_check_branch
    %9 = sbr.rel (0) target = $region5
  $region4: #{conv2d_to_latent_forward.8} parent=0 // pred_region
    _
  $region5: #{conv2d_to_latent_forward.8} parent=0 // pred_fallthru
    _
  // Predicated region
  $region6: #{conv2d_to_latent_forward.8} parent=0 // pred_check
    _
  $region7: #{conv2d_to_latent_forward.8} parent=0 // pred_check_branch
    %11 = sbr.rel (0) target = $region9
  $region8: #{conv2d_to_latent_forward.8} parent=0 // pred_region
    _
  $region9: #{conv2d_to_latent_forward.8} parent=0 // pred_fallthru
    _
  // Predicated region
  $region10: #{conv2d_to_latent_forward.8} parent=0 // pred_check
    _
  $region11: #{conv2d_to_latent_forward.8} parent=0 // pred_check_branch
    %13 = sbr.rel (0) target = $region13
  $region12: #{conv2d_to_latent_forward.8} parent=0 // pred_region
    _
  $region13: #{conv2d_to_latent_forward.8} parent=0 // pred_fallthru
    _
  %v15 = vld [vmem:[%s0] sm:$0xff]
  %v16 = vld [vmem:[%s0 + $0x8] sm:$0xff]
  %v17 = vld [vmem:[%s0 + $0x10] sm:$0xff]
  %v18 = vld [vmem:[%s0 + $0x18] sm:$0xf]
  %v19 = vld [vmem:[%s0 + $0x1c] sm:$0xff]
  %v20 = vld [vmem:[%s0 + $0x24] sm:$0xff]
  %v21 = vld [vmem:[%s0 + $0x2c] sm:$0xff]
  %v22 = vld [vmem:[%s0 + $0x34] sm:$0xf]
  %v23 = vld [vmem:[%s0 + $0x38] sm:$0xff]
  %v24 = vld [vmem:[%s0 + $0x40] sm:$0xff]
  %v25 = vld [vmem:[%s0 + $0x48] sm:$0xff]
  %v26 = vld [vmem:[%s0 + $0x50] sm:$0xf]
  %v27 = vld [vmem:[%s0 + $0x54] sm:$0xff]
  %v28 = vld [vmem:[%s0 + $0x5c] sm:$0xff]
  %v29 = vld [vmem:[%s0 + $0x64] sm:$0xff]
  %v30 = vld [vmem:[%s0 + $0x6c] sm:$0xf]
  %v31 = vld [vmem:[%s1] sm:$0xf]
  %v32 = vld [vmem:[%s1 + $0x4] sm:$0xf]
  %v33 = vld [vmem:[%s1 + $0x8] sm:$0xf]
  %v34 = vld [vmem:[%s1 + $0xc] sm:$0xf]
  %v35 = vld [vmem:[%s1 + $0x10] sm:$0xf]
  %v36 = vld [vmem:[%s1 + $0x14] sm:$0xf]
  %v37 = vld [vmem:[%s1 + $0x18] sm:$0xf]
  %v38 = vld [vmem:[%s1 + $0x1c] sm:$0xf]
  %v39 = vld [vmem:[%s1 + $0x20] sm:$0xf]
  %v40 = vld [vmem:[%s1 + $0x24] sm:$0xf]
  %v41 = vld [vmem:[%s1 + $0x28] sm:$0xf]
  %v42 = vld [vmem:[%s1 + $0x2c] sm:$0xf]
  %v43 = vld [vmem:[%s1 + $0x30] sm:$0xf]
  %v44 = vld [vmem:[%s1 + $0x34] sm:$0xf]
  %v45 = vld [vmem:[%s1 + $0x38] sm:$0xf]
  %v46 = vld [vmem:[%s1 + $0x3c] sm:$0xf]
  %v47 = vld [vmem:[%s1 + $0x40] sm:$0xf]
  %v48 = vld [vmem:[%s1 + $0x44] sm:$0xf]
  %v49 = vld [vmem:[%s1 + $0x48] sm:$0xf]
  %v50 = vld [vmem:[%s1 + $0x4c] sm:$0xf]
  %v51 = vld [vmem:[%s1 + $0x50] sm:$0xf]
  %v52 = vld [vmem:[%s1 + $0x54] sm:$0xf]
  %v53 = vld [vmem:[%s1 + $0x58] sm:$0xf]
  %v54 = vld [vmem:[%s1 + $0x5c] sm:$0xf]
  %v55 = vld [vmem:[%s1 + $0x60] sm:$0xf]
  %v56 = vld [vmem:[%s1 + $0x64] sm:$0xf]
  %v57 = vld [vmem:[%s1 + $0x68] sm:$0xf]
  %v58 = vld [vmem:[%s1 + $0x6c] sm:$0xf]
  %v59 = vld [vmem:[%s1 + $0x70] sm:$0xf]
  %v60 = vld [vmem:[%s1 + $0x74] sm:$0xf]
  %v61 = vld [vmem:[%s1 + $0x78] sm:$0xf]
  %v62 = vld [vmem:[%s1 + $0x7c] sm:$0xf]
  %v63 = vld [vmem:[%s1 + $0x80] sm:$0xf]
  %v64 = vld [vmem:[%s1 + $0x84] sm:$0xf]
  %v65 = vld [vmem:[%s1 + $0x88] sm:$0xf]
  %v66 = vld [vmem:[%s1 + $0x8c] sm:$0xf]
  %v67 = vld [vmem:[%s1 + $0x90] sm:$0xf]
  %v68 = vld [vmem:[%s1 + $0x94] sm:$0xf]
  %v69 = vld [vmem:[%s1 + $0x98] sm:$0xf]
  %v70 = vld [vmem:[%s1 + $0x9c] sm:$0xf]
  %v71 = vld [vmem:[%s1 + $0xa0] sm:$0xf]
  %v72 = vld [vmem:[%s1 + $0xa4] sm:$0xf]
  %v73 = vld [vmem:[%s1 + $0xa8] sm:$0xf]
  %v74 = vld [vmem:[%s1 + $0xac] sm:$0xf]
  %v75 = vld [vmem:[%s1 + $0xb0] sm:$0xf]
  %v76 = vld [vmem:[%s1 + $0xb4] sm:$0xf]
  %v77 = vld [vmem:[%s1 + $0xb8] sm:$0xf]
  %v78 = vld [vmem:[%s1 + $0xbc] sm:$0xf]
  %v79 = vld [vmem:[%s1 + $0xc0] sm:$0xf]
  %v80 = vld [vmem:[%s1 + $0xc4] sm:$0xf]
  %v81 = vld [vmem:[%s1 + $0xc8] sm:$0xf]
  %v82 = vld [vmem:[%s1 + $0xcc] sm:$0xf]
  %v83 = vld [vmem:[%s1 + $0xd0] sm:$0xf]
  %v84 = vld [vmem:[%s1 + $0xd4] sm:$0xf]
  %v85 = vld [vmem:[%s1 + $0xd8] sm:$0xf]
  %v86 = vld [vmem:[%s1 + $0xdc] sm:$0xf]
  %v87 = vld [vmem:[%s1 + $0xe0] sm:$0xf]
  %v88 = vld [vmem:[%s1 + $0xe4] sm:$0xf]
  %v89 = vld [vmem:[%s1 + $0xe8] sm:$0xf]
  %v90 = vld [vmem:[%s1 + $0xec] sm:$0xf]
  %v91 = vld [vmem:[%s1 + $0xf0] sm:$0xf]
  %v92 = vld [vmem:[%s1 + $0xf4] sm:$0xf]
  %v93 = vld [vmem:[%s1 + $0xf8] sm:$0xf]
  %v94 = vld [vmem:[%s1 + $0xfc] sm:$0xf]
  %v95 = vld [vmem:[%s1 + $0x100] sm:$0xf]
  %v96 = vld [vmem:[%s1 + $0x104] sm:$0xf]
  %v97 = vld [vmem:[%s1 + $0x108] sm:$0xf]
  %v98 = vld [vmem:[%s1 + $0x10c] sm:$0xf]
  %v99 = vld [vmem:[%s1 + $0x110] sm:$0xf]
  %v100 = vld [vmem:[%s1 + $0x114] sm:$0xf]
  %v101 = vld [vmem:[%s1 + $0x118] sm:$0xf]
  %v102 = vld [vmem:[%s1 + $0x11c] sm:$0xf]
  %v103 = vld [vmem:[%s1 + $0x120] sm:$0xf]
  %v104 = vld [vmem:[%s1 + $0x124] sm:$0xf]
  %v105 = vld [vmem:[%s1 + $0x128] sm:$0xf]
  %v106 = vld [vmem:[%s1 + $0x12c] sm:$0xf]
  %v107 = vld [vmem:[%s1 + $0x130] sm:$0xf]
  %v108 = vld [vmem:[%s1 + $0x134] sm:$0xf]
  %v109 = vld [vmem:[%s1 + $0x138] sm:$0xf]
  %v110 = vld [vmem:[%s1 + $0x13c] sm:$0xf]
  %v111 = vld [vmem:[%s1 + $0x140] sm:$0xf]
  %v112 = vld [vmem:[%s1 + $0x144] sm:$0xf]
  %v113 = vld [vmem:[%s1 + $0x148] sm:$0xf]
  %v114 = vld [vmem:[%s1 + $0x14c] sm:$0xf]
  %v115 = vld [vmem:[%s1 + $0x150] sm:$0xf]
  %v116 = vld [vmem:[%s1 + $0x154] sm:$0xf]
  %v117 = vld [vmem:[%s1 + $0x158] sm:$0xf]
  %v118 = vld [vmem:[%s1 + $0x15c] sm:$0xf]
  %v119 = vld [vmem:[%s1 + $0x160] sm:$0xf]
  %v120 = vld [vmem:[%s1 + $0x164] sm:$0xf]
  %v121 = vld [vmem:[%s1 + $0x168] sm:$0xf]
  %v122 = vld [vmem:[%s1 + $0x16c] sm:$0xf]
  %v123 = vld [vmem:[%s1 + $0x170] sm:$0xf]
  %v124 = vld [vmem:[%s1 + $0x174] sm:$0xf]
  %v125 = vld [vmem:[%s1 + $0x178] sm:$0xf]
  %v126 = vld [vmem:[%s1 + $0x17c] sm:$0xf]
  %v127 = vld [vmem:[%s1 + $0x180] sm:$0xf]
  %v128 = vld [vmem:[%s1 + $0x184] sm:$0xf]
  %v129 = vld [vmem:[%s1 + $0x188] sm:$0xf]
  %v130 = vld [vmem:[%s1 + $0x18c] sm:$0xf]
  %v131 = vld [vmem:[%s1 + $0x190] sm:$0xf]
  %v132 = vld [vmem:[%s1 + $0x194] sm:$0xf]
  %v133 = vld [vmem:[%s1 + $0x198] sm:$0xf]
  %v134 = vld [vmem:[%s1 + $0x19c] sm:$0xf]
  %v135 = vld [vmem:[%s1 + $0x1a0] sm:$0xf]
  %v136 = vld [vmem:[%s1 + $0x1a4] sm:$0xf]
  %v137 = vld [vmem:[%s1 + $0x1a8] sm:$0xf]
  %v138 = vld [vmem:[%s1 + $0x1ac] sm:$0xf]
  %v139 = vld [vmem:[%s1 + $0x1b0] sm:$0xf]
  %v140 = vld [vmem:[%s1 + $0x1b4] sm:$0xf]
  %v141 = vld [vmem:[%s1 + $0x1b8] sm:$0xf]
  %v142 = vld [vmem:[%s1 + $0x1bc] sm:$0xf]
  %v143 = vld [vmem:[%s2] sm:$0x1]
  %v145 = vlaneseq
  %v146 = vshrl.u32 %v145, 7
  %v147 = vsub.s32 0, %v146
  %v148 = vrot.slane %v143, %v147
  %v166 = vunpack.c.l.b16 %v15
  %v167 = vunpack.c.h.b16 %v15
  %v168 = vunpack.c.l.b16 %v16
  %v169 = vunpack.c.h.b16 %v16
  %v170 = vunpack.c.l.b16 %v17
  %v171 = vunpack.c.h.b16 %v17
  %v172 = vunpack.c.l.b16 %v18
  %v173 = vunpack.c.l.b16 %v19
  %v174 = vunpack.c.h.b16 %v19
  %v175 = vunpack.c.l.b16 %v20
  %v176 = vunpack.c.h.b16 %v20
  %v177 = vunpack.c.l.b16 %v21
  %v178 = vunpack.c.h.b16 %v21
  %v179 = vunpack.c.l.b16 %v22
  %v180 = vunpack.c.l.b16 %v23
  %v181 = vunpack.c.h.b16 %v23
  %v182 = vunpack.c.l.b16 %v24
  %v183 = vunpack.c.h.b16 %v24
  %v184 = vunpack.c.l.b16 %v25
  %v185 = vunpack.c.h.b16 %v25
  %v186 = vunpack.c.l.b16 %v26
  %v187 = vunpack.c.l.b16 %v27
  %v188 = vunpack.c.h.b16 %v27
  %v189 = vunpack.c.l.b16 %v28
  %v190 = vunpack.c.h.b16 %v28
  %v191 = vunpack.c.l.b16 %v29
  %v192 = vunpack.c.h.b16 %v29
  %v193 = vunpack.c.l.b16 %v30
  %v194 = vpack.c.b16 %v173, %v166
  %v195 = vpack.c.b16 %v174, %v167
  %v196 = vpack.c.b16 %v175, %v168
  %v197 = vpack.c.b16 %v176, %v169
  %v198 = vpack.c.b16 %v177, %v170
  %v199 = vpack.c.b16 %v178, %v171
  %v200 = vpack.c.b16 %v179, %v172
  %v201 = vpack.c.b16 %v187, %v180
  %v202 = vpack.c.b16 %v188, %v181
  %v203 = vpack.c.b16 %v189, %v182
  %v204 = vpack.c.b16 %v190, %v183
  %v205 = vpack.c.b16 %v191, %v184
  %v206 = vpack.c.b16 %v192, %v185
  %v207 = vpack.c.b16 %v193, %v186
  %v334 = vunpack.c.l.b16 %v31
  %v335 = vunpack.c.l.b16 %v32
  %v336 = vunpack.c.l.b16 %v33
  %v337 = vunpack.c.l.b16 %v34
  %v338 = vunpack.c.l.b16 %v35
  %v339 = vunpack.c.l.b16 %v36
  %v340 = vunpack.c.l.b16 %v37
  %v341 = vunpack.c.l.b16 %v38
  %v342 = vunpack.c.l.b16 %v39
  %v343 = vunpack.c.l.b16 %v40
  %v344 = vunpack.c.l.b16 %v41
  %v345 = vunpack.c.l.b16 %v42
  %v346 = vunpack.c.l.b16 %v43
  %v347 = vunpack.c.l.b16 %v44
  %v348 = vunpack.c.l.b16 %v45
  %v349 = vunpack.c.l.b16 %v46
  %v350 = vunpack.c.l.b16 %v47
  %v351 = vunpack.c.l.b16 %v48
  %v352 = vunpack.c.l.b16 %v49
  %v353 = vunpack.c.l.b16 %v50
  %v354 = vunpack.c.l.b16 %v51
  %v355 = vunpack.c.l.b16 %v52
  %v356 = vunpack.c.l.b16 %v53
  %v357 = vunpack.c.l.b16 %v54
  %v358 = vunpack.c.l.b16 %v55
  %v359 = vunpack.c.l.b16 %v56
  %v360 = vunpack.c.l.b16 %v57
  %v361 = vunpack.c.l.b16 %v58
  %v362 = vunpack.c.l.b16 %v59
  %v363 = vunpack.c.l.b16 %v60
  %v364 = vunpack.c.l.b16 %v61
  %v365 = vunpack.c.l.b16 %v62
  %v366 = vunpack.c.l.b16 %v63
  %v367 = vunpack.c.l.b16 %v64
  %v368 = vunpack.c.l.b16 %v65
  %v369 = vunpack.c.l.b16 %v66
  %v370 = vunpack.c.l.b16 %v67
  %v371 = vunpack.c.l.b16 %v68
  %v372 = vunpack.c.l.b16 %v69
  %v373 = vunpack.c.l.b16 %v70
  %v374 = vunpack.c.l.b16 %v71
  %v375 = vunpack.c.l.b16 %v72
  %v376 = vunpack.c.l.b16 %v73
  %v377 = vunpack.c.l.b16 %v74
  %v378 = vunpack.c.l.b16 %v75
  %v379 = vunpack.c.l.b16 %v76
  %v380 = vunpack.c.l.b16 %v77
  %v381 = vunpack.c.l.b16 %v78
  %v382 = vunpack.c.l.b16 %v79
  %v383 = vunpack.c.l.b16 %v80
  %v384 = vunpack.c.l.b16 %v81
  %v385 = vunpack.c.l.b16 %v82
  %v386 = vunpack.c.l.b16 %v83
  %v387 = vunpack.c.l.b16 %v84
  %v388 = vunpack.c.l.b16 %v85
  %v389 = vunpack.c.l.b16 %v86
  %v390 = vunpack.c.l.b16 %v87
  %v391 = vunpack.c.l.b16 %v88
  %v392 = vunpack.c.l.b16 %v89
  %v393 = vunpack.c.l.b16 %v90
  %v394 = vunpack.c.l.b16 %v91
  %v395 = vunpack.c.l.b16 %v92
  %v396 = vunpack.c.l.b16 %v93
  %v397 = vunpack.c.l.b16 %v94
  %v398 = vunpack.c.l.b16 %v95
  %v399 = vunpack.c.l.b16 %v96
  %v400 = vunpack.c.l.b16 %v97
  %v401 = vunpack.c.l.b16 %v98
  %v402 = vunpack.c.l.b16 %v99
  %v403 = vunpack.c.l.b16 %v100
  %v404 = vunpack.c.l.b16 %v101
  %v405 = vunpack.c.l.b16 %v102
  %v406 = vunpack.c.l.b16 %v103
  %v407 = vunpack.c.l.b16 %v104
  %v408 = vunpack.c.l.b16 %v105
  %v409 = vunpack.c.l.b16 %v106
  %v410 = vunpack.c.l.b16 %v107
  %v411 = vunpack.c.l.b16 %v108
  %v412 = vunpack.c.l.b16 %v109
  %v413 = vunpack.c.l.b16 %v110
  %v414 = vunpack.c.l.b16 %v111
  %v415 = vunpack.c.l.b16 %v112
  %v416 = vunpack.c.l.b16 %v113
  %v417 = vunpack.c.l.b16 %v114
  %v418 = vunpack.c.l.b16 %v115
  %v419 = vunpack.c.l.b16 %v116
  %v420 = vunpack.c.l.b16 %v117
  %v421 = vunpack.c.l.b16 %v118
  %v422 = vunpack.c.l.b16 %v119
  %v423 = vunpack.c.l.b16 %v120
  %v424 = vunpack.c.l.b16 %v121
  %v425 = vunpack.c.l.b16 %v122
  %v426 = vunpack.c.l.b16 %v123
  %v427 = vunpack.c.l.b16 %v124
  %v428 = vunpack.c.l.b16 %v125
  %v429 = vunpack.c.l.b16 %v126
  %v430 = vunpack.c.l.b16 %v127
  %v431 = vunpack.c.l.b16 %v128
  %v432 = vunpack.c.l.b16 %v129
  %v433 = vunpack.c.l.b16 %v130
  %v434 = vunpack.c.l.b16 %v131
  %v435 = vunpack.c.l.b16 %v132
  %v436 = vunpack.c.l.b16 %v133
  %v437 = vunpack.c.l.b16 %v134
  %v438 = vunpack.c.l.b16 %v135
  %v439 = vunpack.c.l.b16 %v136
  %v440 = vunpack.c.l.b16 %v137
  %v441 = vunpack.c.l.b16 %v138
  %v442 = vunpack.c.l.b16 %v139
  %v443 = vunpack.c.l.b16 %v140
  %v444 = vunpack.c.l.b16 %v141
  %v445 = vunpack.c.l.b16 %v142
  %v446 = vpack.c.b16 %v335, %v334
  %v447 = vpack.c.b16 %v337, %v336
  %v448 = vpack.c.b16 %v339, %v338
  %v449 = vpack.c.b16 %v341, %v340
  %v450 = vpack.c.b16 %v343, %v342
  %v451 = vpack.c.b16 %v345, %v344
  %v452 = vpack.c.b16 %v347, %v346
  %v453 = vpack.c.b16 %v349, %v348
  %v454 = vpack.c.b16 %v351, %v350
  %v455 = vpack.c.b16 %v353, %v352
  %v456 = vpack.c.b16 %v355, %v354
  %v457 = vpack.c.b16 %v357, %v356
  %v458 = vpack.c.b16 %v359, %v358
  %v459 = vpack.c.b16 %v361, %v360
  %v460 = vpack.c.b16 %v363, %v362
  %v461 = vpack.c.b16 %v365, %v364
  %v462 = vpack.c.b16 %v367, %v366
  %v463 = vpack.c.b16 %v369, %v368
  %v464 = vpack.c.b16 %v371, %v370
  %v465 = vpack.c.b16 %v373, %v372
  %v466 = vpack.c.b16 %v375, %v374
  %v467 = vpack.c.b16 %v377, %v376
  %v468 = vpack.c.b16 %v379, %v378
  %v469 = vpack.c.b16 %v381, %v380
  %v470 = vpack.c.b16 %v383, %v382
  %v471 = vpack.c.b16 %v385, %v384
  %v472 = vpack.c.b16 %v387, %v386
  %v473 = vpack.c.b16 %v389, %v388
  %v474 = vpack.c.b16 %v391, %v390
  %v475 = vpack.c.b16 %v393, %v392
  %v476 = vpack.c.b16 %v395, %v394
  %v477 = vpack.c.b16 %v397, %v396
  %v478 = vpack.c.b16 %v399, %v398
  %v479 = vpack.c.b16 %v401, %v400
  %v480 = vpack.c.b16 %v403, %v402
  %v481 = vpack.c.b16 %v405, %v404
  %v482 = vpack.c.b16 %v407, %v406
  %v483 = vpack.c.b16 %v409, %v408
  %v484 = vpack.c.b16 %v411, %v410
  %v485 = vpack.c.b16 %v413, %v412
  %v486 = vpack.c.b16 %v415, %v414
  %v487 = vpack.c.b16 %v417, %v416
  %v488 = vpack.c.b16 %v419, %v418
  %v489 = vpack.c.b16 %v421, %v420
  %v490 = vpack.c.b16 %v423, %v422
  %v491 = vpack.c.b16 %v425, %v424
  %v492 = vpack.c.b16 %v427, %v426
  %v493 = vpack.c.b16 %v429, %v428
  %v494 = vpack.c.b16 %v431, %v430
  %v495 = vpack.c.b16 %v433, %v432
  %v496 = vpack.c.b16 %v435, %v434
  %v497 = vpack.c.b16 %v437, %v436
  %v498 = vpack.c.b16 %v439, %v438
  %v499 = vpack.c.b16 %v441, %v440
  %v500 = vpack.c.b16 %v443, %v442
  %v501 = vpack.c.b16 %v445, %v444
  %558 = vmatprep.subr.bf16.mxu0 0
  %559 = vmatpush1.bf16.msra.mxu0 %v453
  %560 = vmatprep.subr.bf16.mxu0 0
  %561 = vmatpush1.bf16.msra.mxu0 %v452
  %562 = vmatprep.subr.bf16.mxu0 0
  %563 = vmatpush1.bf16.msra.mxu0 %v451
  %564 = vmatprep.subr.bf16.mxu0 0
  %565 = vmatpush1.bf16.msra.mxu0 %v450
  %566 = vmatprep.subr.bf16.mxu0 0
  %567 = vmatpush1.bf16.msra.mxu0 %v449
  %568 = vmatprep.subr.bf16.mxu0 0
  %569 = vmatpush1.bf16.msra.mxu0 %v448
  %570 = vmatprep.subr.bf16.mxu0 0
  %571 = vmatpush1.bf16.msra.mxu0 %v447
  %572 = vmatprep.subr.bf16.mxu0 0
  %573 = vmatpush1.bf16.msra.mxu0 %v446
  %574 = vmatprep.subr.bf16.mxu0 0
  %575 = vmatpush2.bf16.msra.mxu0 %v461
  %576 = vmatprep.subr.bf16.mxu0 0
  %577 = vmatpush2.bf16.msra.mxu0 %v460
  %578 = vmatprep.subr.bf16.mxu0 0
  %579 = vmatpush2.bf16.msra.mxu0 %v459
  %580 = vmatprep.subr.bf16.mxu0 0
  %581 = vmatpush2.bf16.msra.mxu0 %v458
  %582 = vmatprep.subr.bf16.mxu0 0
  %583 = vmatpush2.bf16.msra.mxu0 %v457
  %584 = vmatprep.subr.bf16.mxu0 0
  %585 = vmatpush2.bf16.msra.mxu0 %v456
  %586 = vmatprep.subr.bf16.mxu0 0
  %587 = vmatpush2.bf16.msra.mxu0 %v455
  %588 = vmatprep.subr.bf16.mxu0 0
  %589 = vmatpush2.bf16.msra.mxu0 %v454
  %590 = vmatprep.mubr.bf16.mxu0 %v195
  %591 = vmatmul.mubr.bf16.gmra.mxu0 %v194
  %v592 = vpop.f32.mrf.mxu0
  %v593 = vadd.f32 %v148, %v592
  %v594 = vpop.f32.mrf.mxu0
  %v595 = vpop.f32.mrf.mxu0
  %v596 = vadd.f32 %v148, %v595
  %v597 = vpop.f32.mrf.mxu0
  %598 = vmatprep.mubr.bf16.mxu0 %v202
  %599 = vmatmul.mubr.bf16.gmra.mxu0 %v201
  %v600 = vpop.f32.mrf.mxu0
  %v601 = vadd.f32 %v148, %v600
  %v602 = vpop.f32.mrf.mxu0
  %v603 = vpop.f32.mrf.mxu0
  %v604 = vadd.f32 %v148, %v603
  %v605 = vpop.f32.mrf.mxu0
  %606 = vdwg.mxu0
  %607 = vmatprep.subr.bf16.mxu0 0
  %608 = vmatpush1.bf16.msra.mxu0 %v469
  %609 = vmatprep.subr.bf16.mxu0 0
  %610 = vmatpush1.bf16.msra.mxu0 %v468
  %611 = vmatprep.subr.bf16.mxu0 0
  %612 = vmatpush1.bf16.msra.mxu0 %v467
  %613 = vmatprep.subr.bf16.mxu0 0
  %614 = vmatpush1.bf16.msra.mxu0 %v466
  %615 = vmatprep.subr.bf16.mxu0 0
  %616 = vmatpush1.bf16.msra.mxu0 %v465
  %617 = vmatprep.subr.bf16.mxu0 0
  %618 = vmatpush1.bf16.msra.mxu0 %v464
  %619 = vmatprep.subr.bf16.mxu0 0
  %620 = vmatpush1.bf16.msra.mxu0 %v463
  %621 = vmatprep.subr.bf16.mxu0 0
  %622 = vmatpush1.bf16.msra.mxu0 %v462
  %623 = vmatprep.subr.bf16.mxu0 0
  %624 = vmatpush2.bf16.msra.mxu0 %v477
  %625 = vmatprep.subr.bf16.mxu0 0
  %626 = vmatpush2.bf16.msra.mxu0 %v476
  %627 = vmatprep.subr.bf16.mxu0 0
  %628 = vmatpush2.bf16.msra.mxu0 %v475
  %629 = vmatprep.subr.bf16.mxu0 0
  %630 = vmatpush2.bf16.msra.mxu0 %v474
  %631 = vmatprep.subr.bf16.mxu0 0
  %632 = vmatpush2.bf16.msra.mxu0 %v473
  %633 = vmatprep.subr.bf16.mxu0 0
  %634 = vmatpush2.bf16.msra.mxu0 %v472
  %635 = vmatprep.subr.bf16.mxu0 0
  %636 = vmatpush2.bf16.msra.mxu0 %v471
  %637 = vmatprep.subr.bf16.mxu0 0
  %638 = vmatpush2.bf16.msra.mxu0 %v470
  %639 = vmatprep.mubr.bf16.mxu0 %v197
  %640 = vmatmul.mubr.bf16.gmra.mxu0 %v196
  %v641 = vpop.f32.mrf.mxu0
  %v642 = vadd.f32 %v593, %v641
  %v643 = vpop.f32.mrf.mxu0
  %v644 = vpop.f32.mrf.mxu0
  %v645 = vadd.f32 %v596, %v644
  %v646 = vpop.f32.mrf.mxu0
  %647 = vmatprep.mubr.bf16.mxu0 %v204
  %648 = vmatmul.mubr.bf16.gmra.mxu0 %v203
  %v649 = vpop.f32.mrf.mxu0
  %v650 = vadd.f32 %v601, %v649
  %v651 = vpop.f32.mrf.mxu0
  %v652 = vpop.f32.mrf.mxu0
  %v653 = vadd.f32 %v604, %v652
  %v654 = vpop.f32.mrf.mxu0
  %655 = vdwg.mxu0
  %656 = vmatprep.subr.bf16.mxu0 0
  %657 = vmatpush1.bf16.msra.mxu0 %v485
  %658 = vmatprep.subr.bf16.mxu0 0
  %659 = vmatpush1.bf16.msra.mxu0 %v484
  %660 = vmatprep.subr.bf16.mxu0 0
  %661 = vmatpush1.bf16.msra.mxu0 %v483
  %662 = vmatprep.subr.bf16.mxu0 0
  %663 = vmatpush1.bf16.msra.mxu0 %v482
  %664 = vmatprep.subr.bf16.mxu0 0
  %665 = vmatpush1.bf16.msra.mxu0 %v481
  %666 = vmatprep.subr.bf16.mxu0 0
  %667 = vmatpush1.bf16.msra.mxu0 %v480
  %668 = vmatprep.subr.bf16.mxu0 0
  %669 = vmatpush1.bf16.msra.mxu0 %v479
  %670 = vmatprep.subr.bf16.mxu0 0
  %671 = vmatpush1.bf16.msra.mxu0 %v478
  %672 = vmatprep.subr.bf16.mxu0 0
  %673 = vmatpush2.bf16.msra.mxu0 %v493
  %674 = vmatprep.subr.bf16.mxu0 0
  %675 = vmatpush2.bf16.msra.mxu0 %v492
  %676 = vmatprep.subr.bf16.mxu0 0
  %677 = vmatpush2.bf16.msra.mxu0 %v491
  %678 = vmatprep.subr.bf16.mxu0 0
  %679 = vmatpush2.bf16.msra.mxu0 %v490
  %680 = vmatprep.subr.bf16.mxu0 0
  %681 = vmatpush2.bf16.msra.mxu0 %v489
  %682 = vmatprep.subr.bf16.mxu0 0
  %683 = vmatpush2.bf16.msra.mxu0 %v488
  %684 = vmatprep.subr.bf16.mxu0 0
  %685 = vmatpush2.bf16.msra.mxu0 %v487
  %686 = vmatprep.subr.bf16.mxu0 0
  %687 = vmatpush2.bf16.msra.mxu0 %v486
  %688 = vmatprep.mubr.bf16.mxu0 %v199
  %689 = vmatmul.mubr.bf16.gmra.mxu0 %v198
  %v690 = vpop.f32.mrf.mxu0
  %v691 = vadd.f32 %v642, %v690
  %v692 = vpop.f32.mrf.mxu0
  %v693 = vpop.f32.mrf.mxu0
  %v694 = vadd.f32 %v645, %v693
  %v695 = vpop.f32.mrf.mxu0
  %696 = vmatprep.mubr.bf16.mxu0 %v206
  %697 = vmatmul.mubr.bf16.gmra.mxu0 %v205
  %v698 = vpop.f32.mrf.mxu0
  %v699 = vadd.f32 %v650, %v698
  %v700 = vpop.f32.mrf.mxu0
  %v701 = vpop.f32.mrf.mxu0
  %v702 = vadd.f32 %v653, %v701
  %v703 = vpop.f32.mrf.mxu0
  %704 = vdwg.mxu0
  %705 = vmatprep.subr.bf16.mxu0 0
  %706 = vmatpush1.bf16.msra.mxu0 %v501
  %707 = vmatprep.subr.bf16.mxu0 0
  %708 = vmatpush1.bf16.msra.mxu0 %v500
  %709 = vmatprep.subr.bf16.mxu0 0
  %710 = vmatpush1.bf16.msra.mxu0 %v499
  %711 = vmatprep.subr.bf16.mxu0 0
  %712 = vmatpush1.bf16.msra.mxu0 %v498
  %713 = vmatprep.subr.bf16.mxu0 0
  %714 = vmatpush1.bf16.msra.mxu0 %v497
  %715 = vmatprep.subr.bf16.mxu0 0
  %716 = vmatpush1.bf16.msra.mxu0 %v496
  %717 = vmatprep.subr.bf16.mxu0 0
  %718 = vmatpush1.bf16.msra.mxu0 %v495
  %719 = vmatprep.subr.bf16.mxu0 0
  %720 = vmatpush1.bf16.msra.mxu0 %v494
  %721 = vmatprep.subr.bf16.mxu0 0
  %722 = vmatpush2.bf16.msra.mxu0 0
  %723 = vmatprep.subr.bf16.mxu0 0
  %724 = vmatpush2.bf16.msra.mxu0 0
  %725 = vmatprep.subr.bf16.mxu0 0
  %726 = vmatpush2.bf16.msra.mxu0 0
  %727 = vmatprep.subr.bf16.mxu0 0
  %728 = vmatpush2.bf16.msra.mxu0 0
  %729 = vmatprep.subr.bf16.mxu0 0
  %730 = vmatpush2.bf16.msra.mxu0 0
  %731 = vmatprep.subr.bf16.mxu0 0
  %732 = vmatpush2.bf16.msra.mxu0 0
  %733 = vmatprep.subr.bf16.mxu0 0
  %734 = vmatpush2.bf16.msra.mxu0 0
  %735 = vmatprep.subr.bf16.mxu0 0
  %736 = vmatpush2.bf16.msra.mxu0 0
  %737 = vmatprep.mubr.bf16.mxu0 0
  %738 = vmatmul.mubr.bf16.gmra.mxu0 %v200
  %v739 = vpop.f32.mrf.mxu0
  %v740 = vadd.f32 %v691, %v739
  %v741 = vpop.f32.mrf.mxu0
  %v742 = vpop.f32.mrf.mxu0
  %v743 = vadd.f32 %v694, %v742
  %v744 = vpop.f32.mrf.mxu0
  %745 = vmatprep.mubr.bf16.mxu0 0
  %746 = vmatmul.mubr.bf16.gmra.mxu0 %v207
  %v747 = vpop.f32.mrf.mxu0
  %v748 = vadd.f32 %v699, %v747
  %v749 = vpop.f32.mrf.mxu0
  %v750 = vpop.f32.mrf.mxu0
  %v751 = vadd.f32 %v702, %v750
  %v752 = vpop.f32.mrf.mxu0
  %753 = vdwg.mxu0
  %v754 = vmax.f32 %v740, 0.0
  %v755 = vmax.f32 %v743, 0.0
  %v756 = vmax.f32 %v748, 0.0
  %v757 = vmax.f32 %v751, 0.0
  %v758 = vpack.c.bf16 %v755, %v754
  %v759 = vpack.c.bf16 %v757, %v756
  %v762 = vunpack.c.l.b16 %v758
  %v763 = vunpack.c.h.b16 %v758
  %v764 = vunpack.c.l.b16 %v759
  %v765 = vunpack.c.h.b16 %v759
  %v766 = vpack.c.b16 %v762, %v762
  %v767 = vpack.c.b16 %v763, %v763
  %v768 = vpack.c.b16 %v764, %v764
  %v769 = vpack.c.b16 %v765, %v765
  %774 = vst [vmem:[%s3] sm:$0xf] %v766
  %775 = vst [vmem:[%s3 + $0x4] sm:$0xf] %v767
  %776 = vst [vmem:[%s3 + $0x8] sm:$0xf] %v768
  %777 = vst [vmem:[%s3 + $0xc] sm:$0xf] %v769
  // Predicated region
  $region14: #{conv2d_to_latent_forward.8} parent=0 // pred_check
    _
  $region15: #{conv2d_to_latent_forward.8} parent=0 // pred_check_branch
    %779 = sbr.rel (0) target = $region17
  $region16: #{conv2d_to_latent_forward.8} parent=0 // pred_region
    _
  $region17: #{conv2d_to_latent_forward.8} parent=0 // pred_fallthru
    _
  // Predicated region
  $region18: #{conv2d_to_latent_forward.8} parent=0 // pred_check
    _
  $region19: #{conv2d_to_latent_forward.8} parent=0 // pred_check_branch
    %781 = sbr.rel (0) target = $region21
  $region20: #{conv2d_to_latent_forward.8} parent=0 // pred_region
    _
  $region21: #{conv2d_to_latent_forward.8} parent=0 // pred_fallthru
    _

// kernel: conv2d_to_latent_forward.10
$region0: #{conv2d_to_latent_forward.10}
  #allocation0 [shape = 'u32[]', space=smem, size = 0x4, offset = 0x4, fixed_abs, tag = 'smem constant byte address 0x4 - core index']
  #allocation1 [shape = 'u32[144,128]{1,0:T(1,128)}', space=vmem, size = 0x12000, scoped, tag = 'internal scratch']
  #allocation2 [shape = 'f32[2,128]{1,0:T(2,128)}', space=vmem, size = 0x400, scoped, tag = 'scratch operand']
  %s0 = inlined_call_operand.vmem [shape: bf16[2,512], index: 0, kind: input, shape index: {}]
  %s1 = inlined_call_operand.vmem [shape: bf16[512,128], index: 1, kind: input, shape index: {}]
  %s2 = inlined_call_operand.vmem [shape: f32[1,128], index: 2, kind: input, shape index: {}]
  %s3 = inlined_call_operand.vmem [shape: bf16[2,128], index: 3, kind: output, shape index: {}]
  %s4 = sld [smem:[#allocation0]]
  $region30: #{conv2d_to_latent_forward.10} parent=0
    _
  %s6 = ssub.s32 1, %s4
  %s7 = scalar_select 0, %s6, %s4
  // Predicated region
  $region2: #{conv2d_to_latent_forward.10} parent=0 // pred_check
    _
  $region3: #{conv2d_to_latent_forward.10} parent=0 // pred_check_branch
    %9 = sbr.rel (0) target = $region5
  $region4: #{conv2d_to_latent_forward.10} parent=0 // pred_region
    _
  $region5: #{conv2d_to_latent_forward.10} parent=0 // pred_fallthru
    _
  // Predicated region
  $region6: #{conv2d_to_latent_forward.10} parent=0 // pred_check
    _
  $region7: #{conv2d_to_latent_forward.10} parent=0 // pred_check_branch
    %11 = sbr.rel (0) target = $region9
  $region8: #{conv2d_to_latent_forward.10} parent=0 // pred_region
    _
  $region9: #{conv2d_to_latent_forward.10} parent=0 // pred_fallthru
    _
  // Predicated region
  $region10: #{conv2d_to_latent_forward.10} parent=0 // pred_check
    _
  $region11: #{conv2d_to_latent_forward.10} parent=0 // pred_check_branch
    %13 = sbr.rel (0) target = $region13
  $region12: #{conv2d_to_latent_forward.10} parent=0 // pred_region
    _
  $region13: #{conv2d_to_latent_forward.10} parent=0 // pred_fallthru
    _
  %p15 = scmp.eq.s32.totalorder 0, 0
  // Predicated region
  $region14: #{conv2d_to_latent_forward.10} parent=0 // pred_check
    %p16 = pneg %p15
  $region15: #{conv2d_to_latent_forward.10} parent=0 // pred_check_branch
    %18 = sbr.rel (%p16) target = $region17
  $region16: #{conv2d_to_latent_forward.10} parent=0 // pred_region
    %19 = vst [vmem:[#allocation2] sm:$0x3] 0.0
  $region17: #{conv2d_to_latent_forward.10} parent=0 // pred_fallthru
    _
  %v20 = vld [vmem:[#allocation2] sm:$0x3]
  %v21 = vld [vmem:[%s0] sm:$0xf]
  %v22 = vld [vmem:[%s1] sm:$0xf]
  %v23 = vld [vmem:[%s1 + $0x4] sm:$0xf]
  %v24 = vld [vmem:[%s1 + $0x8] sm:$0xf]
  %v25 = vld [vmem:[%s1 + $0xc] sm:$0xf]
  %v26 = vld [vmem:[%s1 + $0x10] sm:$0xf]
  %v27 = vld [vmem:[%s1 + $0x14] sm:$0xf]
  %v28 = vld [vmem:[%s1 + $0x18] sm:$0xf]
  %v29 = vld [vmem:[%s1 + $0x1c] sm:$0xf]
  %v30 = vld [vmem:[%s1 + $0x20] sm:$0xf]
  %v31 = vld [vmem:[%s1 + $0x24] sm:$0xf]
  %v32 = vld [vmem:[%s1 + $0x28] sm:$0xf]
  %v33 = vld [vmem:[%s1 + $0x2c] sm:$0xf]
  %v34 = vld [vmem:[%s1 + $0x30] sm:$0xf]
  %v35 = vld [vmem:[%s1 + $0x34] sm:$0xf]
  %v36 = vld [vmem:[%s1 + $0x38] sm:$0xf]
  %v37 = vld [vmem:[%s1 + $0x3c] sm:$0xf]
  %v38 = vld [vmem:[%s1 + $0x40] sm:$0xf]
  %v39 = vld [vmem:[%s1 + $0x44] sm:$0xf]
  %v40 = vld [vmem:[%s1 + $0x48] sm:$0xf]
  %v41 = vld [vmem:[%s1 + $0x4c] sm:$0xf]
  %v42 = vld [vmem:[%s1 + $0x50] sm:$0xf]
  %v43 = vld [vmem:[%s1 + $0x54] sm:$0xf]
  %v44 = vld [vmem:[%s1 + $0x58] sm:$0xf]
  %v45 = vld [vmem:[%s1 + $0x5c] sm:$0xf]
  %v46 = vld [vmem:[%s1 + $0x60] sm:$0xf]
  %v47 = vld [vmem:[%s1 + $0x64] sm:$0xf]
  %v48 = vld [vmem:[%s1 + $0x68] sm:$0xf]
  %v49 = vld [vmem:[%s1 + $0x6c] sm:$0xf]
  %v50 = vld [vmem:[%s1 + $0x70] sm:$0xf]
  %v51 = vld [vmem:[%s1 + $0x74] sm:$0xf]
  %v52 = vld [vmem:[%s1 + $0x78] sm:$0xf]
  %v53 = vld [vmem:[%s1 + $0x7c] sm:$0xf]
  %v54 = vld [vmem:[%s1 + $0x80] sm:$0xf]
  %v55 = vld [vmem:[%s1 + $0x84] sm:$0xf]
  %v56 = vld [vmem:[%s1 + $0x88] sm:$0xf]
  %v57 = vld [vmem:[%s1 + $0x8c] sm:$0xf]
  %v58 = vld [vmem:[%s1 + $0x90] sm:$0xf]
  %v59 = vld [vmem:[%s1 + $0x94] sm:$0xf]
  %v60 = vld [vmem:[%s1 + $0x98] sm:$0xf]
  %v61 = vld [vmem:[%s1 + $0x9c] sm:$0xf]
  %v62 = vld [vmem:[%s1 + $0xa0] sm:$0xf]
  %v63 = vld [vmem:[%s1 + $0xa4] sm:$0xf]
  %v64 = vld [vmem:[%s1 + $0xa8] sm:$0xf]
  %v65 = vld [vmem:[%s1 + $0xac] sm:$0xf]
  %v66 = vld [vmem:[%s1 + $0xb0] sm:$0xf]
  %v67 = vld [vmem:[%s1 + $0xb4] sm:$0xf]
  %v68 = vld [vmem:[%s1 + $0xb8] sm:$0xf]
  %v69 = vld [vmem:[%s1 + $0xbc] sm:$0xf]
  %v70 = vld [vmem:[%s1 + $0xc0] sm:$0xf]
  %v71 = vld [vmem:[%s1 + $0xc4] sm:$0xf]
  %v72 = vld [vmem:[%s1 + $0xc8] sm:$0xf]
  %v73 = vld [vmem:[%s1 + $0xcc] sm:$0xf]
  %v74 = vld [vmem:[%s1 + $0xd0] sm:$0xf]
  %v75 = vld [vmem:[%s1 + $0xd4] sm:$0xf]
  %v76 = vld [vmem:[%s1 + $0xd8] sm:$0xf]
  %v77 = vld [vmem:[%s1 + $0xdc] sm:$0xf]
  %v78 = vld [vmem:[%s1 + $0xe0] sm:$0xf]
  %v79 = vld [vmem:[%s1 + $0xe4] sm:$0xf]
  %v80 = vld [vmem:[%s1 + $0xe8] sm:$0xf]
  %v81 = vld [vmem:[%s1 + $0xec] sm:$0xf]
  %v82 = vld [vmem:[%s1 + $0xf0] sm:$0xf]
  %v83 = vld [vmem:[%s1 + $0xf4] sm:$0xf]
  %v84 = vld [vmem:[%s1 + $0xf8] sm:$0xf]
  %v85 = vld [vmem:[%s1 + $0xfc] sm:$0xf]
  %v88 = vunpack.c.l.s4 1966171168
  %v89 = vunpack.c.0.s8 %v88
  %v90 = vlaneseq
  %v91 = vshrl.u32 %v90, 7
  %v92 = vsub.s32 %v89, %v91
  %v93 = vrot.slane %v21, %v92
  %v94 = vcombine.high %v93, %v93
  %v96 = vunpack.c.l.s4 1966171168
  %v97 = vunpack.c.0.s8 %v96
  %v98 = vlaneseq
  %v99 = vshrl.u32 %v98, 7
  %v100 = vsub.s32 %v97, %v99
  %v101 = vrot.slane %v93, %v100
  %v103 = vunpack.c.l.s4 1966171168
  %v104 = vunpack.c.0.s8 %v103
  %v105 = vlaneseq
  %v106 = vshrl.u32 %v105, 7
  %v107 = vsub.s32 %v104, %v106
  %v108 = vrot.slane %v94, %v107
  %v109 = vcombine.high %v101, %v101
  %v110 = vcombine.high %v108, %v108
  %v179 = vunpack.c.l.b16 %v22
  %v180 = vunpack.c.l.b16 %v23
  %v181 = vunpack.c.l.b16 %v24
  %v182 = vunpack.c.l.b16 %v25
  %v183 = vunpack.c.l.b16 %v26
  %v184 = vunpack.c.l.b16 %v27
  %v185 = vunpack.c.l.b16 %v28
  %v186 = vunpack.c.l.b16 %v29
  %v187 = vunpack.c.l.b16 %v30
  %v188 = vunpack.c.l.b16 %v31
  %v189 = vunpack.c.l.b16 %v32
  %v190 = vunpack.c.l.b16 %v33
  %v191 = vunpack.c.l.b16 %v34
  %v192 = vunpack.c.l.b16 %v35
  %v193 = vunpack.c.l.b16 %v36
  %v194 = vunpack.c.l.b16 %v37
  %v195 = vunpack.c.l.b16 %v38
  %v196 = vunpack.c.l.b16 %v39
  %v197 = vunpack.c.l.b16 %v40
  %v198 = vunpack.c.l.b16 %v41
  %v199 = vunpack.c.l.b16 %v42
  %v200 = vunpack.c.l.b16 %v43
  %v201 = vunpack.c.l.b16 %v44
  %v202 = vunpack.c.l.b16 %v45
  %v203 = vunpack.c.l.b16 %v46
  %v204 = vunpack.c.l.b16 %v47
  %v205 = vunpack.c.l.b16 %v48
  %v206 = vunpack.c.l.b16 %v49
  %v207 = vunpack.c.l.b16 %v50
  %v208 = vunpack.c.l.b16 %v51
  %v209 = vunpack.c.l.b16 %v52
  %v210 = vunpack.c.l.b16 %v53
  %v211 = vunpack.c.l.b16 %v54
  %v212 = vunpack.c.l.b16 %v55
  %v213 = vunpack.c.l.b16 %v56
  %v214 = vunpack.c.l.b16 %v57
  %v215 = vunpack.c.l.b16 %v58
  %v216 = vunpack.c.l.b16 %v59
  %v217 = vunpack.c.l.b16 %v60
  %v218 = vunpack.c.l.b16 %v61
  %v219 = vunpack.c.l.b16 %v62
  %v220 = vunpack.c.l.b16 %v63
  %v221 = vunpack.c.l.b16 %v64
  %v222 = vunpack.c.l.b16 %v65
  %v223 = vunpack.c.l.b16 %v66
  %v224 = vunpack.c.l.b16 %v67
  %v225 = vunpack.c.l.b16 %v68
  %v226 = vunpack.c.l.b16 %v69
  %v227 = vunpack.c.l.b16 %v70
  %v228 = vunpack.c.l.b16 %v71
  %v229 = vunpack.c.l.b16 %v72
  %v230 = vunpack.c.l.b16 %v73
  %v231 = vunpack.c.l.b16 %v74
  %v232 = vunpack.c.l.b16 %v75
  %v233 = vunpack.c.l.b16 %v76
  %v234 = vunpack.c.l.b16 %v77
  %v235 = vunpack.c.l.b16 %v78
  %v236 = vunpack.c.l.b16 %v79
  %v237 = vunpack.c.l.b16 %v80
  %v238 = vunpack.c.l.b16 %v81
  %v239 = vunpack.c.l.b16 %v82
  %v240 = vunpack.c.l.b16 %v83
  %v241 = vunpack.c.l.b16 %v84
  %v242 = vunpack.c.l.b16 %v85
  %v243 = vpack.c.b16 %v180, %v179
  %v244 = vpack.c.b16 %v182, %v181
  %v245 = vpack.c.b16 %v184, %v183
  %v246 = vpack.c.b16 %v186, %v185
  %v247 = vpack.c.b16 %v188, %v187
  %v248 = vpack.c.b16 %v190, %v189
  %v249 = vpack.c.b16 %v192, %v191
  %v250 = vpack.c.b16 %v194, %v193
  %v251 = vpack.c.b16 %v196, %v195
  %v252 = vpack.c.b16 %v198, %v197
  %v253 = vpack.c.b16 %v200, %v199
  %v254 = vpack.c.b16 %v202, %v201
  %v255 = vpack.c.b16 %v204, %v203
  %v256 = vpack.c.b16 %v206, %v205
  %v257 = vpack.c.b16 %v208, %v207
  %v258 = vpack.c.b16 %v210, %v209
  %v259 = vpack.c.b16 %v212, %v211
  %v260 = vpack.c.b16 %v214, %v213
  %v261 = vpack.c.b16 %v216, %v215
  %v262 = vpack.c.b16 %v218, %v217
  %v263 = vpack.c.b16 %v220, %v219
  %v264 = vpack.c.b16 %v222, %v221
  %v265 = vpack.c.b16 %v224, %v223
  %v266 = vpack.c.b16 %v226, %v225
  %v267 = vpack.c.b16 %v228, %v227
  %v268 = vpack.c.b16 %v230, %v229
  %v269 = vpack.c.b16 %v232, %v231
  %v270 = vpack.c.b16 %v234, %v233
  %v271 = vpack.c.b16 %v236, %v235
  %v272 = vpack.c.b16 %v238, %v237
  %v273 = vpack.c.b16 %v240, %v239
  %v274 = vpack.c.b16 %v242, %v241
  %307 = vmatprep.subr.bf16.mxu0 0
  %308 = vmatpush1.bf16.msra.mxu0 %v250
  %309 = vmatprep.subr.bf16.mxu0 0
  %310 = vmatpush1.bf16.msra.mxu0 %v249
  %311 = vmatprep.subr.bf16.mxu0 0
  %312 = vmatpush1.bf16.msra.mxu0 %v248
  %313 = vmatprep.subr.bf16.mxu0 0
  %314 = vmatpush1.bf16.msra.mxu0 %v247
  %315 = vmatprep.subr.bf16.mxu0 0
  %316 = vmatpush1.bf16.msra.mxu0 %v246
  %317 = vmatprep.subr.bf16.mxu0 0
  %318 = vmatpush1.bf16.msra.mxu0 %v245
  %319 = vmatprep.subr.bf16.mxu0 0
  %320 = vmatpush1.bf16.msra.mxu0 %v244
  %321 = vmatprep.subr.bf16.mxu0 0
  %322 = vmatpush1.bf16.msra.mxu0 %v243
  %323 = vmatprep.subr.bf16.mxu0 0
  %324 = vmatpush2.bf16.msra.mxu0 %v258
  %325 = vmatprep.subr.bf16.mxu0 0
  %326 = vmatpush2.bf16.msra.mxu0 %v257
  %327 = vmatprep.subr.bf16.mxu0 0
  %328 = vmatpush2.bf16.msra.mxu0 %v256
  %329 = vmatprep.subr.bf16.mxu0 0
  %330 = vmatpush2.bf16.msra.mxu0 %v255
  %331 = vmatprep.subr.bf16.mxu0 0
  %332 = vmatpush2.bf16.msra.mxu0 %v254
  %333 = vmatprep.subr.bf16.mxu0 0
  %334 = vmatpush2.bf16.msra.mxu0 %v253
  %335 = vmatprep.subr.bf16.mxu0 0
  %336 = vmatpush2.bf16.msra.mxu0 %v252
  %337 = vmatprep.subr.bf16.mxu0 0
  %338 = vmatpush2.bf16.msra.mxu0 %v251
  %339 = vmatprep.mubr.bf16.mxu0 %v108
  %340 = vmatmul.mubr.bf16.gmra.mxu0 %v101
  %v341 = vpop.f32.mrf.mxu0
  %v342 = vadd.f32 0.0, %v341
  %v343 = vpop.f32.mrf.mxu0
  %v344 = vpop.f32.mrf.mxu0
  %v345 = vpop.f32.mrf.mxu0
  %346 = vdwg.mxu0
  %347 = vmatprep.subr.bf16.mxu0 0
  %348 = vmatpush1.bf16.msra.mxu0 %v266
  %349 = vmatprep.subr.bf16.mxu0 0
  %350 = vmatpush1.bf16.msra.mxu0 %v265
  %351 = vmatprep.subr.bf16.mxu0 0
  %352 = vmatpush1.bf16.msra.mxu0 %v264
  %353 = vmatprep.subr.bf16.mxu0 0
  %354 = vmatpush1.bf16.msra.mxu0 %v263
  %355 = vmatprep.subr.bf16.mxu0 0
  %356 = vmatpush1.bf16.msra.mxu0 %v262
  %357 = vmatprep.subr.bf16.mxu0 0
  %358 = vmatpush1.bf16.msra.mxu0 %v261
  %359 = vmatprep.subr.bf16.mxu0 0
  %360 = vmatpush1.bf16.msra.mxu0 %v260
  %361 = vmatprep.subr.bf16.mxu0 0
  %362 = vmatpush1.bf16.msra.mxu0 %v259
  %363 = vmatprep.subr.bf16.mxu0 0
  %364 = vmatpush2.bf16.msra.mxu0 %v274
  %365 = vmatprep.subr.bf16.mxu0 0
  %366 = vmatpush2.bf16.msra.mxu0 %v273
  %367 = vmatprep.subr.bf16.mxu0 0
  %368 = vmatpush2.bf16.msra.mxu0 %v272
  %369 = vmatprep.subr.bf16.mxu0 0
  %370 = vmatpush2.bf16.msra.mxu0 %v271
  %371 = vmatprep.subr.bf16.mxu0 0
  %372 = vmatpush2.bf16.msra.mxu0 %v270
  %373 = vmatprep.subr.bf16.mxu0 0
  %374 = vmatpush2.bf16.msra.mxu0 %v269
  %375 = vmatprep.subr.bf16.mxu0 0
  %376 = vmatpush2.bf16.msra.mxu0 %v268
  %377 = vmatprep.subr.bf16.mxu0 0
  %378 = vmatpush2.bf16.msra.mxu0 %v267
  %379 = vmatprep.mubr.bf16.mxu0 %v110
  %380 = vmatmul.mubr.bf16.gmra.mxu0 %v109
  %v381 = vpop.f32.mrf.mxu0
  %v382 = vadd.f32 %v342, %v381
  %v383 = vpop.f32.mrf.mxu0
  %v384 = vpop.f32.mrf.mxu0
  %v385 = vpop.f32.mrf.mxu0
  %386 = vdwg.mxu0
  %v387 = vadd.f32 %v20, %v382
  %388 = vst [vmem:[#allocation2] sm:$0x3] %v387
  // Predicated region
  $region18: #{conv2d_to_latent_forward.10} parent=0 // pred_check
    %p389 = pneg %p15
  $region19: #{conv2d_to_latent_forward.10} parent=0 // pred_check_branch
    %391 = sbr.rel (%p389) target = $region21
  $region20: #{conv2d_to_latent_forward.10} parent=0 // pred_region
    %v392 = vld [vmem:[#allocation2] sm:$0x3]
    %v393 = vld [vmem:[%s2] sm:$0x1]
    %v395 = vlaneseq
    %v396 = vshrl.u32 %v395, 7
    %v397 = vsub.s32 0, %v396
    %v398 = vrot.slane %v393, %v397
    %v400 = vadd.f32 %v392, %v398
    %v401 = vmax.f32 %v400, 0.0
    %v402 = vpack.c.bf16 %v401, %v401
    %403 = vst [vmem:[%s3] sm:$0x1] %v402
  $region21: #{conv2d_to_latent_forward.10} parent=0 // pred_fallthru
    _
  // Predicated region
  $region22: #{conv2d_to_latent_forward.10} parent=0 // pred_check
    _
  $region23: #{conv2d_to_latent_forward.10} parent=0 // pred_check_branch
    %405 = sbr.rel (0) target = $region25
  $region24: #{conv2d_to_latent_forward.10} parent=0 // pred_region
    _
  $region25: #{conv2d_to_latent_forward.10} parent=0 // pred_fallthru
    _
  // Predicated region
  $region26: #{conv2d_to_latent_forward.10} parent=0 // pred_check
    _
  $region27: #{conv2d_to_latent_forward.10} parent=0 // pred_check_branch
    %407 = sbr.rel (0) target = $region29
  $region28: #{conv2d_to_latent_forward.10} parent=0 // pred_region
    _
  $region29: #{conv2d_to_latent_forward.10} parent=0 // pred_fallthru
    _

// kernel: conv2d_to_latent_forward.9
$region0: #{conv2d_to_latent_forward.9}
  #allocation0 [shape = 'u32[]', space=smem, size = 0x4, offset = 0x4, fixed_abs, tag = 'smem constant byte address 0x4 - core index']
  #allocation1 [shape = 'u32[144,128]{1,0:T(1,128)}', space=vmem, size = 0x12000, scoped, tag = 'internal scratch']
  %s0 = inlined_call_operand.vmem [shape: bf16[8,1664], index: 0, kind: input, shape index: {}]
  %s1 = inlined_call_operand.vmem [shape: bf16[1664,128], index: 1, kind: input, shape index: {}]
  %s2 = inlined_call_operand.vmem [shape: f32[1,128], index: 2, kind: input, shape index: {}]
  %s3 = inlined_call_operand.vmem [shape: bf16[8,128], index: 3, kind: output, shape index: {}]
  %s4 = sld [smem:[#allocation0]]
  $region22: #{conv2d_to_latent_forward.9} parent=0
    _
  %s6 = ssub.s32 1, %s4
  %s7 = scalar_select 0, %s6, %s4
  // Predicated region
  $region2: #{conv2d_to_latent_forward.9} parent=0 // pred_check
    _
  $region3: #{conv2d_to_latent_forward.9} parent=0 // pred_check_branch
    %9 = sbr.rel (0) target = $region5
  $region4: #{conv2d_to_latent_forward.9} parent=0 // pred_region
    _
  $region5: #{conv2d_to_latent_forward.9} parent=0 // pred_fallthru
    _
  // Predicated region
  $region6: #{conv2d_to_latent_forward.9} parent=0 // pred_check
    _
  $region7: #{conv2d_to_latent_forward.9} parent=0 // pred_check_branch
    %11 = sbr.rel (0) target = $region9
  $region8: #{conv2d_to_latent_forward.9} parent=0 // pred_region
    _
  $region9: #{conv2d_to_latent_forward.9} parent=0 // pred_fallthru
    _
  // Predicated region
  $region10: #{conv2d_to_latent_forward.9} parent=0 // pred_check
    _
  $region11: #{conv2d_to_latent_forward.9} parent=0 // pred_check_branch
    %13 = sbr.rel (0) target = $region13
  $region12: #{conv2d_to_latent_forward.9} parent=0 // pred_region
    _
  $region13: #{conv2d_to_latent_forward.9} parent=0 // pred_fallthru
    _
  %v15 = vld [vmem:[%s0] sm:$0xff]
  %v16 = vld [vmem:[%s0 + $0x8] sm:$0xff]
  %v17 = vld [vmem:[%s0 + $0x10] sm:$0xff]
  %v18 = vld [vmem:[%s0 + $0x18] sm:$0xff]
  %v19 = vld [vmem:[%s0 + $0x20] sm:$0xff]
  %v20 = vld [vmem:[%s0 + $0x28] sm:$0xff]
  %v21 = vld [vmem:[%s0 + $0x30] sm:$0xf]
  %v22 = vld [vmem:[%s1] sm:$0xf]
  %v23 = vld [vmem:[%s1 + $0x4] sm:$0xf]
  %v24 = vld [vmem:[%s1 + $0x8] sm:$0xf]
  %v25 = vld [vmem:[%s1 + $0xc] sm:$0xf]
  %v26 = vld [vmem:[%s1 + $0x10] sm:$0xf]
  %v27 = vld [vmem:[%s1 + $0x14] sm:$0xf]
  %v28 = vld [vmem:[%s1 + $0x18] sm:$0xf]
  %v29 = vld [vmem:[%s1 + $0x1c] sm:$0xf]
  %v30 = vld [vmem:[%s1 + $0x20] sm:$0xf]
  %v31 = vld [vmem:[%s1 + $0x24] sm:$0xf]
  %v32 = vld [vmem:[%s1 + $0x28] sm:$0xf]
  %v33 = vld [vmem:[%s1 + $0x2c] sm:$0xf]
  %v34 = vld [vmem:[%s1 + $0x30] sm:$0xf]
  %v35 = vld [vmem:[%s1 + $0x34] sm:$0xf]
  %v36 = vld [vmem:[%s1 + $0x38] sm:$0xf]
  %v37 = vld [vmem:[%s1 + $0x3c] sm:$0xf]
  %v38 = vld [vmem:[%s1 + $0x40] sm:$0xf]
  %v39 = vld [vmem:[%s1 + $0x44] sm:$0xf]
  %v40 = vld [vmem:[%s1 + $0x48] sm:$0xf]
  %v41 = vld [vmem:[%s1 + $0x4c] sm:$0xf]
  %v42 = vld [vmem:[%s1 + $0x50] sm:$0xf]
  %v43 = vld [vmem:[%s1 + $0x54] sm:$0xf]
  %v44 = vld [vmem:[%s1 + $0x58] sm:$0xf]
  %v45 = vld [vmem:[%s1 + $0x5c] sm:$0xf]
  %v46 = vld [vmem:[%s1 + $0x60] sm:$0xf]
  %v47 = vld [vmem:[%s1 + $0x64] sm:$0xf]
  %v48 = vld [vmem:[%s1 + $0x68] sm:$0xf]
  %v49 = vld [vmem:[%s1 + $0x6c] sm:$0xf]
  %v50 = vld [vmem:[%s1 + $0x70] sm:$0xf]
  %v51 = vld [vmem:[%s1 + $0x74] sm:$0xf]
  %v52 = vld [vmem:[%s1 + $0x78] sm:$0xf]
  %v53 = vld [vmem:[%s1 + $0x7c] sm:$0xf]
  %v54 = vld [vmem:[%s1 + $0x80] sm:$0xf]
  %v55 = vld [vmem:[%s1 + $0x84] sm:$0xf]
  %v56 = vld [vmem:[%s1 + $0x88] sm:$0xf]
  %v57 = vld [vmem:[%s1 + $0x8c] sm:$0xf]
  %v58 = vld [vmem:[%s1 + $0x90] sm:$0xf]
  %v59 = vld [vmem:[%s1 + $0x94] sm:$0xf]
  %v60 = vld [vmem:[%s1 + $0x98] sm:$0xf]
  %v61 = vld [vmem:[%s1 + $0x9c] sm:$0xf]
  %v62 = vld [vmem:[%s1 + $0xa0] sm:$0xf]
  %v63 = vld [vmem:[%s1 + $0xa4] sm:$0xf]
  %v64 = vld [vmem:[%s1 + $0xa8] sm:$0xf]
  %v65 = vld [vmem:[%s1 + $0xac] sm:$0xf]
  %v66 = vld [vmem:[%s1 + $0xb0] sm:$0xf]
  %v67 = vld [vmem:[%s1 + $0xb4] sm:$0xf]
  %v68 = vld [vmem:[%s1 + $0xb8] sm:$0xf]
  %v69 = vld [vmem:[%s1 + $0xbc] sm:$0xf]
  %v70 = vld [vmem:[%s1 + $0xc0] sm:$0xf]
  %v71 = vld [vmem:[%s1 + $0xc4] sm:$0xf]
  %v72 = vld [vmem:[%s1 + $0xc8] sm:$0xf]
  %v73 = vld [vmem:[%s1 + $0xcc] sm:$0xf]
  %v74 = vld [vmem:[%s1 + $0xd0] sm:$0xf]
  %v75 = vld [vmem:[%s1 + $0xd4] sm:$0xf]
  %v76 = vld [vmem:[%s1 + $0xd8] sm:$0xf]
  %v77 = vld [vmem:[%s1 + $0xdc] sm:$0xf]
  %v78 = vld [vmem:[%s1 + $0xe0] sm:$0xf]
  %v79 = vld [vmem:[%s1 + $0xe4] sm:$0xf]
  %v80 = vld [vmem:[%s1 + $0xe8] sm:$0xf]
  %v81 = vld [vmem:[%s1 + $0xec] sm:$0xf]
  %v82 = vld [vmem:[%s1 + $0xf0] sm:$0xf]
  %v83 = vld [vmem:[%s1 + $0xf4] sm:$0xf]
  %v84 = vld [vmem:[%s1 + $0xf8] sm:$0xf]
  %v85 = vld [vmem:[%s1 + $0xfc] sm:$0xf]
  %v86 = vld [vmem:[%s1 + $0x100] sm:$0xf]
  %v87 = vld [vmem:[%s1 + $0x104] sm:$0xf]
  %v88 = vld [vmem:[%s1 + $0x108] sm:$0xf]
  %v89 = vld [vmem:[%s1 + $0x10c] sm:$0xf]
  %v90 = vld [vmem:[%s1 + $0x110] sm:$0xf]
  %v91 = vld [vmem:[%s1 + $0x114] sm:$0xf]
  %v92 = vld [vmem:[%s1 + $0x118] sm:$0xf]
  %v93 = vld [vmem:[%s1 + $0x11c] sm:$0xf]
  %v94 = vld [vmem:[%s1 + $0x120] sm:$0xf]
  %v95 = vld [vmem:[%s1 + $0x124] sm:$0xf]
  %v96 = vld [vmem:[%s1 + $0x128] sm:$0xf]
  %v97 = vld [vmem:[%s1 + $0x12c] sm:$0xf]
  %v98 = vld [vmem:[%s1 + $0x130] sm:$0xf]
  %v99 = vld [vmem:[%s1 + $0x134] sm:$0xf]
  %v100 = vld [vmem:[%s1 + $0x138] sm:$0xf]
  %v101 = vld [vmem:[%s1 + $0x13c] sm:$0xf]
  %v102 = vld [vmem:[%s1 + $0x140] sm:$0xf]
  %v103 = vld [vmem:[%s1 + $0x144] sm:$0xf]
  %v104 = vld [vmem:[%s1 + $0x148] sm:$0xf]
  %v105 = vld [vmem:[%s1 + $0x14c] sm:$0xf]
  %v106 = vld [vmem:[%s1 + $0x150] sm:$0xf]
  %v107 = vld [vmem:[%s1 + $0x154] sm:$0xf]
  %v108 = vld [vmem:[%s1 + $0x158] sm:$0xf]
  %v109 = vld [vmem:[%s1 + $0x15c] sm:$0xf]
  %v110 = vld [vmem:[%s1 + $0x160] sm:$0xf]
  %v111 = vld [vmem:[%s1 + $0x164] sm:$0xf]
  %v112 = vld [vmem:[%s1 + $0x168] sm:$0xf]
  %v113 = vld [vmem:[%s1 + $0x16c] sm:$0xf]
  %v114 = vld [vmem:[%s1 + $0x170] sm:$0xf]
  %v115 = vld [vmem:[%s1 + $0x174] sm:$0xf]
  %v116 = vld [vmem:[%s1 + $0x178] sm:$0xf]
  %v117 = vld [vmem:[%s1 + $0x17c] sm:$0xf]
  %v118 = vld [vmem:[%s1 + $0x180] sm:$0xf]
  %v119 = vld [vmem:[%s1 + $0x184] sm:$0xf]
  %v120 = vld [vmem:[%s1 + $0x188] sm:$0xf]
  %v121 = vld [vmem:[%s1 + $0x18c] sm:$0xf]
  %v122 = vld [vmem:[%s1 + $0x190] sm:$0xf]
  %v123 = vld [vmem:[%s1 + $0x194] sm:$0xf]
  %v124 = vld [vmem:[%s1 + $0x198] sm:$0xf]
  %v125 = vld [vmem:[%s1 + $0x19c] sm:$0xf]
  %v126 = vld [vmem:[%s1 + $0x1a0] sm:$0xf]
  %v127 = vld [vmem:[%s1 + $0x1a4] sm:$0xf]
  %v128 = vld [vmem:[%s1 + $0x1a8] sm:$0xf]
  %v129 = vld [vmem:[%s1 + $0x1ac] sm:$0xf]
  %v130 = vld [vmem:[%s1 + $0x1b0] sm:$0xf]
  %v131 = vld [vmem:[%s1 + $0x1b4] sm:$0xf]
  %v132 = vld [vmem:[%s1 + $0x1b8] sm:$0xf]
  %v133 = vld [vmem:[%s1 + $0x1bc] sm:$0xf]
  %v134 = vld [vmem:[%s1 + $0x1c0] sm:$0xf]
  %v135 = vld [vmem:[%s1 + $0x1c4] sm:$0xf]
  %v136 = vld [vmem:[%s1 + $0x1c8] sm:$0xf]
  %v137 = vld [vmem:[%s1 + $0x1cc] sm:$0xf]
  %v138 = vld [vmem:[%s1 + $0x1d0] sm:$0xf]
  %v139 = vld [vmem:[%s1 + $0x1d4] sm:$0xf]
  %v140 = vld [vmem:[%s1 + $0x1d8] sm:$0xf]
  %v141 = vld [vmem:[%s1 + $0x1dc] sm:$0xf]
  %v142 = vld [vmem:[%s1 + $0x1e0] sm:$0xf]
  %v143 = vld [vmem:[%s1 + $0x1e4] sm:$0xf]
  %v144 = vld [vmem:[%s1 + $0x1e8] sm:$0xf]
  %v145 = vld [vmem:[%s1 + $0x1ec] sm:$0xf]
  %v146 = vld [vmem:[%s1 + $0x1f0] sm:$0xf]
  %v147 = vld [vmem:[%s1 + $0x1f4] sm:$0xf]
  %v148 = vld [vmem:[%s1 + $0x1f8] sm:$0xf]
  %v149 = vld [vmem:[%s1 + $0x1fc] sm:$0xf]
  %v150 = vld [vmem:[%s1 + $0x200] sm:$0xf]
  %v151 = vld [vmem:[%s1 + $0x204] sm:$0xf]
  %v152 = vld [vmem:[%s1 + $0x208] sm:$0xf]
  %v153 = vld [vmem:[%s1 + $0x20c] sm:$0xf]
  %v154 = vld [vmem:[%s1 + $0x210] sm:$0xf]
  %v155 = vld [vmem:[%s1 + $0x214] sm:$0xf]
  %v156 = vld [vmem:[%s1 + $0x218] sm:$0xf]
  %v157 = vld [vmem:[%s1 + $0x21c] sm:$0xf]
  %v158 = vld [vmem:[%s1 + $0x220] sm:$0xf]
  %v159 = vld [vmem:[%s1 + $0x224] sm:$0xf]
  %v160 = vld [vmem:[%s1 + $0x228] sm:$0xf]
  %v161 = vld [vmem:[%s1 + $0x22c] sm:$0xf]
  %v162 = vld [vmem:[%s1 + $0x230] sm:$0xf]
  %v163 = vld [vmem:[%s1 + $0x234] sm:$0xf]
  %v164 = vld [vmem:[%s1 + $0x238] sm:$0xf]
  %v165 = vld [vmem:[%s1 + $0x23c] sm:$0xf]
  %v166 = vld [vmem:[%s1 + $0x240] sm:$0xf]
  %v167 = vld [vmem:[%s1 + $0x244] sm:$0xf]
  %v168 = vld [vmem:[%s1 + $0x248] sm:$0xf]
  %v169 = vld [vmem:[%s1 + $0x24c] sm:$0xf]
  %v170 = vld [vmem:[%s1 + $0x250] sm:$0xf]
  %v171 = vld [vmem:[%s1 + $0x254] sm:$0xf]
  %v172 = vld [vmem:[%s1 + $0x258] sm:$0xf]
  %v173 = vld [vmem:[%s1 + $0x25c] sm:$0xf]
  %v174 = vld [vmem:[%s1 + $0x260] sm:$0xf]
  %v175 = vld [vmem:[%s1 + $0x264] sm:$0xf]
  %v176 = vld [vmem:[%s1 + $0x268] sm:$0xf]
  %v177 = vld [vmem:[%s1 + $0x26c] sm:$0xf]
  %v178 = vld [vmem:[%s1 + $0x270] sm:$0xf]
  %v179 = vld [vmem:[%s1 + $0x274] sm:$0xf]
  %v180 = vld [vmem:[%s1 + $0x278] sm:$0xf]
  %v181 = vld [vmem:[%s1 + $0x27c] sm:$0xf]
  %v182 = vld [vmem:[%s1 + $0x280] sm:$0xf]
  %v183 = vld [vmem:[%s1 + $0x284] sm:$0xf]
  %v184 = vld [vmem:[%s1 + $0x288] sm:$0xf]
  %v185 = vld [vmem:[%s1 + $0x28c] sm:$0xf]
  %v186 = vld [vmem:[%s1 + $0x290] sm:$0xf]
  %v187 = vld [vmem:[%s1 + $0x294] sm:$0xf]
  %v188 = vld [vmem:[%s1 + $0x298] sm:$0xf]
  %v189 = vld [vmem:[%s1 + $0x29c] sm:$0xf]
  %v190 = vld [vmem:[%s1 + $0x2a0] sm:$0xf]
  %v191 = vld [vmem:[%s1 + $0x2a4] sm:$0xf]
  %v192 = vld [vmem:[%s1 + $0x2a8] sm:$0xf]
  %v193 = vld [vmem:[%s1 + $0x2ac] sm:$0xf]
  %v194 = vld [vmem:[%s1 + $0x2b0] sm:$0xf]
  %v195 = vld [vmem:[%s1 + $0x2b4] sm:$0xf]
  %v196 = vld [vmem:[%s1 + $0x2b8] sm:$0xf]
  %v197 = vld [vmem:[%s1 + $0x2bc] sm:$0xf]
  %v198 = vld [vmem:[%s1 + $0x2c0] sm:$0xf]
  %v199 = vld [vmem:[%s1 + $0x2c4] sm:$0xf]
  %v200 = vld [vmem:[%s1 + $0x2c8] sm:$0xf]
  %v201 = vld [vmem:[%s1 + $0x2cc] sm:$0xf]
  %v202 = vld [vmem:[%s1 + $0x2d0] sm:$0xf]
  %v203 = vld [vmem:[%s1 + $0x2d4] sm:$0xf]
  %v204 = vld [vmem:[%s1 + $0x2d8] sm:$0xf]
  %v205 = vld [vmem:[%s1 + $0x2dc] sm:$0xf]
  %v206 = vld [vmem:[%s1 + $0x2e0] sm:$0xf]
  %v207 = vld [vmem:[%s1 + $0x2e4] sm:$0xf]
  %v208 = vld [vmem:[%s1 + $0x2e8] sm:$0xf]
  %v209 = vld [vmem:[%s1 + $0x2ec] sm:$0xf]
  %v210 = vld [vmem:[%s1 + $0x2f0] sm:$0xf]
  %v211 = vld [vmem:[%s1 + $0x2f4] sm:$0xf]
  %v212 = vld [vmem:[%s1 + $0x2f8] sm:$0xf]
  %v213 = vld [vmem:[%s1 + $0x2fc] sm:$0xf]
  %v214 = vld [vmem:[%s1 + $0x300] sm:$0xf]
  %v215 = vld [vmem:[%s1 + $0x304] sm:$0xf]
  %v216 = vld [vmem:[%s1 + $0x308] sm:$0xf]
  %v217 = vld [vmem:[%s1 + $0x30c] sm:$0xf]
  %v218 = vld [vmem:[%s1 + $0x310] sm:$0xf]
  %v219 = vld [vmem:[%s1 + $0x314] sm:$0xf]
  %v220 = vld [vmem:[%s1 + $0x318] sm:$0xf]
  %v221 = vld [vmem:[%s1 + $0x31c] sm:$0xf]
  %v222 = vld [vmem:[%s1 + $0x320] sm:$0xf]
  %v223 = vld [vmem:[%s1 + $0x324] sm:$0xf]
  %v224 = vld [vmem:[%s1 + $0x328] sm:$0xf]
  %v225 = vld [vmem:[%s1 + $0x32c] sm:$0xf]
  %v226 = vld [vmem:[%s1 + $0x330] sm:$0xf]
  %v227 = vld [vmem:[%s1 + $0x334] sm:$0xf]
  %v228 = vld [vmem:[%s1 + $0x338] sm:$0xf]
  %v229 = vld [vmem:[%s1 + $0x33c] sm:$0xf]
  %v230 = vld [vmem:[%s2] sm:$0x1]
  %v232 = vlaneseq
  %v233 = vshrl.u32 %v232, 7
  %v234 = vsub.s32 0, %v233
  %v235 = vrot.slane %v230, %v234
  %v244 = vunpack.c.l.b16 %v15
  %v245 = vunpack.c.h.b16 %v15
  %v246 = vunpack.c.l.b16 %v16
  %v247 = vunpack.c.h.b16 %v16
  %v248 = vunpack.c.l.b16 %v17
  %v249 = vunpack.c.h.b16 %v17
  %v250 = vunpack.c.l.b16 %v18
  %v251 = vunpack.c.h.b16 %v18
  %v252 = vunpack.c.l.b16 %v19
  %v253 = vunpack.c.h.b16 %v19
  %v254 = vunpack.c.l.b16 %v20
  %v255 = vunpack.c.h.b16 %v20
  %v256 = vunpack.c.l.b16 %v21
  %v257 = vpack.c.b16 %v244, %v244
  %v258 = vpack.c.b16 %v245, %v245
  %v259 = vpack.c.b16 %v246, %v246
  %v260 = vpack.c.b16 %v247, %v247
  %v261 = vpack.c.b16 %v248, %v248
  %v262 = vpack.c.b16 %v249, %v249
  %v263 = vpack.c.b16 %v250, %v250
  %v264 = vpack.c.b16 %v251, %v251
  %v265 = vpack.c.b16 %v252, %v252
  %v266 = vpack.c.b16 %v253, %v253
  %v267 = vpack.c.b16 %v254, %v254
  %v268 = vpack.c.b16 %v255, %v255
  %v269 = vpack.c.b16 %v256, %v256
  %v491 = vunpack.c.l.b16 %v22
  %v492 = vunpack.c.l.b16 %v23
  %v493 = vunpack.c.l.b16 %v24
  %v494 = vunpack.c.l.b16 %v25
  %v495 = vunpack.c.l.b16 %v26
  %v496 = vunpack.c.l.b16 %v27
  %v497 = vunpack.c.l.b16 %v28
  %v498 = vunpack.c.l.b16 %v29
  %v499 = vunpack.c.l.b16 %v30
  %v500 = vunpack.c.l.b16 %v31
  %v501 = vunpack.c.l.b16 %v32
  %v502 = vunpack.c.l.b16 %v33
  %v503 = vunpack.c.l.b16 %v34
  %v504 = vunpack.c.l.b16 %v35
  %v505 = vunpack.c.l.b16 %v36
  %v506 = vunpack.c.l.b16 %v37
  %v507 = vunpack.c.l.b16 %v38
  %v508 = vunpack.c.l.b16 %v39
  %v509 = vunpack.c.l.b16 %v40
  %v510 = vunpack.c.l.b16 %v41
  %v511 = vunpack.c.l.b16 %v42
  %v512 = vunpack.c.l.b16 %v43
  %v513 = vunpack.c.l.b16 %v44
  %v514 = vunpack.c.l.b16 %v45
  %v515 = vunpack.c.l.b16 %v46
  %v516 = vunpack.c.l.b16 %v47
  %v517 = vunpack.c.l.b16 %v48
  %v518 = vunpack.c.l.b16 %v49
  %v519 = vunpack.c.l.b16 %v50
  %v520 = vunpack.c.l.b16 %v51
  %v521 = vunpack.c.l.b16 %v52
  %v522 = vunpack.c.l.b16 %v53
  %v523 = vunpack.c.l.b16 %v54
  %v524 = vunpack.c.l.b16 %v55
  %v525 = vunpack.c.l.b16 %v56
  %v526 = vunpack.c.l.b16 %v57
  %v527 = vunpack.c.l.b16 %v58
  %v528 = vunpack.c.l.b16 %v59
  %v529 = vunpack.c.l.b16 %v60
  %v530 = vunpack.c.l.b16 %v61
  %v531 = vunpack.c.l.b16 %v62
  %v532 = vunpack.c.l.b16 %v63
  %v533 = vunpack.c.l.b16 %v64
  %v534 = vunpack.c.l.b16 %v65
  %v535 = vunpack.c.l.b16 %v66
  %v536 = vunpack.c.l.b16 %v67
  %v537 = vunpack.c.l.b16 %v68
  %v538 = vunpack.c.l.b16 %v69
  %v539 = vunpack.c.l.b16 %v70
  %v540 = vunpack.c.l.b16 %v71
  %v541 = vunpack.c.l.b16 %v72
  %v542 = vunpack.c.l.b16 %v73
  %v543 = vunpack.c.l.b16 %v74
  %v544 = vunpack.c.l.b16 %v75
  %v545 = vunpack.c.l.b16 %v76
  %v546 = vunpack.c.l.b16 %v77
  %v547 = vunpack.c.l.b16 %v78
  %v548 = vunpack.c.l.b16 %v79
  %v549 = vunpack.c.l.b16 %v80
  %v550 = vunpack.c.l.b16 %v81
  %v551 = vunpack.c.l.b16 %v82
  %v552 = vunpack.c.l.b16 %v83
  %v553 = vunpack.c.l.b16 %v84
  %v554 = vunpack.c.l.b16 %v85
  %v555 = vunpack.c.l.b16 %v86
  %v556 = vunpack.c.l.b16 %v87
  %v557 = vunpack.c.l.b16 %v88
  %v558 = vunpack.c.l.b16 %v89
  %v559 = vunpack.c.l.b16 %v90
  %v560 = vunpack.c.l.b16 %v91
  %v561 = vunpack.c.l.b16 %v92
  %v562 = vunpack.c.l.b16 %v93
  %v563 = vunpack.c.l.b16 %v94
  %v564 = vunpack.c.l.b16 %v95
  %v565 = vunpack.c.l.b16 %v96
  %v566 = vunpack.c.l.b16 %v97
  %v567 = vunpack.c.l.b16 %v98
  %v568 = vunpack.c.l.b16 %v99
  %v569 = vunpack.c.l.b16 %v100
  %v570 = vunpack.c.l.b16 %v101
  %v571 = vunpack.c.l.b16 %v102
  %v572 = vunpack.c.l.b16 %v103
  %v573 = vunpack.c.l.b16 %v104
  %v574 = vunpack.c.l.b16 %v105
  %v575 = vunpack.c.l.b16 %v106
  %v576 = vunpack.c.l.b16 %v107
  %v577 = vunpack.c.l.b16 %v108
  %v578 = vunpack.c.l.b16 %v109
  %v579 = vunpack.c.l.b16 %v110
  %v580 = vunpack.c.l.b16 %v111
  %v581 = vunpack.c.l.b16 %v112
  %v582 = vunpack.c.l.b16 %v113
  %v583 = vunpack.c.l.b16 %v114
  %v584 = vunpack.c.l.b16 %v115
  %v585 = vunpack.c.l.b16 %v116
  %v586 = vunpack.c.l.b16 %v117
  %v587 = vunpack.c.l.b16 %v118
  %v588 = vunpack.c.l.b16 %v119
  %v589 = vunpack.c.l.b16 %v120
  %v590 = vunpack.c.l.b16 %v121
  %v591 = vunpack.c.l.b16 %v122
  %v592 = vunpack.c.l.b16 %v123
  %v593 = vunpack.c.l.b16 %v124
  %v594 = vunpack.c.l.b16 %v125
  %v595 = vunpack.c.l.b16 %v126
  %v596 = vunpack.c.l.b16 %v127
  %v597 = vunpack.c.l.b16 %v128
  %v598 = vunpack.c.l.b16 %v129
  %v599 = vunpack.c.l.b16 %v130
  %v600 = vunpack.c.l.b16 %v131
  %v601 = vunpack.c.l.b16 %v132
  %v602 = vunpack.c.l.b16 %v133
  %v603 = vunpack.c.l.b16 %v134
  %v604 = vunpack.c.l.b16 %v135
  %v605 = vunpack.c.l.b16 %v136
  %v606 = vunpack.c.l.b16 %v137
  %v607 = vunpack.c.l.b16 %v138
  %v608 = vunpack.c.l.b16 %v139
  %v609 = vunpack.c.l.b16 %v140
  %v610 = vunpack.c.l.b16 %v141
  %v611 = vunpack.c.l.b16 %v142
  %v612 = vunpack.c.l.b16 %v143
  %v613 = vunpack.c.l.b16 %v144
  %v614 = vunpack.c.l.b16 %v145
  %v615 = vunpack.c.l.b16 %v146
  %v616 = vunpack.c.l.b16 %v147
  %v617 = vunpack.c.l.b16 %v148
  %v618 = vunpack.c.l.b16 %v149
  %v619 = vunpack.c.l.b16 %v150
  %v620 = vunpack.c.l.b16 %v151
  %v621 = vunpack.c.l.b16 %v152
  %v622 = vunpack.c.l.b16 %v153
  %v623 = vunpack.c.l.b16 %v154
  %v624 = vunpack.c.l.b16 %v155
  %v625 = vunpack.c.l.b16 %v156
  %v626 = vunpack.c.l.b16 %v157
  %v627 = vunpack.c.l.b16 %v158
  %v628 = vunpack.c.l.b16 %v159
  %v629 = vunpack.c.l.b16 %v160
  %v630 = vunpack.c.l.b16 %v161
  %v631 = vunpack.c.l.b16 %v162
  %v632 = vunpack.c.l.b16 %v163
  %v633 = vunpack.c.l.b16 %v164
  %v634 = vunpack.c.l.b16 %v165
  %v635 = vunpack.c.l.b16 %v166
  %v636 = vunpack.c.l.b16 %v167
  %v637 = vunpack.c.l.b16 %v168
  %v638 = vunpack.c.l.b16 %v169
  %v639 = vunpack.c.l.b16 %v170
  %v640 = vunpack.c.l.b16 %v171
  %v641 = vunpack.c.l.b16 %v172
  %v642 = vunpack.c.l.b16 %v173
  %v643 = vunpack.c.l.b16 %v174
  %v644 = vunpack.c.l.b16 %v175
  %v645 = vunpack.c.l.b16 %v176
  %v646 = vunpack.c.l.b16 %v177
  %v647 = vunpack.c.l.b16 %v178
  %v648 = vunpack.c.l.b16 %v179
  %v649 = vunpack.c.l.b16 %v180
  %v650 = vunpack.c.l.b16 %v181
  %v651 = vunpack.c.l.b16 %v182
  %v652 = vunpack.c.l.b16 %v183
  %v653 = vunpack.c.l.b16 %v184
  %v654 = vunpack.c.l.b16 %v185
  %v655 = vunpack.c.l.b16 %v186
  %v656 = vunpack.c.l.b16 %v187
  %v657 = vunpack.c.l.b16 %v188
  %v658 = vunpack.c.l.b16 %v189
  %v659 = vunpack.c.l.b16 %v190
  %v660 = vunpack.c.l.b16 %v191
  %v661 = vunpack.c.l.b16 %v192
  %v662 = vunpack.c.l.b16 %v193
  %v663 = vunpack.c.l.b16 %v194
  %v664 = vunpack.c.l.b16 %v195
  %v665 = vunpack.c.l.b16 %v196
  %v666 = vunpack.c.l.b16 %v197
  %v667 = vunpack.c.l.b16 %v198
  %v668 = vunpack.c.l.b16 %v199
  %v669 = vunpack.c.l.b16 %v200
  %v670 = vunpack.c.l.b16 %v201
  %v671 = vunpack.c.l.b16 %v202
  %v672 = vunpack.c.l.b16 %v203
  %v673 = vunpack.c.l.b16 %v204
  %v674 = vunpack.c.l.b16 %v205
  %v675 = vunpack.c.l.b16 %v206
  %v676 = vunpack.c.l.b16 %v207
  %v677 = vunpack.c.l.b16 %v208
  %v678 = vunpack.c.l.b16 %v209
  %v679 = vunpack.c.l.b16 %v210
  %v680 = vunpack.c.l.b16 %v211
  %v681 = vunpack.c.l.b16 %v212
  %v682 = vunpack.c.l.b16 %v213
  %v683 = vunpack.c.l.b16 %v214
  %v684 = vunpack.c.l.b16 %v215
  %v685 = vunpack.c.l.b16 %v216
  %v686 = vunpack.c.l.b16 %v217
  %v687 = vunpack.c.l.b16 %v218
  %v688 = vunpack.c.l.b16 %v219
  %v689 = vunpack.c.l.b16 %v220
  %v690 = vunpack.c.l.b16 %v221
  %v691 = vunpack.c.l.b16 %v222
  %v692 = vunpack.c.l.b16 %v223
  %v693 = vunpack.c.l.b16 %v224
  %v694 = vunpack.c.l.b16 %v225
  %v695 = vunpack.c.l.b16 %v226
  %v696 = vunpack.c.l.b16 %v227
  %v697 = vunpack.c.l.b16 %v228
  %v698 = vunpack.c.l.b16 %v229
  %v699 = vpack.c.b16 %v492, %v491
  %v700 = vpack.c.b16 %v494, %v493
  %v701 = vpack.c.b16 %v496, %v495
  %v702 = vpack.c.b16 %v498, %v497
  %v703 = vpack.c.b16 %v500, %v499
  %v704 = vpack.c.b16 %v502, %v501
  %v705 = vpack.c.b16 %v504, %v503
  %v706 = vpack.c.b16 %v506, %v505
  %v707 = vpack.c.b16 %v508, %v507
  %v708 = vpack.c.b16 %v510, %v509
  %v709 = vpack.c.b16 %v512, %v511
  %v710 = vpack.c.b16 %v514, %v513
  %v711 = vpack.c.b16 %v516, %v515
  %v712 = vpack.c.b16 %v518, %v517
  %v713 = vpack.c.b16 %v520, %v519
  %v714 = vpack.c.b16 %v522, %v521
  %v715 = vpack.c.b16 %v524, %v523
  %v716 = vpack.c.b16 %v526, %v525
  %v717 = vpack.c.b16 %v528, %v527
  %v718 = vpack.c.b16 %v530, %v529
  %v719 = vpack.c.b16 %v532, %v531
  %v720 = vpack.c.b16 %v534, %v533
  %v721 = vpack.c.b16 %v536, %v535
  %v722 = vpack.c.b16 %v538, %v537
  %v723 = vpack.c.b16 %v540, %v539
  %v724 = vpack.c.b16 %v542, %v541
  %v725 = vpack.c.b16 %v544, %v543
  %v726 = vpack.c.b16 %v546, %v545
  %v727 = vpack.c.b16 %v548, %v547
  %v728 = vpack.c.b16 %v550, %v549
  %v729 = vpack.c.b16 %v552, %v551
  %v730 = vpack.c.b16 %v554, %v553
  %v731 = vpack.c.b16 %v556, %v555
  %v732 = vpack.c.b16 %v558, %v557
  %v733 = vpack.c.b16 %v560, %v559
  %v734 = vpack.c.b16 %v562, %v561
  %v735 = vpack.c.b16 %v564, %v563
  %v736 = vpack.c.b16 %v566, %v565
  %v737 = vpack.c.b16 %v568, %v567
  %v738 = vpack.c.b16 %v570, %v569
  %v739 = vpack.c.b16 %v572, %v571
  %v740 = vpack.c.b16 %v574, %v573
  %v741 = vpack.c.b16 %v576, %v575
  %v742 = vpack.c.b16 %v578, %v577
  %v743 = vpack.c.b16 %v580, %v579
  %v744 = vpack.c.b16 %v582, %v581
  %v745 = vpack.c.b16 %v584, %v583
  %v746 = vpack.c.b16 %v586, %v585
  %v747 = vpack.c.b16 %v588, %v587
  %v748 = vpack.c.b16 %v590, %v589
  %v749 = vpack.c.b16 %v592, %v591
  %v750 = vpack.c.b16 %v594, %v593
  %v751 = vpack.c.b16 %v596, %v595
  %v752 = vpack.c.b16 %v598, %v597
  %v753 = vpack.c.b16 %v600, %v599
  %v754 = vpack.c.b16 %v602, %v601
  %v755 = vpack.c.b16 %v604, %v603
  %v756 = vpack.c.b16 %v606, %v605
  %v757 = vpack.c.b16 %v608, %v607
  %v758 = vpack.c.b16 %v610, %v609
  %v759 = vpack.c.b16 %v612, %v611
  %v760 = vpack.c.b16 %v614, %v613
  %v761 = vpack.c.b16 %v616, %v615
  %v762 = vpack.c.b16 %v618, %v617
  %v763 = vpack.c.b16 %v620, %v619
  %v764 = vpack.c.b16 %v622, %v621
  %v765 = vpack.c.b16 %v624, %v623
  %v766 = vpack.c.b16 %v626, %v625
  %v767 = vpack.c.b16 %v628, %v627
  %v768 = vpack.c.b16 %v630, %v629
  %v769 = vpack.c.b16 %v632, %v631
  %v770 = vpack.c.b16 %v634, %v633
  %v771 = vpack.c.b16 %v636, %v635
  %v772 = vpack.c.b16 %v638, %v637
  %v773 = vpack.c.b16 %v640, %v639
  %v774 = vpack.c.b16 %v642, %v641
  %v775 = vpack.c.b16 %v644, %v643
  %v776 = vpack.c.b16 %v646, %v645
  %v777 = vpack.c.b16 %v648, %v647
  %v778 = vpack.c.b16 %v650, %v649
  %v779 = vpack.c.b16 %v652, %v651
  %v780 = vpack.c.b16 %v654, %v653
  %v781 = vpack.c.b16 %v656, %v655
  %v782 = vpack.c.b16 %v658, %v657
  %v783 = vpack.c.b16 %v660, %v659
  %v784 = vpack.c.b16 %v662, %v661
  %v785 = vpack.c.b16 %v664, %v663
  %v786 = vpack.c.b16 %v666, %v665
  %v787 = vpack.c.b16 %v668, %v667
  %v788 = vpack.c.b16 %v670, %v669
  %v789 = vpack.c.b16 %v672, %v671
  %v790 = vpack.c.b16 %v674, %v673
  %v791 = vpack.c.b16 %v676, %v675
  %v792 = vpack.c.b16 %v678, %v677
  %v793 = vpack.c.b16 %v680, %v679
  %v794 = vpack.c.b16 %v682, %v681
  %v795 = vpack.c.b16 %v684, %v683
  %v796 = vpack.c.b16 %v686, %v685
  %v797 = vpack.c.b16 %v688, %v687
  %v798 = vpack.c.b16 %v690, %v689
  %v799 = vpack.c.b16 %v692, %v691
  %v800 = vpack.c.b16 %v694, %v693
  %v801 = vpack.c.b16 %v696, %v695
  %v802 = vpack.c.b16 %v698, %v697
  %907 = vmatprep.subr.bf16.mxu0 0
  %908 = vmatpush1.bf16.msra.mxu0 %v706
  %909 = vmatprep.subr.bf16.mxu0 0
  %910 = vmatpush1.bf16.msra.mxu0 %v705
  %911 = vmatprep.subr.bf16.mxu0 0
  %912 = vmatpush1.bf16.msra.mxu0 %v704
  %913 = vmatprep.subr.bf16.mxu0 0
  %914 = vmatpush1.bf16.msra.mxu0 %v703
  %915 = vmatprep.subr.bf16.mxu0 0
  %916 = vmatpush1.bf16.msra.mxu0 %v702
  %917 = vmatprep.subr.bf16.mxu0 0
  %918 = vmatpush1.bf16.msra.mxu0 %v701
  %919 = vmatprep.subr.bf16.mxu0 0
  %920 = vmatpush1.bf16.msra.mxu0 %v700
  %921 = vmatprep.subr.bf16.mxu0 0
  %922 = vmatpush1.bf16.msra.mxu0 %v699
  %923 = vmatprep.subr.bf16.mxu0 0
  %924 = vmatpush2.bf16.msra.mxu0 %v714
  %925 = vmatprep.subr.bf16.mxu0 0
  %926 = vmatpush2.bf16.msra.mxu0 %v713
  %927 = vmatprep.subr.bf16.mxu0 0
  %928 = vmatpush2.bf16.msra.mxu0 %v712
  %929 = vmatprep.subr.bf16.mxu0 0
  %930 = vmatpush2.bf16.msra.mxu0 %v711
  %931 = vmatprep.subr.bf16.mxu0 0
  %932 = vmatpush2.bf16.msra.mxu0 %v710
  %933 = vmatprep.subr.bf16.mxu0 0
  %934 = vmatpush2.bf16.msra.mxu0 %v709
  %935 = vmatprep.subr.bf16.mxu0 0
  %936 = vmatpush2.bf16.msra.mxu0 %v708
  %937 = vmatprep.subr.bf16.mxu0 0
  %938 = vmatpush2.bf16.msra.mxu0 %v707
  %939 = vmatprep.mubr.bf16.mxu0 %v258
  %940 = vmatmul.mubr.bf16.gmra.mxu0 %v257
  %v941 = vpop.f32.mrf.mxu0
  %v942 = vadd.f32 %v235, %v941
  %v943 = vpop.f32.mrf.mxu0
  %v944 = vpop.f32.mrf.mxu0
  %v945 = vpop.f32.mrf.mxu0
  %946 = vdwg.mxu0
  %947 = vmatprep.subr.bf16.mxu0 0
  %948 = vmatpush1.bf16.msra.mxu0 %v722
  %949 = vmatprep.subr.bf16.mxu0 0
  %950 = vmatpush1.bf16.msra.mxu0 %v721
  %951 = vmatprep.subr.bf16.mxu0 0
  %952 = vmatpush1.bf16.msra.mxu0 %v720
  %953 = vmatprep.subr.bf16.mxu0 0
  %954 = vmatpush1.bf16.msra.mxu0 %v719
  %955 = vmatprep.subr.bf16.mxu0 0
  %956 = vmatpush1.bf16.msra.mxu0 %v718
  %957 = vmatprep.subr.bf16.mxu0 0
  %958 = vmatpush1.bf16.msra.mxu0 %v717
  %959 = vmatprep.subr.bf16.mxu0 0
  %960 = vmatpush1.bf16.msra.mxu0 %v716
  %961 = vmatprep.subr.bf16.mxu0 0
  %962 = vmatpush1.bf16.msra.mxu0 %v715
  %963 = vmatprep.subr.bf16.mxu0 0
  %964 = vmatpush2.bf16.msra.mxu0 %v730
  %965 = vmatprep.subr.bf16.mxu0 0
  %966 = vmatpush2.bf16.msra.mxu0 %v729
  %967 = vmatprep.subr.bf16.mxu0 0
  %968 = vmatpush2.bf16.msra.mxu0 %v728
  %969 = vmatprep.subr.bf16.mxu0 0
  %970 = vmatpush2.bf16.msra.mxu0 %v727
  %971 = vmatprep.subr.bf16.mxu0 0
  %972 = vmatpush2.bf16.msra.mxu0 %v726
  %973 = vmatprep.subr.bf16.mxu0 0
  %974 = vmatpush2.bf16.msra.mxu0 %v725
  %975 = vmatprep.subr.bf16.mxu0 0
  %976 = vmatpush2.bf16.msra.mxu0 %v724
  %977 = vmatprep.subr.bf16.mxu0 0
  %978 = vmatpush2.bf16.msra.mxu0 %v723
  %979 = vmatprep.mubr.bf16.mxu0 %v260
  %980 = vmatmul.mubr.bf16.gmra.mxu0 %v259
  %v981 = vpop.f32.mrf.mxu0
  %v982 = vadd.f32 %v942, %v981
  %v983 = vpop.f32.mrf.mxu0
  %v984 = vpop.f32.mrf.mxu0
  %v985 = vpop.f32.mrf.mxu0
  %986 = vdwg.mxu0
  %987 = vmatprep.subr.bf16.mxu0 0
  %988 = vmatpush1.bf16.msra.mxu0 %v738
  %989 = vmatprep.subr.bf16.mxu0 0
  %990 = vmatpush1.bf16.msra.mxu0 %v737
  %991 = vmatprep.subr.bf16.mxu0 0
  %992 = vmatpush1.bf16.msra.mxu0 %v736
  %993 = vmatprep.subr.bf16.mxu0 0
  %994 = vmatpush1.bf16.msra.mxu0 %v735
  %995 = vmatprep.subr.bf16.mxu0 0
  %996 = vmatpush1.bf16.msra.mxu0 %v734
  %997 = vmatprep.subr.bf16.mxu0 0
  %998 = vmatpush1.bf16.msra.mxu0 %v733
  %999 = vmatprep.subr.bf16.mxu0 0
  %1000 = vmatpush1.bf16.msra.mxu0 %v732
  %1001 = vmatprep.subr.bf16.mxu0 0
  %1002 = vmatpush1.bf16.msra.mxu0 %v731
  %1003 = vmatprep.subr.bf16.mxu0 0
  %1004 = vmatpush2.bf16.msra.mxu0 %v746
  %1005 = vmatprep.subr.bf16.mxu0 0
  %1006 = vmatpush2.bf16.msra.mxu0 %v745
  %1007 = vmatprep.subr.bf16.mxu0 0
  %1008 = vmatpush2.bf16.msra.mxu0 %v744
  %1009 = vmatprep.subr.bf16.mxu0 0
  %1010 = vmatpush2.bf16.msra.mxu0 %v743
  %1011 = vmatprep.subr.bf16.mxu0 0
  %1012 = vmatpush2.bf16.msra.mxu0 %v742
  %1013 = vmatprep.subr.bf16.mxu0 0
  %1014 = vmatpush2.bf16.msra.mxu0 %v741
  %1015 = vmatprep.subr.bf16.mxu0 0
  %1016 = vmatpush2.bf16.msra.mxu0 %v740
  %1017 = vmatprep.subr.bf16.mxu0 0
  %1018 = vmatpush2.bf16.msra.mxu0 %v739
  %1019 = vmatprep.mubr.bf16.mxu0 %v262
  %1020 = vmatmul.mubr.bf16.gmra.mxu0 %v261
  %v1021 = vpop.f32.mrf.mxu0
  %v1022 = vadd.f32 %v982, %v1021
  %v1023 = vpop.f32.mrf.mxu0
  %v1024 = vpop.f32.mrf.mxu0
  %v1025 = vpop.f32.mrf.mxu0
  %1026 = vdwg.mxu0
  %1027 = vmatprep.subr.bf16.mxu0 0
  %1028 = vmatpush1.bf16.msra.mxu0 %v754
  %1029 = vmatprep.subr.bf16.mxu0 0
  %1030 = vmatpush1.bf16.msra.mxu0 %v753
  %1031 = vmatprep.subr.bf16.mxu0 0
  %1032 = vmatpush1.bf16.msra.mxu0 %v752
  %1033 = vmatprep.subr.bf16.mxu0 0
  %1034 = vmatpush1.bf16.msra.mxu0 %v751
  %1035 = vmatprep.subr.bf16.mxu0 0
  %1036 = vmatpush1.bf16.msra.mxu0 %v750
  %1037 = vmatprep.subr.bf16.mxu0 0
  %1038 = vmatpush1.bf16.msra.mxu0 %v749
  %1039 = vmatprep.subr.bf16.mxu0 0
  %1040 = vmatpush1.bf16.msra.mxu0 %v748
  %1041 = vmatprep.subr.bf16.mxu0 0
  %1042 = vmatpush1.bf16.msra.mxu0 %v747
  %1043 = vmatprep.subr.bf16.mxu0 0
  %1044 = vmatpush2.bf16.msra.mxu0 %v762
  %1045 = vmatprep.subr.bf16.mxu0 0
  %1046 = vmatpush2.bf16.msra.mxu0 %v761
  %1047 = vmatprep.subr.bf16.mxu0 0
  %1048 = vmatpush2.bf16.msra.mxu0 %v760
  %1049 = vmatprep.subr.bf16.mxu0 0
  %1050 = vmatpush2.bf16.msra.mxu0 %v759
  %1051 = vmatprep.subr.bf16.mxu0 0
  %1052 = vmatpush2.bf16.msra.mxu0 %v758
  %1053 = vmatprep.subr.bf16.mxu0 0
  %1054 = vmatpush2.bf16.msra.mxu0 %v757
  %1055 = vmatprep.subr.bf16.mxu0 0
  %1056 = vmatpush2.bf16.msra.mxu0 %v756
  %1057 = vmatprep.subr.bf16.mxu0 0
  %1058 = vmatpush2.bf16.msra.mxu0 %v755
  %1059 = vmatprep.mubr.bf16.mxu0 %v264
  %1060 = vmatmul.mubr.bf16.gmra.mxu0 %v263
  %v1061 = vpop.f32.mrf.mxu0
  %v1062 = vadd.f32 %v1022, %v1061
  %v1063 = vpop.f32.mrf.mxu0
  %v1064 = vpop.f32.mrf.mxu0
  %v1065 = vpop.f32.mrf.mxu0
  %1066 = vdwg.mxu0
  %1067 = vmatprep.subr.bf16.mxu0 0
  %1068 = vmatpush1.bf16.msra.mxu0 %v770
  %1069 = vmatprep.subr.bf16.mxu0 0
  %1070 = vmatpush1.bf16.msra.mxu0 %v769
  %1071 = vmatprep.subr.bf16.mxu0 0
  %1072 = vmatpush1.bf16.msra.mxu0 %v768
  %1073 = vmatprep.subr.bf16.mxu0 0
  %1074 = vmatpush1.bf16.msra.mxu0 %v767
  %1075 = vmatprep.subr.bf16.mxu0 0
  %1076 = vmatpush1.bf16.msra.mxu0 %v766
  %1077 = vmatprep.subr.bf16.mxu0 0
  %1078 = vmatpush1.bf16.msra.mxu0 %v765
  %1079 = vmatprep.subr.bf16.mxu0 0
  %1080 = vmatpush1.bf16.msra.mxu0 %v764
  %1081 = vmatprep.subr.bf16.mxu0 0
  %1082 = vmatpush1.bf16.msra.mxu0 %v763
  %1083 = vmatprep.subr.bf16.mxu0 0
  %1084 = vmatpush2.bf16.msra.mxu0 %v778
  %1085 = vmatprep.subr.bf16.mxu0 0
  %1086 = vmatpush2.bf16.msra.mxu0 %v777
  %1087 = vmatprep.subr.bf16.mxu0 0
  %1088 = vmatpush2.bf16.msra.mxu0 %v776
  %1089 = vmatprep.subr.bf16.mxu0 0
  %1090 = vmatpush2.bf16.msra.mxu0 %v775
  %1091 = vmatprep.subr.bf16.mxu0 0
  %1092 = vmatpush2.bf16.msra.mxu0 %v774
  %1093 = vmatprep.subr.bf16.mxu0 0
  %1094 = vmatpush2.bf16.msra.mxu0 %v773
  %1095 = vmatprep.subr.bf16.mxu0 0
  %1096 = vmatpush2.bf16.msra.mxu0 %v772
  %1097 = vmatprep.subr.bf16.mxu0 0
  %1098 = vmatpush2.bf16.msra.mxu0 %v771
  %1099 = vmatprep.mubr.bf16.mxu0 %v266
  %1100 = vmatmul.mubr.bf16.gmra.mxu0 %v265
  %v1101 = vpop.f32.mrf.mxu0
  %v1102 = vadd.f32 %v1062, %v1101
  %v1103 = vpop.f32.mrf.mxu0
  %v1104 = vpop.f32.mrf.mxu0
  %v1105 = vpop.f32.mrf.mxu0
  %1106 = vdwg.mxu0
  %1107 = vmatprep.subr.bf16.mxu0 0
  %1108 = vmatpush1.bf16.msra.mxu0 %v786
  %1109 = vmatprep.subr.bf16.mxu0 0
  %1110 = vmatpush1.bf16.msra.mxu0 %v785
  %1111 = vmatprep.subr.bf16.mxu0 0
  %1112 = vmatpush1.bf16.msra.mxu0 %v784
  %1113 = vmatprep.subr.bf16.mxu0 0
  %1114 = vmatpush1.bf16.msra.mxu0 %v783
  %1115 = vmatprep.subr.bf16.mxu0 0
  %1116 = vmatpush1.bf16.msra.mxu0 %v782
  %1117 = vmatprep.subr.bf16.mxu0 0
  %1118 = vmatpush1.bf16.msra.mxu0 %v781
  %1119 = vmatprep.subr.bf16.mxu0 0
  %1120 = vmatpush1.bf16.msra.mxu0 %v780
  %1121 = vmatprep.subr.bf16.mxu0 0
  %1122 = vmatpush1.bf16.msra.mxu0 %v779
  %1123 = vmatprep.subr.bf16.mxu0 0
  %1124 = vmatpush2.bf16.msra.mxu0 %v794
  %1125 = vmatprep.subr.bf16.mxu0 0
  %1126 = vmatpush2.bf16.msra.mxu0 %v793
  %1127 = vmatprep.subr.bf16.mxu0 0
  %1128 = vmatpush2.bf16.msra.mxu0 %v792
  %1129 = vmatprep.subr.bf16.mxu0 0
  %1130 = vmatpush2.bf16.msra.mxu0 %v791
  %1131 = vmatprep.subr.bf16.mxu0 0
  %1132 = vmatpush2.bf16.msra.mxu0 %v790
  %1133 = vmatprep.subr.bf16.mxu0 0
  %1134 = vmatpush2.bf16.msra.mxu0 %v789
  %1135 = vmatprep.subr.bf16.mxu0 0
  %1136 = vmatpush2.bf16.msra.mxu0 %v788
  %1137 = vmatprep.subr.bf16.mxu0 0
  %1138 = vmatpush2.bf16.msra.mxu0 %v787
  %1139 = vmatprep.mubr.bf16.mxu0 %v268
  %1140 = vmatmul.mubr.bf16.gmra.mxu0 %v267
  %v1141 = vpop.f32.mrf.mxu0
  %v1142 = vadd.f32 %v1102, %v1141
  %v1143 = vpop.f32.mrf.mxu0
  %v1144 = vpop.f32.mrf.mxu0
  %v1145 = vpop.f32.mrf.mxu0
  %1146 = vdwg.mxu0
  %1147 = vmatprep.subr.bf16.mxu0 0
  %1148 = vmatpush1.bf16.msra.mxu0 %v802
  %1149 = vmatprep.subr.bf16.mxu0 0
  %1150 = vmatpush1.bf16.msra.mxu0 %v801
  %1151 = vmatprep.subr.bf16.mxu0 0
  %1152 = vmatpush1.bf16.msra.mxu0 %v800
  %1153 = vmatprep.subr.bf16.mxu0 0
  %1154 = vmatpush1.bf16.msra.mxu0 %v799
  %1155 = vmatprep.subr.bf16.mxu0 0
  %1156 = vmatpush1.bf16.msra.mxu0 %v798
  %1157 = vmatprep.subr.bf16.mxu0 0
  %1158 = vmatpush1.bf16.msra.mxu0 %v797
  %1159 = vmatprep.subr.bf16.mxu0 0
  %1160 = vmatpush1.bf16.msra.mxu0 %v796
  %1161 = vmatprep.subr.bf16.mxu0 0
  %1162 = vmatpush1.bf16.msra.mxu0 %v795
  %1163 = vmatprep.subr.bf16.mxu0 0
  %1164 = vmatpush2.bf16.msra.mxu0 0
  %1165 = vmatprep.subr.bf16.mxu0 0
  %1166 = vmatpush2.bf16.msra.mxu0 0
  %1167 = vmatprep.subr.bf16.mxu0 0
  %1168 = vmatpush2.bf16.msra.mxu0 0
  %1169 = vmatprep.subr.bf16.mxu0 0
  %1170 = vmatpush2.bf16.msra.mxu0 0
  %1171 = vmatprep.subr.bf16.mxu0 0
  %1172 = vmatpush2.bf16.msra.mxu0 0
  %1173 = vmatprep.subr.bf16.mxu0 0
  %1174 = vmatpush2.bf16.msra.mxu0 0
  %1175 = vmatprep.subr.bf16.mxu0 0
  %1176 = vmatpush2.bf16.msra.mxu0 0
  %1177 = vmatprep.subr.bf16.mxu0 0
  %1178 = vmatpush2.bf16.msra.mxu0 0
  %1179 = vmatprep.mubr.bf16.mxu0 0
  %1180 = vmatmul.mubr.bf16.gmra.mxu0 %v269
  %v1181 = vpop.f32.mrf.mxu0
  %v1182 = vadd.f32 %v1142, %v1181
  %v1183 = vpop.f32.mrf.mxu0
  %v1184 = vpop.f32.mrf.mxu0
  %v1185 = vpop.f32.mrf.mxu0
  %1186 = vdwg.mxu0
  %v1187 = vmax.f32 %v1182, 0.0
  %v1188 = vpack.c.bf16 %v1187, %v1187
  %1189 = vst [vmem:[%s3] sm:$0xf] %v1188
  // Predicated region
  $region14: #{conv2d_to_latent_forward.9} parent=0 // pred_check
    _
  $region15: #{conv2d_to_latent_forward.9} parent=0 // pred_check_branch
    %1191 = sbr.rel (0) target = $region17
  $region16: #{conv2d_to_latent_forward.9} parent=0 // pred_region
    _
  $region17: #{conv2d_to_latent_forward.9} parent=0 // pred_fallthru
    _
  // Predicated region
  $region18: #{conv2d_to_latent_forward.9} parent=0 // pred_check
    _
  $region19: #{conv2d_to_latent_forward.9} parent=0 // pred_check_branch
    %1193 = sbr.rel (0) target = $region21
  $region20: #{conv2d_to_latent_forward.9} parent=0 // pred_region
    _
  $region21: #{conv2d_to_latent_forward.9} parent=0 // pred_fallthru
    _

// kernel: conv2d_to_latent_forward.11
$region0: #{conv2d_to_latent_forward.11}
  #allocation0 [shape = 'u32[]', space=smem, size = 0x4, offset = 0x4, fixed_abs, tag = 'smem constant byte address 0x4 - core index']
  #allocation1 [shape = 'u32[144,128]{1,0:T(1,128)}', space=vmem, size = 0x12000, scoped, tag = 'internal scratch']
  %s0 = inlined_call_operand.vmem [shape: bf16[2,128], index: 0, kind: input, shape index: {}]
  %s1 = inlined_call_operand.vmem [shape: bf16[128,128], index: 1, kind: input, shape index: {}]
  %s2 = inlined_call_operand.vmem [shape: f32[1,128], index: 2, kind: input, shape index: {}]
  %s3 = inlined_call_operand.hbm [shape: f32[2,128], index: 3, kind: output, shape index: {}]
  %s4 = sld [smem:[#allocation0]]
  $region22: #{conv2d_to_latent_forward.11} parent=0
    _
  %s6 = ssub.s32 1, %s4
  %s7 = scalar_select 0, %s6, %s4
  $region1: #{conv2d_to_latent_forward.11} parent=0
    #allocation2 [shape = 'u8[1024]{0}', space=vmem, size = 0x400, scoped, tag = 'output window, operand 0, single buffered']
    #allocation3 [shape = 's32[1]{0}', space=sflag, size = 0x4, scoped, tag = 'scoped memory for conv2d_to_latent_forward.11']
    %8 = vsyncpa [#allocation3], 0
    // Predicated region
    $region2: #{conv2d_to_latent_forward.11} parent=1 // pred_check
      _
    $region3: #{conv2d_to_latent_forward.11} parent=1 // pred_check_branch
      %10 = sbr.rel (0) target = $region5
    $region4: #{conv2d_to_latent_forward.11} parent=1 // pred_region
      _
    $region5: #{conv2d_to_latent_forward.11} parent=1 // pred_fallthru
      _
    // Predicated region
    $region6: #{conv2d_to_latent_forward.11} parent=1 // pred_check
      _
    $region7: #{conv2d_to_latent_forward.11} parent=1 // pred_check_branch
      %12 = sbr.rel (0) target = $region9
    $region8: #{conv2d_to_latent_forward.11} parent=1 // pred_region
      _
    $region9: #{conv2d_to_latent_forward.11} parent=1 // pred_fallthru
      _
    // Predicated region
    $region10: #{conv2d_to_latent_forward.11} parent=1 // pred_check
      _
    $region11: #{conv2d_to_latent_forward.11} parent=1 // pred_check_branch
      %14 = sbr.rel (0) target = $region13
    $region12: #{conv2d_to_latent_forward.11} parent=1 // pred_region
      _
    $region13: #{conv2d_to_latent_forward.11} parent=1 // pred_fallthru
      _
    %v16 = vld [vmem:[%s0] sm:$0x1]
    %v17 = vld [vmem:[%s1] sm:$0xf]
    %v18 = vld [vmem:[%s1 + $0x4] sm:$0xf]
    %v19 = vld [vmem:[%s1 + $0x8] sm:$0xf]
    %v20 = vld [vmem:[%s1 + $0xc] sm:$0xf]
    %v21 = vld [vmem:[%s1 + $0x10] sm:$0xf]
    %v22 = vld [vmem:[%s1 + $0x14] sm:$0xf]
    %v23 = vld [vmem:[%s1 + $0x18] sm:$0xf]
    %v24 = vld [vmem:[%s1 + $0x1c] sm:$0xf]
    %v25 = vld [vmem:[%s1 + $0x20] sm:$0xf]
    %v26 = vld [vmem:[%s1 + $0x24] sm:$0xf]
    %v27 = vld [vmem:[%s1 + $0x28] sm:$0xf]
    %v28 = vld [vmem:[%s1 + $0x2c] sm:$0xf]
    %v29 = vld [vmem:[%s1 + $0x30] sm:$0xf]
    %v30 = vld [vmem:[%s1 + $0x34] sm:$0xf]
    %v31 = vld [vmem:[%s1 + $0x38] sm:$0xf]
    %v32 = vld [vmem:[%s1 + $0x3c] sm:$0xf]
    %v33 = vld [vmem:[%s2] sm:$0x1]
    %v35 = vlaneseq
    %v36 = vshrl.u32 %v35, 7
    %v37 = vsub.s32 0, %v36
    %v38 = vrot.slane %v33, %v37
    %v56 = vunpack.c.l.b16 %v17
    %v57 = vunpack.c.l.b16 %v18
    %v58 = vunpack.c.l.b16 %v19
    %v59 = vunpack.c.l.b16 %v20
    %v60 = vunpack.c.l.b16 %v21
    %v61 = vunpack.c.l.b16 %v22
    %v62 = vunpack.c.l.b16 %v23
    %v63 = vunpack.c.l.b16 %v24
    %v64 = vunpack.c.l.b16 %v25
    %v65 = vunpack.c.l.b16 %v26
    %v66 = vunpack.c.l.b16 %v27
    %v67 = vunpack.c.l.b16 %v28
    %v68 = vunpack.c.l.b16 %v29
    %v69 = vunpack.c.l.b16 %v30
    %v70 = vunpack.c.l.b16 %v31
    %v71 = vunpack.c.l.b16 %v32
    %v72 = vpack.c.b16 %v57, %v56
    %v73 = vpack.c.b16 %v59, %v58
    %v74 = vpack.c.b16 %v61, %v60
    %v75 = vpack.c.b16 %v63, %v62
    %v76 = vpack.c.b16 %v65, %v64
    %v77 = vpack.c.b16 %v67, %v66
    %v78 = vpack.c.b16 %v69, %v68
    %v79 = vpack.c.b16 %v71, %v70
    %88 = vmatprep.subr.bf16.mxu0 0
    %89 = vmatpush1.bf16.msra.mxu0 %v79
    %90 = vmatprep.subr.bf16.mxu0 0
    %91 = vmatpush1.bf16.msra.mxu0 %v78
    %92 = vmatprep.subr.bf16.mxu0 0
    %93 = vmatpush1.bf16.msra.mxu0 %v77
    %94 = vmatprep.subr.bf16.mxu0 0
    %95 = vmatpush1.bf16.msra.mxu0 %v76
    %96 = vmatprep.subr.bf16.mxu0 0
    %97 = vmatpush1.bf16.msra.mxu0 %v75
    %98 = vmatprep.subr.bf16.mxu0 0
    %99 = vmatpush1.bf16.msra.mxu0 %v74
    %100 = vmatprep.subr.bf16.mxu0 0
    %101 = vmatpush1.bf16.msra.mxu0 %v73
    %102 = vmatprep.subr.bf16.mxu0 0
    %103 = vmatpush1.bf16.msra.mxu0 %v72
    %104 = vmatprep.subr.bf16.mxu0 0
    %105 = vmatpush2.bf16.msra.mxu0 0
    %106 = vmatprep.subr.bf16.mxu0 0
    %107 = vmatpush2.bf16.msra.mxu0 0
    %108 = vmatprep.subr.bf16.mxu0 0
    %109 = vmatpush2.bf16.msra.mxu0 0
    %110 = vmatprep.subr.bf16.mxu0 0
    %111 = vmatpush2.bf16.msra.mxu0 0
    %112 = vmatprep.subr.bf16.mxu0 0
    %113 = vmatpush2.bf16.msra.mxu0 0
    %114 = vmatprep.subr.bf16.mxu0 0
    %115 = vmatpush2.bf16.msra.mxu0 0
    %116 = vmatprep.subr.bf16.mxu0 0
    %117 = vmatpush2.bf16.msra.mxu0 0
    %118 = vmatprep.subr.bf16.mxu0 0
    %119 = vmatpush2.bf16.msra.mxu0 0
    %120 = vmatprep.mubr.bf16.mxu0 0
    %121 = vmatmul.mubr.bf16.gmra.mxu0 %v16
    %v122 = vpop.f32.mrf.mxu0
    %v123 = vadd.f32 %v38, %v122
    %v124 = vpop.f32.mrf.mxu0
    %v125 = vpop.f32.mrf.mxu0
    %v126 = vpop.f32.mrf.mxu0
    %127 = vdwg.mxu0
    %vm128 = vcmask 1041408
    %v129 = vsel %vm128, %v123, -inf
    %130 = vmax.xlane.f32.xlu0 %v129
    %v131 = vpop.xlane.xlu0 %130
    %v132 = vsub.f32 %v123, %v131
    %v133 = vmul.f32 %v132, 1.442695
    %v134 = vpow.pop %v133
    %v135 = vsel %vm128, %v134, 0.0
    %136 = vadd.xlane.f32.xlu0 %v135
    %v137 = vpop.xlane.xlu0 %136
    %v138 = vrcp.pop %v137
    %v139 = vmul.f32 %v134, %v138
    %140 = vst [vmem:[#allocation2] sm:$0x3] %v139
    // Predicated region
    $region14: #{conv2d_to_latent_forward.11} parent=1 // pred_check
      _
    $region15: #{conv2d_to_latent_forward.11} parent=1 // pred_check_branch
      %142 = sbr.rel (0) target = $region17
    $region16: #{conv2d_to_latent_forward.11} parent=1 // pred_region
      %s144 = ssub.s32 32, 32
      %145 = vsyncadd [#allocation3], %s144
      %s147 = sshll.u32 [#allocation2], 4
      %s148 = int_to_ptr.vmem [resolvable:$true] %s147
      %150 = dma.vmem_to_hbm [thread:$0]  %s148, 32, %s3, [#allocation3]
    $region17: #{conv2d_to_latent_forward.11} parent=1 // pred_fallthru
      _
    // Predicated region
    $region18: #{conv2d_to_latent_forward.11} parent=1 // pred_check
      _
    $region19: #{conv2d_to_latent_forward.11} parent=1 // pred_check_branch
      %152 = sbr.rel (0) target = $region21
    $region20: #{conv2d_to_latent_forward.11} parent=1 // pred_region
      %153 = dma.done [#allocation3], 32
    $region21: #{conv2d_to_latent_forward.11} parent=1 // pred_fallthru
      _
    %154 = vsyncpa [#allocation3], 1

</llo_original>
